<compile_context>
chip_gen: v6e
topology: v6e:2x2x1
jax: 0.10.0
libtpu: 0.0.40
codegen_flags: <defaults>
</compile_context>

<pallas_src>
import jax
import jax.numpy as jnp
from jax.experimental import pallas as pl
from jax.experimental.pallas import tpu as pltpu

V = 13          # vocab: digits 0-9, <SOS>, <EOS>, <PAD>
VP = 128        # lane-dense padded vocab
E = 16          # embedding dim
H = 32          # GRU hidden dim
G = 3 * H       # packed gate width (r | z | n)
TB = 8          # batch tile (sublane multiple); one grid step per tile
PAD_ID = 12


# ---------------------------------------------------------------------------
# Fused Pallas kernel: encoder loop + decoder loop + projection + feedback
# ---------------------------------------------------------------------------
def seq2seq_kernel(tf_ref,                                   # scalar prefetch (SMEM)
                   org_emb_ref, rev_emb_ref,                 # [S*TB, E] f32
                   enc_wih_ref, enc_whh_ref, enc_gib_ref, enc_bhhn_ref,
                   dec_wihx_ref, dec_wihc_ref, dec_whh_ref, dec_gib_ref, dec_bhhn_ref,
                   m_gix_ref, wout_ref, bout_ref,
                   out_ref,                                  # [S*TB, VP] f32
                   enc_gi_scr, enc_h_scr, dec_gix_scr, dec_gic_scr):
    f32, bf16 = jnp.float32, jnp.bfloat16
    STB = org_emb_ref.shape[0]
    S = STB // TB

    # ---- hoisted non-recurrent matmuls: one big MXU op each ----------------
    # encoder input-to-hidden for ALL timesteps (b_ih and b_hh[r,z] folded in)
    enc_gi_scr[...] = (jnp.dot(org_emb_ref[...].astype(bf16), enc_wih_ref[...],
                               preferred_element_type=f32) + enc_gib_ref[...])
    # decoder teacher-forced input projection emb(rev_i) @ Wih_x, all i at once
    dec_gix_scr[...] = jnp.dot(rev_emb_ref[...].astype(bf16), dec_wihx_ref[...],
                               preferred_element_type=f32)

    enc_bhh_n = jnp.broadcast_to(enc_bhhn_ref[...], (TB, H))

    # ---- encoder recurrence: only h @ Whh stays on the serial chain --------
    def enc_body(t, h):
        off = pl.multiple_of(t * TB, TB)
        gi = enc_gi_scr[pl.ds(off, TB), :]
        gh = jnp.dot(h.astype(bf16), enc_whh_ref[...], preferred_element_type=f32)
        r = jax.nn.sigmoid(gi[:, 0:H] + gh[:, 0:H])
        z = jax.nn.sigmoid(gi[:, H:2 * H] + gh[:, H:2 * H])
        n = jnp.tanh(gi[:, 2 * H:G] + r * (gh[:, 2 * H:G] + enc_bhh_n))
        h_new = (1.0 - z) * n + z * h
        enc_h_scr[pl.ds(off, TB), :] = h_new          # enc_outputs[t]
        return h_new

    h = jax.lax.fori_loop(0, S, enc_body, jnp.zeros((TB, H), f32), unroll=True)

    # ---- hoisted decoder context projection enc_outputs @ Wih_c (+ biases) -
    dec_gic_scr[...] = (jnp.dot(enc_h_scr[...].astype(bf16), dec_wihc_ref[...],
                                preferred_element_type=f32) + dec_gib_ref[...])

    dec_bhh_n = jnp.broadcast_to(dec_bhhn_ref[...], (TB, H))
    bout = jnp.broadcast_to(bout_ref[...], (TB, VP))
    lane_iota = jax.lax.broadcasted_iota(jnp.int32, (TB, VP), 1)

    out_ref[pl.ds(0, TB), :] = jnp.zeros((TB, VP), f32)   # outputs[0] stays 0

    # ---- decoder recurrence -------------------------------------------------
    def dec_body(i, carry):
        h, gix = carry                                # gix = emb(src_input) @ Wih_x
        off = pl.multiple_of(i * TB, TB)
        gi = gix + dec_gic_scr[pl.ds(off, TB), :]
        gh = jnp.dot(h.astype(bf16), dec_whh_ref[...], preferred_element_type=f32)
        r = jax.nn.sigmoid(gi[:, 0:H] + gh[:, 0:H])
        z = jax.nn.sigmoid(gi[:, H:2 * H] + gh[:, H:2 * H])
        n = jnp.tanh(gi[:, 2 * H:G] + r * (gh[:, 2 * H:G] + dec_bhh_n))
        h_new = (1.0 - z) * n + z * h
        logits = (jnp.dot(h_new.astype(bf16), wout_ref[...],
                          preferred_element_type=f32) + bout)
        out_ref[pl.ds(off, TB), :] = logits
        # greedy feedback: first-index argmax -> one-hot -> fused emb@Wih_x
        # (two XLU reductions kept for exact first-index tie-break semantics)
        m = jnp.max(logits, axis=1, keepdims=True)
        idx = jnp.min(jnp.where(logits == m, lane_iota, VP), axis=1, keepdims=True)
        top_oh = (lane_iota == idx).astype(bf16)
        gix_greedy = jnp.dot(top_oh, m_gix_ref[...], preferred_element_type=f32)
        gix_tf = dec_gix_scr[pl.ds(off, TB), :]
        gix_next = jnp.where(tf_ref[i] > 0, gix_tf, gix_greedy)
        return h_new, gix_next

    jax.lax.fori_loop(1, S, dec_body, (h, dec_gix_scr[pl.ds(0, TB), :]),
                      unroll=True)


# ---------------------------------------------------------------------------
# Derived weights (shared by kernel wrapper and reference)
# ---------------------------------------------------------------------------
def _prepare_weights(params):
    f32, bf16 = jnp.float32, jnp.bfloat16
    enc_gib = params["enc_bih"].at[:, :2 * H].add(params["enc_bhh"][:, :2 * H])
    dec_gib = params["dec_bih"].at[:, :2 * H].add(params["dec_bhh"][:, :2 * H])
    dec_wih_x = params["dec_wih"][:E]        # acts on the token embedding
    dec_wih_c = params["dec_wih"][E:]        # acts on enc_outputs[i]
    dec_emb_pad = jnp.zeros((VP, E), f32).at[:V].set(params["dec_emb"])
    return {
        "enc_emb": params["enc_emb"],
        "dec_emb": params["dec_emb"],
        "enc_wih": params["enc_wih"].astype(bf16),
        "enc_whh": params["enc_whh"].astype(bf16),
        "enc_gib": enc_gib,
        "enc_bhhn": params["enc_bhh"][:, 2 * H:],
        "dec_wihx": dec_wih_x.astype(bf16),
        "dec_wihc": dec_wih_c.astype(bf16),
        "dec_whh": params["dec_whh"].astype(bf16),
        "dec_gib": dec_gib,
        "dec_bhhn": params["dec_bhh"][:, 2 * H:],
        # fused (embedding -> input projection) for the greedy feedback path
        "m_gix": (dec_emb_pad @ dec_wih_x).astype(bf16),
        "wout": jnp.zeros((H, VP), f32).at[:, :V].set(params["dec_wout"]).astype(bf16),
        "bout": jnp.full((1, VP), -1e9, f32).at[:, :V].set(params["dec_bout"]),
    }


# ---------------------------------------------------------------------------
# Jitted wrapper: pre-embedding, batch tiling, single pallas_call
# ---------------------------------------------------------------------------
@jax.jit
def seq2seq_forward(w, origin_index, reverse_index, tf_mask):
    """origin_index/reverse_index: [S, B] int32; tf_mask: [S] int32 (0/1)."""
    S, B = origin_index.shape
    Bp = ((B + TB - 1) // TB) * TB
    nb = Bp // TB

    org = jnp.pad(origin_index.astype(jnp.int32), ((0, 0), (0, Bp - B)),
                  constant_values=PAD_ID)
    rev = jnp.pad(reverse_index.astype(jnp.int32), ((0, 0), (0, Bp - B)),
                  constant_values=PAD_ID)
    # pre-embed in the wrapper: ship [*, E] f32 instead of [*, 128] one-hots
    org_emb = jnp.take(w["enc_emb"], org, axis=0)            # [S, Bp, E]
    rev_emb = jnp.take(w["dec_emb"], rev, axis=0)            # [S, Bp, E]

    def to_tiles(x):                      # [S, Bp, D] -> [nb, S*TB, D]
        return (x.reshape(S, nb, TB, -1).transpose(1, 0, 2, 3)
                 .reshape(nb, S * TB, -1))

    org_t, rev_t = to_tiles(org_emb), to_tiles(rev_emb)

    vmem = pl.BlockSpec(memory_space=pltpu.MemorySpace.VMEM)
    grid_spec = pltpu.PrefetchScalarGridSpec(
        num_scalar_prefetch=1,
        grid=(nb,),
        in_specs=[
            pl.BlockSpec((None, S * TB, E), lambda g, tf: (g, 0, 0)),
            pl.BlockSpec((None, S * TB, E), lambda g, tf: (g, 0, 0)),
            vmem, vmem, vmem, vmem,                  # encoder weights
            vmem, vmem, vmem, vmem, vmem,            # decoder GRU weights
            vmem, vmem, vmem,                        # m_gix, wout, bout
        ],
        out_specs=pl.BlockSpec((None, S * TB, VP), lambda g, tf: (g, 0, 0)),
        scratch_shapes=[
            pltpu.VMEM((S * TB, G), jnp.float32),    # hoisted encoder gi
            pltpu.VMEM((S * TB, H), jnp.float32),    # enc_outputs
            pltpu.VMEM((S * TB, G), jnp.float32),    # hoisted teacher-forced gi_x
            pltpu.VMEM((S * TB, G), jnp.float32),    # hoisted enc @ Wih_c (+bias)
        ],
    )
    out = pl.pallas_call(
        seq2seq_kernel,
        out_shape=jax.ShapeDtypeStruct((nb, S * TB, VP), jnp.float32),
        grid_spec=grid_spec,
        compiler_params=pltpu.CompilerParams(
            dimension_semantics=("parallel",)),      # batch tiles -> both TCs on v7x
    )(tf_mask.astype(jnp.int32), org_t, rev_t,
      w["enc_wih"], w["enc_whh"], w["enc_gib"], w["enc_bhhn"],
      w["dec_wihx"], w["dec_wihc"], w["dec_whh"], w["dec_gib"], w["dec_bhhn"],
      w["m_gix"], w["wout"], w["bout"])

    out = (out.reshape(nb, S, TB, VP).transpose(1, 0, 2, 3).reshape(S, Bp, VP))
    return out[:, :B, :V]                 # [trg_len, B, V]; outputs[0] == 0


def seq2seq_apply(params, origin_index, reverse_index, teacher_force_ratio, key):
    """Convenience wrapper matching the PyTorch forward signature; the host
    per-step random.random() becomes a precomputed Bernoulli mask."""
    S = reverse_index.shape[0]
    tf_mask = jax.random.bernoulli(key, teacher_force_ratio, (S,)).astype(jnp.int32)
    w = _prepare_weights(params)
    return seq2seq_forward(w, origin_index, reverse_index, tf_mask)
    # TODO(synk): the reference's debug print('enc_outputs[i,:]', ...) is omitted.


# ---------------------------------------------------------------------------
# Parameters and a pure-JAX reference mirroring the kernel numerics
# ---------------------------------------------------------------------------
def init_params(key):
    ks = jax.random.split(key, 12)
    s = 0.1
    return {
        # encoder: Embedding(V, E) + GRU cell (E -> H)
        "enc_emb": s * jax.random.normal(ks[0], (V, E), jnp.float32),
        "enc_wih": s * jax.random.normal(ks[1], (E, G), jnp.float32),
        "enc_whh": s * jax.random.normal(ks[2], (H, G), jnp.float32),
        "enc_bih": s * jax.random.normal(ks[3], (1, G), jnp.float32),
        "enc_bhh": s * jax.random.normal(ks[4], (1, G), jnp.float32),
        # decoder: Embedding(V, E) + GRU cell (E + H -> H) + Linear(H -> V)
        "dec_emb": s * jax.random.normal(ks[5], (V, E), jnp.float32),
        "dec_wih": s * jax.random.normal(ks[6], (E + H, G), jnp.float32),
        "dec_whh": s * jax.random.normal(ks[7], (H, G), jnp.float32),
        "dec_bih": s * jax.random.normal(ks[8], (1, G), jnp.float32),
        "dec_bhh": s * jax.random.normal(ks[9], (1, G), jnp.float32),
        "dec_wout": s * jax.random.normal(ks[10], (H, V), jnp.float32),
        "dec_bout": s * jax.random.normal(ks[11], (1, V), jnp.float32),
    }


def reference_forward(w, origin_index, reverse_index, tf_mask):
    """Pure-JAX reference using the same derived weights / bf16 rounding."""
    f32, bf16 = jnp.float32, jnp.bfloat16
    S, B = origin_index.shape

    def gru(gi, gh, bhh_n, h):
        r = jax.nn.sigmoid(gi[:, 0:H] + gh[:, 0:H])
        z = jax.nn.sigmoid(gi[:, H:2 * H] + gh[:, H:2 * H])
        n = jnp.tanh(gi[:, 2 * H:G] + r * (gh[:, 2 * H:G] + bhh_n))
        return (1.0 - z) * n + z * h

    h = jnp.zeros((B, H), f32)
    enc = []
    for t in range(S):
        x = jnp.take(w["enc_emb"], origin_index[t], axis=0).astype(bf16)
        gi = jnp.dot(x, w["enc_wih"], preferred_element_type=f32) + w["enc_gib"]
        gh = jnp.dot(h.astype(bf16), w["enc_whh"], preferred_element_type=f32)
        h = gru(gi, gh, w["enc_bhhn"], h)
        enc.append(h)

    outs = [jnp.zeros((B, V), f32)]
    gix = jnp.dot(jnp.take(w["dec_emb"], reverse_index[0], axis=0).astype(bf16),
                  w["dec_wihx"], preferred_element_type=f32)
    for i in range(1, S):
        gic = (jnp.dot(enc[i].astype(bf16), w["dec_wihc"],
                       preferred_element_type=f32) + w["dec_gib"])
        gh = jnp.dot(h.astype(bf16), w["dec_whh"], preferred_element_type=f32)
        h = gru(gix + gic, gh, w["dec_bhhn"], h)
        logits = (jnp.dot(h.astype(bf16), w["wout"], preferred_element_type=f32)
                  + w["bout"])
        outs.append(logits[:, :V])
        top = jnp.argmax(logits, axis=1)
        gix_greedy = jnp.take(w["m_gix"], top, axis=0).astype(f32)
        gix_tf = jnp.dot(jnp.take(w["dec_emb"], reverse_index[i], axis=0).astype(bf16),
                         w["dec_wihx"], preferred_element_type=f32)
        gix = jnp.where(tf_mask[i] > 0, gix_tf, gix_greedy)
    return jnp.stack(outs, axis=0)


# ---------------------------------------------------------------------------
if __name__ == "__main__":
    key = jax.random.PRNGKey(0)
    pkey, k1, k2, k3 = jax.random.split(key, 4)
    params = init_params(pkey)
    w = _prepare_weights(params)

    B, S = 4, 8
    origin_index = jax.random.randint(k1, (S, B), 0, 10, dtype=jnp.int32)
    reverse_index = jax.random.randint(k2, (S, B), 0, 10, dtype=jnp.int32)
    teacher_force_ratio = 0.5
    tf_mask = jax.random.bernoulli(k3, teacher_force_ratio, (S,)).astype(jnp.int32)

    outputs = seq2seq_forward(w, origin_index, reverse_index, tf_mask)
    jax.block_until_ready(outputs)
    assert outputs.shape == (S, B, V), outputs.shape

    ref = reference_forward(w, origin_index, reverse_index, tf_mask)
    err = float(jnp.max(jnp.abs(outputs - ref)))
    assert err < 2e-3, f"kernel vs reference max abs err = {err}"
    print("KERNEL_OK")
</pallas_src>

<mosaic_0001>
module attributes {stable_mosaic.version = 11 : i64} {
  func.func @seq2seq_kernel(%arg0: i32, %arg1: memref<8xi32, #tpu.memory_space<smem>>, %arg2: memref<1x64x16xf32, #tpu.memory_space<vmem>>, %arg3: memref<1x64x16xf32, #tpu.memory_space<vmem>>, %arg4: memref<16x96xbf16, #tpu.memory_space<vmem>>, %arg5: memref<32x96xbf16, #tpu.memory_space<vmem>>, %arg6: memref<1x96xf32, #tpu.memory_space<vmem>>, %arg7: memref<1x32xf32, #tpu.memory_space<vmem>>, %arg8: memref<16x96xbf16, #tpu.memory_space<vmem>>, %arg9: memref<32x96xbf16, #tpu.memory_space<vmem>>, %arg10: memref<32x96xbf16, #tpu.memory_space<vmem>>, %arg11: memref<1x96xf32, #tpu.memory_space<vmem>>, %arg12: memref<1x32xf32, #tpu.memory_space<vmem>>, %arg13: memref<128x96xbf16, #tpu.memory_space<vmem>>, %arg14: memref<32x128xbf16, #tpu.memory_space<vmem>>, %arg15: memref<1x128xf32, #tpu.memory_space<vmem>>, %arg16: memref<1x64x128xf32, #tpu.memory_space<vmem>>, %arg17: memref<64x96xf32, #tpu.memory_space<vmem>>, %arg18: memref<64x32xf32, #tpu.memory_space<vmem>>, %arg19: memref<64x96xf32, #tpu.memory_space<vmem>>, %arg20: memref<64x96xf32, #tpu.memory_space<vmem>>) attributes {dimension_semantics = [#tpu.dimension_semantics<parallel>], iteration_bounds = array<i64: 1>, scalar_prefetch = 1 : i64, scratch_operands = 4 : i64, tpu.core_type = #tpu.core_type<tc>, window_params = [{transform_indices = @transform_0, window_bounds = array<i64: 1, 64, 16>}, {transform_indices = @transform_1, window_bounds = array<i64: 1, 64, 16>}, {pipeline_mode = #tpu.pipeline_mode<synchronous>, transform_indices = @transform_2, window_bounds = array<i64: 16, 96>}, {pipeline_mode = #tpu.pipeline_mode<synchronous>, transform_indices = @transform_3, window_bounds = array<i64: 32, 96>}, {pipeline_mode = #tpu.pipeline_mode<synchronous>, transform_indices = @transform_4, window_bounds = array<i64: 1, 96>}, {pipeline_mode = #tpu.pipeline_mode<synchronous>, transform_indices = @transform_5, window_bounds = array<i64: 1, 32>}, {pipeline_mode = #tpu.pipeline_mode<synchronous>, transform_indices = @transform_6, window_bounds = array<i64: 16, 96>}, {pipeline_mode = #tpu.pipeline_mode<synchronous>, transform_indices = @transform_7, window_bounds = array<i64: 32, 96>}, {pipeline_mode = #tpu.pipeline_mode<synchronous>, transform_indices = @transform_8, window_bounds = array<i64: 32, 96>}, {pipeline_mode = #tpu.pipeline_mode<synchronous>, transform_indices = @transform_9, window_bounds = array<i64: 1, 96>}, {pipeline_mode = #tpu.pipeline_mode<synchronous>, transform_indices = @transform_10, window_bounds = array<i64: 1, 32>}, {pipeline_mode = #tpu.pipeline_mode<synchronous>, transform_indices = @transform_11, window_bounds = array<i64: 128, 96>}, {pipeline_mode = #tpu.pipeline_mode<synchronous>, transform_indices = @transform_12, window_bounds = array<i64: 32, 128>}, {pipeline_mode = #tpu.pipeline_mode<synchronous>, transform_indices = @transform_13, window_bounds = array<i64: 1, 128>}, {transform_indices = @transform_14, window_bounds = array<i64: 1, 64, 128>}]} {
    %c0 = arith.constant 0 : index
    %c0_0 = arith.constant 0 : index
    %c0_1 = arith.constant 0 : index
    %0 = vector.load %arg2[%c0, %c0_0, %c0_1] : memref<1x64x16xf32, #tpu.memory_space<vmem>>, vector<1x64x16xf32>
    %1 = vector.shape_cast %0 : vector<1x64x16xf32> to vector<64x16xf32>
    %2 = arith.truncf %1 : vector<64x16xf32> to vector<64x16xbf16>
    %c0_2 = arith.constant 0 : index
    %c0_3 = arith.constant 0 : index
    %3 = vector.load %arg4[%c0_2, %c0_3] : memref<16x96xbf16, #tpu.memory_space<vmem>>, vector<16x96xbf16>
    %cst = arith.constant dense<0.000000e+00> : vector<64x96xf32>
    %4 = tpu.matmul %2, %3, %cst {dimension_numbers = #tpu.dot_dimension_numbers<[1], [0], [0], [1], [0, 0, 1, 1], [], []>} : vector<64x16xbf16>, vector<16x96xbf16>, vector<64x96xf32> -> vector<64x96xf32>
    %c0_4 = arith.constant 0 : index
    %c0_5 = arith.constant 0 : index
    %5 = vector.load %arg6[%c0_4, %c0_5] : memref<1x96xf32, #tpu.memory_space<vmem>>, vector<1x96xf32>
    %6 = vector.broadcast %5 : vector<1x96xf32> to vector<64x96xf32>
    %7 = arith.addf %4, %6 : vector<64x96xf32>
    %c0_6 = arith.constant 0 : index
    %c0_7 = arith.constant 0 : index
    %8 = vector.load %arg17[%c0_6, %c0_7] : memref<64x96xf32, #tpu.memory_space<vmem>>, vector<64x96xf32>
    tpu.vector_store %arg17[%c0_6, %c0_7], %7 {strides = array<i32>} : memref<64x96xf32, #tpu.memory_space<vmem>>, vector<64x96xf32>,
    %c0_8 = arith.constant 0 : index
    %c0_9 = arith.constant 0 : index
    %c0_10 = arith.constant 0 : index
    %9 = vector.load %arg3[%c0_8, %c0_9, %c0_10] : memref<1x64x16xf32, #tpu.memory_space<vmem>>, vector<1x64x16xf32>
    %10 = vector.shape_cast %9 : vector<1x64x16xf32> to vector<64x16xf32>
    %11 = arith.truncf %10 : vector<64x16xf32> to vector<64x16xbf16>
    %c0_11 = arith.constant 0 : index
    %c0_12 = arith.constant 0 : index
    %12 = vector.load %arg8[%c0_11, %c0_12] : memref<16x96xbf16, #tpu.memory_space<vmem>>, vector<16x96xbf16>
    %cst_13 = arith.constant dense<0.000000e+00> : vector<64x96xf32>
    %13 = tpu.matmul %11, %12, %cst_13 {dimension_numbers = #tpu.dot_dimension_numbers<[1], [0], [0], [1], [0, 0, 1, 1], [], []>} : vector<64x16xbf16>, vector<16x96xbf16>, vector<64x96xf32> -> vector<64x96xf32>
    %c0_14 = arith.constant 0 : index
    %c0_15 = arith.constant 0 : index
    %14 = vector.load %arg19[%c0_14, %c0_15] : memref<64x96xf32, #tpu.memory_space<vmem>>, vector<64x96xf32>
    tpu.vector_store %arg19[%c0_14, %c0_15], %13 {strides = array<i32>} : memref<64x96xf32, #tpu.memory_space<vmem>>, vector<64x96xf32>,
    %c0_16 = arith.constant 0 : index
    %c0_17 = arith.constant 0 : index
    %15 = vector.load %arg7[%c0_16, %c0_17] : memref<1x32xf32, #tpu.memory_space<vmem>>, vector<1x32xf32>
    %16 = vector.shape_cast %15 : vector<1x32xf32> to vector<1x32xf32>
    %17 = vector.broadcast %16 : vector<1x32xf32> to vector<8x32xf32>
    %cst_18 = arith.constant 0.000000e+00 : f32
    %18 = vector.broadcast %cst_18 : f32 to vector<8x32xf32>
    %c0_i32 = arith.constant 0 : i32
    %c8_i32 = arith.constant 8 : i32
    %19 = arith.muli %c0_i32, %c8_i32 : i32
    %20 = tpu.assume_multiple %19, 8 : i32
    %21 = arith.index_cast %20 : i32 to index
    %c0_19 = arith.constant 0 : index
    %22 = vector.load %arg17[%21, %c0_19] : memref<64x96xf32, #tpu.memory_space<vmem>>, vector<8x96xf32>
    %23 = arith.truncf %18 : vector<8x32xf32> to vector<8x32xbf16>
    %c0_20 = arith.constant 0 : index
    %c0_21 = arith.constant 0 : index
    %24 = vector.load %arg5[%c0_20, %c0_21] : memref<32x96xbf16, #tpu.memory_space<vmem>>, vector<32x96xbf16>
    %cst_22 = arith.constant dense<0.000000e+00> : vector<8x96xf32>
    %25 = tpu.matmul %23, %24, %cst_22 {dimension_numbers = #tpu.dot_dimension_numbers<[1], [0], [0], [1], [0, 0, 1, 1], [], []>} : vector<8x32xbf16>, vector<32x96xbf16>, vector<8x96xf32> -> vector<8x96xf32>
    %26 = vector.extract_strided_slice %22 {offsets = [0, 0], sizes = [8, 32], strides = [1, 1]} : vector<8x96xf32> to vector<8x32xf32>
    %27 = vector.extract_strided_slice %25 {offsets = [0, 0], sizes = [8, 32], strides = [1, 1]} : vector<8x96xf32> to vector<8x32xf32>
    %28 = arith.addf %26, %27 : vector<8x32xf32>
    %29 = arith.negf %28 : vector<8x32xf32>
    %30 = math.exp %29 : vector<8x32xf32>
    %cst_23 = arith.constant 1.000000e+00 : f32
    %31 = vector.broadcast %cst_23 : f32 to vector<8x32xf32>
    %32 = arith.addf %31, %30 : vector<8x32xf32>
    %33 = arith.divf %31, %32 : vector<8x32xf32>
    %34 = vector.extract_strided_slice %22 {offsets = [0, 32], sizes = [8, 32], strides = [1, 1]} : vector<8x96xf32> to vector<8x32xf32>
    %35 = vector.extract_strided_slice %25 {offsets = [0, 32], sizes = [8, 32], strides = [1, 1]} : vector<8x96xf32> to vector<8x32xf32>
    %36 = arith.addf %34, %35 : vector<8x32xf32>
    %37 = arith.negf %36 : vector<8x32xf32>
    %38 = math.exp %37 : vector<8x32xf32>
    %cst_24 = arith.constant 1.000000e+00 : f32
    %39 = vector.broadcast %cst_24 : f32 to vector<8x32xf32>
    %40 = arith.addf %39, %38 : vector<8x32xf32>
    %41 = arith.divf %39, %40 : vector<8x32xf32>
    %42 = vector.extract_strided_slice %22 {offsets = [0, 64], sizes = [8, 32], strides = [1, 1]} : vector<8x96xf32> to vector<8x32xf32>
    %43 = vector.extract_strided_slice %25 {offsets = [0, 64], sizes = [8, 32], strides = [1, 1]} : vector<8x96xf32> to vector<8x32xf32>
    %44 = arith.addf %43, %17 : vector<8x32xf32>
    %45 = arith.mulf %33, %44 : vector<8x32xf32>
    %46 = arith.addf %42, %45 : vector<8x32xf32>
    %47 = math.tanh %46 : vector<8x32xf32>
    %cst_25 = arith.constant 1.000000e+00 : f32
    %48 = vector.broadcast %cst_25 : f32 to vector<8x32xf32>
    %49 = arith.subf %48, %41 : vector<8x32xf32>
    %50 = arith.mulf %49, %47 : vector<8x32xf32>
    %51 = arith.mulf %41, %18 : vector<8x32xf32>
    %52 = arith.addf %50, %51 : vector<8x32xf32>
    %53 = arith.index_cast %20 : i32 to index
    %c0_26 = arith.constant 0 : index
    %54 = vector.load %arg18[%53, %c0_26] : memref<64x32xf32, #tpu.memory_space<vmem>>, vector<8x32xf32>
    tpu.vector_store %arg18[%53, %c0_26], %52 {strides = array<i32>} : memref<64x32xf32, #tpu.memory_space<vmem>>, vector<8x32xf32>,
    %c1_i32 = arith.constant 1 : i32
    %c8_i32_27 = arith.constant 8 : i32
    %55 = arith.muli %c1_i32, %c8_i32_27 : i32
    %56 = tpu.assume_multiple %55, 8 : i32
    %57 = arith.index_cast %56 : i32 to index
    %c0_28 = arith.constant 0 : index
    %58 = vector.load %arg17[%57, %c0_28] : memref<64x96xf32, #tpu.memory_space<vmem>>, vector<8x96xf32>
    %59 = arith.truncf %52 : vector<8x32xf32> to vector<8x32xbf16>
    %c0_29 = arith.constant 0 : index
    %c0_30 = arith.constant 0 : index
    %60 = vector.load %arg5[%c0_29, %c0_30] : memref<32x96xbf16, #tpu.memory_space<vmem>>, vector<32x96xbf16>
    %cst_31 = arith.constant dense<0.000000e+00> : vector<8x96xf32>
    %61 = tpu.matmul %59, %60, %cst_31 {dimension_numbers = #tpu.dot_dimension_numbers<[1], [0], [0], [1], [0, 0, 1, 1], [], []>} : vector<8x32xbf16>, vector<32x96xbf16>, vector<8x96xf32> -> vector<8x96xf32>
    %62 = vector.extract_strided_slice %58 {offsets = [0, 0], sizes = [8, 32], strides = [1, 1]} : vector<8x96xf32> to vector<8x32xf32>
    %63 = vector.extract_strided_slice %61 {offsets = [0, 0], sizes = [8, 32], strides = [1, 1]} : vector<8x96xf32> to vector<8x32xf32>
    %64 = arith.addf %62, %63 : vector<8x32xf32>
    %65 = arith.negf %64 : vector<8x32xf32>
    %66 = math.exp %65 : vector<8x32xf32>
    %cst_32 = arith.constant 1.000000e+00 : f32
    %67 = vector.broadcast %cst_32 : f32 to vector<8x32xf32>
    %68 = arith.addf %67, %66 : vector<8x32xf32>
    %69 = arith.divf %67, %68 : vector<8x32xf32>
    %70 = vector.extract_strided_slice %58 {offsets = [0, 32], sizes = [8, 32], strides = [1, 1]} : vector<8x96xf32> to vector<8x32xf32>
    %71 = vector.extract_strided_slice %61 {offsets = [0, 32], sizes = [8, 32], strides = [1, 1]} : vector<8x96xf32> to vector<8x32xf32>
    %72 = arith.addf %70, %71 : vector<8x32xf32>
    %73 = arith.negf %72 : vector<8x32xf32>
    %74 = math.exp %73 : vector<8x32xf32>
    %cst_33 = arith.constant 1.000000e+00 : f32
    %75 = vector.broadcast %cst_33 : f32 to vector<8x32xf32>
    %76 = arith.addf %75, %74 : vector<8x32xf32>
    %77 = arith.divf %75, %76 : vector<8x32xf32>
    %78 = vector.extract_strided_slice %58 {offsets = [0, 64], sizes = [8, 32], strides = [1, 1]} : vector<8x96xf32> to vector<8x32xf32>
    %79 = vector.extract_strided_slice %61 {offsets = [0, 64], sizes = [8, 32], strides = [1, 1]} : vector<8x96xf32> to vector<8x32xf32>
    %80 = arith.addf %79, %17 : vector<8x32xf32>
    %81 = arith.mulf %69, %80 : vector<8x32xf32>
    %82 = arith.addf %78, %81 : vector<8x32xf32>
    %83 = math.tanh %82 : vector<8x32xf32>
    %cst_34 = arith.constant 1.000000e+00 : f32
    %84 = vector.broadcast %cst_34 : f32 to vector<8x32xf32>
    %85 = arith.subf %84, %77 : vector<8x32xf32>
    %86 = arith.mulf %85, %83 : vector<8x32xf32>
    %87 = arith.mulf %77, %52 : vector<8x32xf32>
    %88 = arith.addf %86, %87 : vector<8x32xf32>
    %89 = arith.index_cast %56 : i32 to index
    %c0_35 = arith.constant 0 : index
    %90 = vector.load %arg18[%89, %c0_35] : memref<64x32xf32, #tpu.memory_space<vmem>>, vector<8x32xf32>
    tpu.vector_store %arg18[%89, %c0_35], %88 {strides = array<i32>} : memref<64x32xf32, #tpu.memory_space<vmem>>, vector<8x32xf32>,
    %c2_i32 = arith.constant 2 : i32
    %c8_i32_36 = arith.constant 8 : i32
    %91 = arith.muli %c2_i32, %c8_i32_36 : i32
    %92 = tpu.assume_multiple %91, 8 : i32
    %93 = arith.index_cast %92 : i32 to index
    %c0_37 = arith.constant 0 : index
    %94 = vector.load %arg17[%93, %c0_37] : memref<64x96xf32, #tpu.memory_space<vmem>>, vector<8x96xf32>
    %95 = arith.truncf %88 : vector<8x32xf32> to vector<8x32xbf16>
    %c0_38 = arith.constant 0 : index
    %c0_39 = arith.constant 0 : index
    %96 = vector.load %arg5[%c0_38, %c0_39] : memref<32x96xbf16, #tpu.memory_space<vmem>>, vector<32x96xbf16>
    %cst_40 = arith.constant dense<0.000000e+00> : vector<8x96xf32>
    %97 = tpu.matmul %95, %96, %cst_40 {dimension_numbers = #tpu.dot_dimension_numbers<[1], [0], [0], [1], [0, 0, 1, 1], [], []>} : vector<8x32xbf16>, vector<32x96xbf16>, vector<8x96xf32> -> vector<8x96xf32>
    %98 = vector.extract_strided_slice %94 {offsets = [0, 0], sizes = [8, 32], strides = [1, 1]} : vector<8x96xf32> to vector<8x32xf32>
    %99 = vector.extract_strided_slice %97 {offsets = [0, 0], sizes = [8, 32], strides = [1, 1]} : vector<8x96xf32> to vector<8x32xf32>
    %100 = arith.addf %98, %99 : vector<8x32xf32>
    %101 = arith.negf %100 : vector<8x32xf32>
    %102 = math.exp %101 : vector<8x32xf32>
    %cst_41 = arith.constant 1.000000e+00 : f32
    %103 = vector.broadcast %cst_41 : f32 to vector<8x32xf32>
    %104 = arith.addf %103, %102 : vector<8x32xf32>
    %105 = arith.divf %103, %104 : vector<8x32xf32>
    %106 = vector.extract_strided_slice %94 {offsets = [0, 32], sizes = [8, 32], strides = [1, 1]} : vector<8x96xf32> to vector<8x32xf32>
    %107 = vector.extract_strided_slice %97 {offsets = [0, 32], sizes = [8, 32], strides = [1, 1]} : vector<8x96xf32> to vector<8x32xf32>
    %108 = arith.addf %106, %107 : vector<8x32xf32>
    %109 = arith.negf %108 : vector<8x32xf32>
    %110 = math.exp %109 : vector<8x32xf32>
    %cst_42 = arith.constant 1.000000e+00 : f32
    %111 = vector.broadcast %cst_42 : f32 to vector<8x32xf32>
    %112 = arith.addf %111, %110 : vector<8x32xf32>
    %113 = arith.divf %111, %112 : vector<8x32xf32>
    %114 = vector.extract_strided_slice %94 {offsets = [0, 64], sizes = [8, 32], strides = [1, 1]} : vector<8x96xf32> to vector<8x32xf32>
    %115 = vector.extract_strided_slice %97 {offsets = [0, 64], sizes = [8, 32], strides = [1, 1]} : vector<8x96xf32> to vector<8x32xf32>
    %116 = arith.addf %115, %17 : vector<8x32xf32>
    %117 = arith.mulf %105, %116 : vector<8x32xf32>
    %118 = arith.addf %114, %117 : vector<8x32xf32>
    %119 = math.tanh %118 : vector<8x32xf32>
    %cst_43 = arith.constant 1.000000e+00 : f32
    %120 = vector.broadcast %cst_43 : f32 to vector<8x32xf32>
    %121 = arith.subf %120, %113 : vector<8x32xf32>
    %122 = arith.mulf %121, %119 : vector<8x32xf32>
    %123 = arith.mulf %113, %88 : vector<8x32xf32>
    %124 = arith.addf %122, %123 : vector<8x32xf32>
    %125 = arith.index_cast %92 : i32 to index
    %c0_44 = arith.constant 0 : index
    %126 = vector.load %arg18[%125, %c0_44] : memref<64x32xf32, #tpu.memory_space<vmem>>, vector<8x32xf32>
    tpu.vector_store %arg18[%125, %c0_44], %124 {strides = array<i32>} : memref<64x32xf32, #tpu.memory_space<vmem>>, vector<8x32xf32>,
    %c3_i32 = arith.constant 3 : i32
    %c8_i32_45 = arith.constant 8 : i32
    %127 = arith.muli %c3_i32, %c8_i32_45 : i32
    %128 = tpu.assume_multiple %127, 8 : i32
    %129 = arith.index_cast %128 : i32 to index
    %c0_46 = arith.constant 0 : index
    %130 = vector.load %arg17[%129, %c0_46] : memref<64x96xf32, #tpu.memory_space<vmem>>, vector<8x96xf32>
    %131 = arith.truncf %124 : vector<8x32xf32> to vector<8x32xbf16>
    %c0_47 = arith.constant 0 : index
    %c0_48 = arith.constant 0 : index
    %132 = vector.load %arg5[%c0_47, %c0_48] : memref<32x96xbf16, #tpu.memory_space<vmem>>, vector<32x96xbf16>
    %cst_49 = arith.constant dense<0.000000e+00> : vector<8x96xf32>
    %133 = tpu.matmul %131, %132, %cst_49 {dimension_numbers = #tpu.dot_dimension_numbers<[1], [0], [0], [1], [0, 0, 1, 1], [], []>} : vector<8x32xbf16>, vector<32x96xbf16>, vector<8x96xf32> -> vector<8x96xf32>
    %134 = vector.extract_strided_slice %130 {offsets = [0, 0], sizes = [8, 32], strides = [1, 1]} : vector<8x96xf32> to vector<8x32xf32>
    %135 = vector.extract_strided_slice %133 {offsets = [0, 0], sizes = [8, 32], strides = [1, 1]} : vector<8x96xf32> to vector<8x32xf32>
    %136 = arith.addf %134, %135 : vector<8x32xf32>
    %137 = arith.negf %136 : vector<8x32xf32>
    %138 = math.exp %137 : vector<8x32xf32>
    %cst_50 = arith.constant 1.000000e+00 : f32
    %139 = vector.broadcast %cst_50 : f32 to vector<8x32xf32>
    %140 = arith.addf %139, %138 : vector<8x32xf32>
    %141 = arith.divf %139, %140 : vector<8x32xf32>
    %142 = vector.extract_strided_slice %130 {offsets = [0, 32], sizes = [8, 32], strides = [1, 1]} : vector<8x96xf32> to vector<8x32xf32>
    %143 = vector.extract_strided_slice %133 {offsets = [0, 32], sizes = [8, 32], strides = [1, 1]} : vector<8x96xf32> to vector<8x32xf32>
    %144 = arith.addf %142, %143 : vector<8x32xf32>
    %145 = arith.negf %144 : vector<8x32xf32>
    %146 = math.exp %145 : vector<8x32xf32>
    %cst_51 = arith.constant 1.000000e+00 : f32
    %147 = vector.broadcast %cst_51 : f32 to vector<8x32xf32>
    %148 = arith.addf %147, %146 : vector<8x32xf32>
    %149 = arith.divf %147, %148 : vector<8x32xf32>
    %150 = vector.extract_strided_slice %130 {offsets = [0, 64], sizes = [8, 32], strides = [1, 1]} : vector<8x96xf32> to vector<8x32xf32>
    %151 = vector.extract_strided_slice %133 {offsets = [0, 64], sizes = [8, 32], strides = [1, 1]} : vector<8x96xf32> to vector<8x32xf32>
    %152 = arith.addf %151, %17 : vector<8x32xf32>
    %153 = arith.mulf %141, %152 : vector<8x32xf32>
    %154 = arith.addf %150, %153 : vector<8x32xf32>
    %155 = math.tanh %154 : vector<8x32xf32>
    %cst_52 = arith.constant 1.000000e+00 : f32
    %156 = vector.broadcast %cst_52 : f32 to vector<8x32xf32>
    %157 = arith.subf %156, %149 : vector<8x32xf32>
    %158 = arith.mulf %157, %155 : vector<8x32xf32>
    %159 = arith.mulf %149, %124 : vector<8x32xf32>
    %160 = arith.addf %158, %159 : vector<8x32xf32>
    %161 = arith.index_cast %128 : i32 to index
    %c0_53 = arith.constant 0 : index
    %162 = vector.load %arg18[%161, %c0_53] : memref<64x32xf32, #tpu.memory_space<vmem>>, vector<8x32xf32>
    tpu.vector_store %arg18[%161, %c0_53], %160 {strides = array<i32>} : memref<64x32xf32, #tpu.memory_space<vmem>>, vector<8x32xf32>,
    %c4_i32 = arith.constant 4 : i32
    %c8_i32_54 = arith.constant 8 : i32
    %163 = arith.muli %c4_i32, %c8_i32_54 : i32
    %164 = tpu.assume_multiple %163, 8 : i32
    %165 = arith.index_cast %164 : i32 to index
    %c0_55 = arith.constant 0 : index
    %166 = vector.load %arg17[%165, %c0_55] : memref<64x96xf32, #tpu.memory_space<vmem>>, vector<8x96xf32>
    %167 = arith.truncf %160 : vector<8x32xf32> to vector<8x32xbf16>
    %c0_56 = arith.constant 0 : index
    %c0_57 = arith.constant 0 : index
    %168 = vector.load %arg5[%c0_56, %c0_57] : memref<32x96xbf16, #tpu.memory_space<vmem>>, vector<32x96xbf16>
    %cst_58 = arith.constant dense<0.000000e+00> : vector<8x96xf32>
    %169 = tpu.matmul %167, %168, %cst_58 {dimension_numbers = #tpu.dot_dimension_numbers<[1], [0], [0], [1], [0, 0, 1, 1], [], []>} : vector<8x32xbf16>, vector<32x96xbf16>, vector<8x96xf32> -> vector<8x96xf32>
    %170 = vector.extract_strided_slice %166 {offsets = [0, 0], sizes = [8, 32], strides = [1, 1]} : vector<8x96xf32> to vector<8x32xf32>
    %171 = vector.extract_strided_slice %169 {offsets = [0, 0], sizes = [8, 32], strides = [1, 1]} : vector<8x96xf32> to vector<8x32xf32>
    %172 = arith.addf %170, %171 : vector<8x32xf32>
    %173 = arith.negf %172 : vector<8x32xf32>
    %174 = math.exp %173 : vector<8x32xf32>
    %cst_59 = arith.constant 1.000000e+00 : f32
    %175 = vector.broadcast %cst_59 : f32 to vector<8x32xf32>
    %176 = arith.addf %175, %174 : vector<8x32xf32>
    %177 = arith.divf %175, %176 : vector<8x32xf32>
    %178 = vector.extract_strided_slice %166 {offsets = [0, 32], sizes = [8, 32], strides = [1, 1]} : vector<8x96xf32> to vector<8x32xf32>
    %179 = vector.extract_strided_slice %169 {offsets = [0, 32], sizes = [8, 32], strides = [1, 1]} : vector<8x96xf32> to vector<8x32xf32>
    %180 = arith.addf %178, %179 : vector<8x32xf32>
    %181 = arith.negf %180 : vector<8x32xf32>
    %182 = math.exp %181 : vector<8x32xf32>
    %cst_60 = arith.constant 1.000000e+00 : f32
    %183 = vector.broadcast %cst_60 : f32 to vector<8x32xf32>
    %184 = arith.addf %183, %182 : vector<8x32xf32>
    %185 = arith.divf %183, %184 : vector<8x32xf32>
    %186 = vector.extract_strided_slice %166 {offsets = [0, 64], sizes = [8, 32], strides = [1, 1]} : vector<8x96xf32> to vector<8x32xf32>
    %187 = vector.extract_strided_slice %169 {offsets = [0, 64], sizes = [8, 32], strides = [1, 1]} : vector<8x96xf32> to vector<8x32xf32>
    %188 = arith.addf %187, %17 : vector<8x32xf32>
    %189 = arith.mulf %177, %188 : vector<8x32xf32>
    %190 = arith.addf %186, %189 : vector<8x32xf32>
    %191 = math.tanh %190 : vector<8x32xf32>
    %cst_61 = arith.constant 1.000000e+00 : f32
    %192 = vector.broadcast %cst_61 : f32 to vector<8x32xf32>
    %193 = arith.subf %192, %185 : vector<8x32xf32>
    %194 = arith.mulf %193, %191 : vector<8x32xf32>
    %195 = arith.mulf %185, %160 : vector<8x32xf32>
    %196 = arith.addf %194, %195 : vector<8x32xf32>
    %197 = arith.index_cast %164 : i32 to index
    %c0_62 = arith.constant 0 : index
    %198 = vector.load %arg18[%197, %c0_62] : memref<64x32xf32, #tpu.memory_space<vmem>>, vector<8x32xf32>
    tpu.vector_store %arg18[%197, %c0_62], %196 {strides = array<i32>} : memref<64x32xf32, #tpu.memory_space<vmem>>, vector<8x32xf32>,
    %c5_i32 = arith.constant 5 : i32
    %c8_i32_63 = arith.constant 8 : i32
    %199 = arith.muli %c5_i32, %c8_i32_63 : i32
    %200 = tpu.assume_multiple %199, 8 : i32
    %201 = arith.index_cast %200 : i32 to index
    %c0_64 = arith.constant 0 : index
    %202 = vector.load %arg17[%201, %c0_64] : memref<64x96xf32, #tpu.memory_space<vmem>>, vector<8x96xf32>
    %203 = arith.truncf %196 : vector<8x32xf32> to vector<8x32xbf16>
    %c0_65 = arith.constant 0 : index
    %c0_66 = arith.constant 0 : index
    %204 = vector.load %arg5[%c0_65, %c0_66] : memref<32x96xbf16, #tpu.memory_space<vmem>>, vector<32x96xbf16>
    %cst_67 = arith.constant dense<0.000000e+00> : vector<8x96xf32>
    %205 = tpu.matmul %203, %204, %cst_67 {dimension_numbers = #tpu.dot_dimension_numbers<[1], [0], [0], [1], [0, 0, 1, 1], [], []>} : vector<8x32xbf16>, vector<32x96xbf16>, vector<8x96xf32> -> vector<8x96xf32>
    %206 = vector.extract_strided_slice %202 {offsets = [0, 0], sizes = [8, 32], strides = [1, 1]} : vector<8x96xf32> to vector<8x32xf32>
    %207 = vector.extract_strided_slice %205 {offsets = [0, 0], sizes = [8, 32], strides = [1, 1]} : vector<8x96xf32> to vector<8x32xf32>
    %208 = arith.addf %206, %207 : vector<8x32xf32>
    %209 = arith.negf %208 : vector<8x32xf32>
    %210 = math.exp %209 : vector<8x32xf32>
    %cst_68 = arith.constant 1.000000e+00 : f32
    %211 = vector.broadcast %cst_68 : f32 to vector<8x32xf32>
    %212 = arith.addf %211, %210 : vector<8x32xf32>
    %213 = arith.divf %211, %212 : vector<8x32xf32>
    %214 = vector.extract_strided_slice %202 {offsets = [0, 32], sizes = [8, 32], strides = [1, 1]} : vector<8x96xf32> to vector<8x32xf32>
    %215 = vector.extract_strided_slice %205 {offsets = [0, 32], sizes = [8, 32], strides = [1, 1]} : vector<8x96xf32> to vector<8x32xf32>
    %216 = arith.addf %214, %215 : vector<8x32xf32>
    %217 = arith.negf %216 : vector<8x32xf32>
    %218 = math.exp %217 : vector<8x32xf32>
    %cst_69 = arith.constant 1.000000e+00 : f32
    %219 = vector.broadcast %cst_69 : f32 to vector<8x32xf32>
    %220 = arith.addf %219, %218 : vector<8x32xf32>
    %221 = arith.divf %219, %220 : vector<8x32xf32>
    %222 = vector.extract_strided_slice %202 {offsets = [0, 64], sizes = [8, 32], strides = [1, 1]} : vector<8x96xf32> to vector<8x32xf32>
    %223 = vector.extract_strided_slice %205 {offsets = [0, 64], sizes = [8, 32], strides = [1, 1]} : vector<8x96xf32> to vector<8x32xf32>
    %224 = arith.addf %223, %17 : vector<8x32xf32>
    %225 = arith.mulf %213, %224 : vector<8x32xf32>
    %226 = arith.addf %222, %225 : vector<8x32xf32>
    %227 = math.tanh %226 : vector<8x32xf32>
    %cst_70 = arith.constant 1.000000e+00 : f32
    %228 = vector.broadcast %cst_70 : f32 to vector<8x32xf32>
    %229 = arith.subf %228, %221 : vector<8x32xf32>
    %230 = arith.mulf %229, %227 : vector<8x32xf32>
    %231 = arith.mulf %221, %196 : vector<8x32xf32>
    %232 = arith.addf %230, %231 : vector<8x32xf32>
    %233 = arith.index_cast %200 : i32 to index
    %c0_71 = arith.constant 0 : index
    %234 = vector.load %arg18[%233, %c0_71] : memref<64x32xf32, #tpu.memory_space<vmem>>, vector<8x32xf32>
    tpu.vector_store %arg18[%233, %c0_71], %232 {strides = array<i32>} : memref<64x32xf32, #tpu.memory_space<vmem>>, vector<8x32xf32>,
    %c6_i32 = arith.constant 6 : i32
    %c8_i32_72 = arith.constant 8 : i32
    %235 = arith.muli %c6_i32, %c8_i32_72 : i32
    %236 = tpu.assume_multiple %235, 8 : i32
    %237 = arith.index_cast %236 : i32 to index
    %c0_73 = arith.constant 0 : index
    %238 = vector.load %arg17[%237, %c0_73] : memref<64x96xf32, #tpu.memory_space<vmem>>, vector<8x96xf32>
    %239 = arith.truncf %232 : vector<8x32xf32> to vector<8x32xbf16>
    %c0_74 = arith.constant 0 : index
    %c0_75 = arith.constant 0 : index
    %240 = vector.load %arg5[%c0_74, %c0_75] : memref<32x96xbf16, #tpu.memory_space<vmem>>, vector<32x96xbf16>
    %cst_76 = arith.constant dense<0.000000e+00> : vector<8x96xf32>
    %241 = tpu.matmul %239, %240, %cst_76 {dimension_numbers = #tpu.dot_dimension_numbers<[1], [0], [0], [1], [0, 0, 1, 1], [], []>} : vector<8x32xbf16>, vector<32x96xbf16>, vector<8x96xf32> -> vector<8x96xf32>
    %242 = vector.extract_strided_slice %238 {offsets = [0, 0], sizes = [8, 32], strides = [1, 1]} : vector<8x96xf32> to vector<8x32xf32>
    %243 = vector.extract_strided_slice %241 {offsets = [0, 0], sizes = [8, 32], strides = [1, 1]} : vector<8x96xf32> to vector<8x32xf32>
    %244 = arith.addf %242, %243 : vector<8x32xf32>
    %245 = arith.negf %244 : vector<8x32xf32>
    %246 = math.exp %245 : vector<8x32xf32>
    %cst_77 = arith.constant 1.000000e+00 : f32
    %247 = vector.broadcast %cst_77 : f32 to vector<8x32xf32>
    %248 = arith.addf %247, %246 : vector<8x32xf32>
    %249 = arith.divf %247, %248 : vector<8x32xf32>
    %250 = vector.extract_strided_slice %238 {offsets = [0, 32], sizes = [8, 32], strides = [1, 1]} : vector<8x96xf32> to vector<8x32xf32>
    %251 = vector.extract_strided_slice %241 {offsets = [0, 32], sizes = [8, 32], strides = [1, 1]} : vector<8x96xf32> to vector<8x32xf32>
    %252 = arith.addf %250, %251 : vector<8x32xf32>
    %253 = arith.negf %252 : vector<8x32xf32>
    %254 = math.exp %253 : vector<8x32xf32>
    %cst_78 = arith.constant 1.000000e+00 : f32
    %255 = vector.broadcast %cst_78 : f32 to vector<8x32xf32>
    %256 = arith.addf %255, %254 : vector<8x32xf32>
    %257 = arith.divf %255, %256 : vector<8x32xf32>
    %258 = vector.extract_strided_slice %238 {offsets = [0, 64], sizes = [8, 32], strides = [1, 1]} : vector<8x96xf32> to vector<8x32xf32>
    %259 = vector.extract_strided_slice %241 {offsets = [0, 64], sizes = [8, 32], strides = [1, 1]} : vector<8x96xf32> to vector<8x32xf32>
    %260 = arith.addf %259, %17 : vector<8x32xf32>
    %261 = arith.mulf %249, %260 : vector<8x32xf32>
    %262 = arith.addf %258, %261 : vector<8x32xf32>
    %263 = math.tanh %262 : vector<8x32xf32>
    %cst_79 = arith.constant 1.000000e+00 : f32
    %264 = vector.broadcast %cst_79 : f32 to vector<8x32xf32>
    %265 = arith.subf %264, %257 : vector<8x32xf32>
    %266 = arith.mulf %265, %263 : vector<8x32xf32>
    %267 = arith.mulf %257, %232 : vector<8x32xf32>
    %268 = arith.addf %266, %267 : vector<8x32xf32>
    %269 = arith.index_cast %236 : i32 to index
    %c0_80 = arith.constant 0 : index
    %270 = vector.load %arg18[%269, %c0_80] : memref<64x32xf32, #tpu.memory_space<vmem>>, vector<8x32xf32>
    tpu.vector_store %arg18[%269, %c0_80], %268 {strides = array<i32>} : memref<64x32xf32, #tpu.memory_space<vmem>>, vector<8x32xf32>,
    %c7_i32 = arith.constant 7 : i32
    %c8_i32_81 = arith.constant 8 : i32
    %271 = arith.muli %c7_i32, %c8_i32_81 : i32
    %272 = tpu.assume_multiple %271, 8 : i32
    %273 = arith.index_cast %272 : i32 to index
    %c0_82 = arith.constant 0 : index
    %274 = vector.load %arg17[%273, %c0_82] : memref<64x96xf32, #tpu.memory_space<vmem>>, vector<8x96xf32>
    %275 = arith.truncf %268 : vector<8x32xf32> to vector<8x32xbf16>
    %c0_83 = arith.constant 0 : index
    %c0_84 = arith.constant 0 : index
    %276 = vector.load %arg5[%c0_83, %c0_84] : memref<32x96xbf16, #tpu.memory_space<vmem>>, vector<32x96xbf16>
    %cst_85 = arith.constant dense<0.000000e+00> : vector<8x96xf32>
    %277 = tpu.matmul %275, %276, %cst_85 {dimension_numbers = #tpu.dot_dimension_numbers<[1], [0], [0], [1], [0, 0, 1, 1], [], []>} : vector<8x32xbf16>, vector<32x96xbf16>, vector<8x96xf32> -> vector<8x96xf32>
    %278 = vector.extract_strided_slice %274 {offsets = [0, 0], sizes = [8, 32], strides = [1, 1]} : vector<8x96xf32> to vector<8x32xf32>
    %279 = vector.extract_strided_slice %277 {offsets = [0, 0], sizes = [8, 32], strides = [1, 1]} : vector<8x96xf32> to vector<8x32xf32>
    %280 = arith.addf %278, %279 : vector<8x32xf32>
    %281 = arith.negf %280 : vector<8x32xf32>
    %282 = math.exp %281 : vector<8x32xf32>
    %cst_86 = arith.constant 1.000000e+00 : f32
    %283 = vector.broadcast %cst_86 : f32 to vector<8x32xf32>
    %284 = arith.addf %283, %282 : vector<8x32xf32>
    %285 = arith.divf %283, %284 : vector<8x32xf32>
    %286 = vector.extract_strided_slice %274 {offsets = [0, 32], sizes = [8, 32], strides = [1, 1]} : vector<8x96xf32> to vector<8x32xf32>
    %287 = vector.extract_strided_slice %277 {offsets = [0, 32], sizes = [8, 32], strides = [1, 1]} : vector<8x96xf32> to vector<8x32xf32>
    %288 = arith.addf %286, %287 : vector<8x32xf32>
    %289 = arith.negf %288 : vector<8x32xf32>
    %290 = math.exp %289 : vector<8x32xf32>
    %cst_87 = arith.constant 1.000000e+00 : f32
    %291 = vector.broadcast %cst_87 : f32 to vector<8x32xf32>
    %292 = arith.addf %291, %290 : vector<8x32xf32>
    %293 = arith.divf %291, %292 : vector<8x32xf32>
    %294 = vector.extract_strided_slice %274 {offsets = [0, 64], sizes = [8, 32], strides = [1, 1]} : vector<8x96xf32> to vector<8x32xf32>
    %295 = vector.extract_strided_slice %277 {offsets = [0, 64], sizes = [8, 32], strides = [1, 1]} : vector<8x96xf32> to vector<8x32xf32>
    %296 = arith.addf %295, %17 : vector<8x32xf32>
    %297 = arith.mulf %285, %296 : vector<8x32xf32>
    %298 = arith.addf %294, %297 : vector<8x32xf32>
    %299 = math.tanh %298 : vector<8x32xf32>
    %cst_88 = arith.constant 1.000000e+00 : f32
    %300 = vector.broadcast %cst_88 : f32 to vector<8x32xf32>
    %301 = arith.subf %300, %293 : vector<8x32xf32>
    %302 = arith.mulf %301, %299 : vector<8x32xf32>
    %303 = arith.mulf %293, %268 : vector<8x32xf32>
    %304 = arith.addf %302, %303 : vector<8x32xf32>
    %305 = arith.index_cast %272 : i32 to index
    %c0_89 = arith.constant 0 : index
    %306 = vector.load %arg18[%305, %c0_89] : memref<64x32xf32, #tpu.memory_space<vmem>>, vector<8x32xf32>
    tpu.vector_store %arg18[%305, %c0_89], %304 {strides = array<i32>} : memref<64x32xf32, #tpu.memory_space<vmem>>, vector<8x32xf32>,
    %c8_i32_90 = arith.constant 8 : i32
    %c0_91 = arith.constant 0 : index
    %c0_92 = arith.constant 0 : index
    %307 = vector.load %arg18[%c0_91, %c0_92] : memref<64x32xf32, #tpu.memory_space<vmem>>, vector<64x32xf32>
    %308 = arith.truncf %307 : vector<64x32xf32> to vector<64x32xbf16>
    %c0_93 = arith.constant 0 : index
    %c0_94 = arith.constant 0 : index
    %309 = vector.load %arg9[%c0_93, %c0_94] : memref<32x96xbf16, #tpu.memory_space<vmem>>, vector<32x96xbf16>
    %cst_95 = arith.constant dense<0.000000e+00> : vector<64x96xf32>
    %310 = tpu.matmul %308, %309, %cst_95 {dimension_numbers = #tpu.dot_dimension_numbers<[1], [0], [0], [1], [0, 0, 1, 1], [], []>} : vector<64x32xbf16>, vector<32x96xbf16>, vector<64x96xf32> -> vector<64x96xf32>
    %c0_96 = arith.constant 0 : index
    %c0_97 = arith.constant 0 : index
    %311 = vector.load %arg11[%c0_96, %c0_97] : memref<1x96xf32, #tpu.memory_space<vmem>>, vector<1x96xf32>
    %312 = vector.broadcast %311 : vector<1x96xf32> to vector<64x96xf32>
    %313 = arith.addf %310, %312 : vector<64x96xf32>
    %c0_98 = arith.constant 0 : index
    %c0_99 = arith.constant 0 : index
    %314 = vector.load %arg20[%c0_98, %c0_99] : memref<64x96xf32, #tpu.memory_space<vmem>>, vector<64x96xf32>
    tpu.vector_store %arg20[%c0_98, %c0_99], %313 {strides = array<i32>} : memref<64x96xf32, #tpu.memory_space<vmem>>, vector<64x96xf32>,
    %c0_100 = arith.constant 0 : index
    %c0_101 = arith.constant 0 : index
    %315 = vector.load %arg12[%c0_100, %c0_101] : memref<1x32xf32, #tpu.memory_space<vmem>>, vector<1x32xf32>
    %316 = vector.shape_cast %315 : vector<1x32xf32> to vector<1x32xf32>
    %317 = vector.broadcast %316 : vector<1x32xf32> to vector<8x32xf32>
    %c0_102 = arith.constant 0 : index
    %c0_103 = arith.constant 0 : index
    %318 = vector.load %arg15[%c0_102, %c0_103] : memref<1x128xf32, #tpu.memory_space<vmem>>, vector<1x128xf32>
    %319 = vector.shape_cast %318 : vector<1x128xf32> to vector<1x128xf32>
    %320 = vector.broadcast %319 : vector<1x128xf32> to vector<8x128xf32>
    %321 = tpu.iota {dimensions = array<i32: 1>} : vector<8x128xi32>
    %cst_104 = arith.constant 0.000000e+00 : f32
    %322 = vector.broadcast %cst_104 : f32 to vector<8x128xf32>
    %c0_105 = arith.constant 0 : index
    %c0_106 = arith.constant 0 : index
    %c0_107 = arith.constant 0 : index
    %323 = vector.load %arg16[%c0_105, %c0_106, %c0_107] : memref<1x64x128xf32, #tpu.memory_space<vmem>>, vector<1x8x128xf32>
    %324 = vector.shape_cast %323 : vector<1x8x128xf32> to vector<8x128xf32>
    %325 = vector.shape_cast %322 : vector<8x128xf32> to vector<1x8x128xf32>
    tpu.vector_store %arg16[%c0_105, %c0_106, %c0_107], %325 {strides = array<i32>} : memref<1x64x128xf32, #tpu.memory_space<vmem>>, vector<1x8x128xf32>,
    %c0_108 = arith.constant 0 : index
    %c0_109 = arith.constant 0 : index
    %326 = vector.load %arg19[%c0_108, %c0_109] : memref<64x96xf32, #tpu.memory_space<vmem>>, vector<8x96xf32>
    %c1_i32_110 = arith.constant 1 : i32
    %c8_i32_111 = arith.constant 8 : i32
    %327 = arith.muli %c1_i32_110, %c8_i32_111 : i32
    %328 = tpu.assume_multiple %327, 8 : i32
    %329 = arith.index_cast %328 : i32 to index
    %c0_112 = arith.constant 0 : index
    %330 = vector.load %arg20[%329, %c0_112] : memref<64x96xf32, #tpu.memory_space<vmem>>, vector<8x96xf32>
    %331 = arith.addf %326, %330 : vector<8x96xf32>
    %332 = arith.truncf %304 : vector<8x32xf32> to vector<8x32xbf16>
    %c0_113 = arith.constant 0 : index
    %c0_114 = arith.constant 0 : index
    %333 = vector.load %arg10[%c0_113, %c0_114] : memref<32x96xbf16, #tpu.memory_space<vmem>>, vector<32x96xbf16>
    %cst_115 = arith.constant dense<0.000000e+00> : vector<8x96xf32>
    %334 = tpu.matmul %332, %333, %cst_115 {dimension_numbers = #tpu.dot_dimension_numbers<[1], [0], [0], [1], [0, 0, 1, 1], [], []>} : vector<8x32xbf16>, vector<32x96xbf16>, vector<8x96xf32> -> vector<8x96xf32>
    %335 = vector.extract_strided_slice %331 {offsets = [0, 0], sizes = [8, 32], strides = [1, 1]} : vector<8x96xf32> to vector<8x32xf32>
    %336 = vector.extract_strided_slice %334 {offsets = [0, 0], sizes = [8, 32], strides = [1, 1]} : vector<8x96xf32> to vector<8x32xf32>
    %337 = arith.addf %335, %336 : vector<8x32xf32>
    %338 = arith.negf %337 : vector<8x32xf32>
    %339 = math.exp %338 : vector<8x32xf32>
    %cst_116 = arith.constant 1.000000e+00 : f32
    %340 = vector.broadcast %cst_116 : f32 to vector<8x32xf32>
    %341 = arith.addf %340, %339 : vector<8x32xf32>
    %342 = arith.divf %340, %341 : vector<8x32xf32>
    %343 = vector.extract_strided_slice %331 {offsets = [0, 32], sizes = [8, 32], strides = [1, 1]} : vector<8x96xf32> to vector<8x32xf32>
    %344 = vector.extract_strided_slice %334 {offsets = [0, 32], sizes = [8, 32], strides = [1, 1]} : vector<8x96xf32> to vector<8x32xf32>
    %345 = arith.addf %343, %344 : vector<8x32xf32>
    %346 = arith.negf %345 : vector<8x32xf32>
    %347 = math.exp %346 : vector<8x32xf32>
    %cst_117 = arith.constant 1.000000e+00 : f32
    %348 = vector.broadcast %cst_117 : f32 to vector<8x32xf32>
    %349 = arith.addf %348, %347 : vector<8x32xf32>
    %350 = arith.divf %348, %349 : vector<8x32xf32>
    %351 = vector.extract_strided_slice %331 {offsets = [0, 64], sizes = [8, 32], strides = [1, 1]} : vector<8x96xf32> to vector<8x32xf32>
    %352 = vector.extract_strided_slice %334 {offsets = [0, 64], sizes = [8, 32], strides = [1, 1]} : vector<8x96xf32> to vector<8x32xf32>
    %353 = arith.addf %352, %317 : vector<8x32xf32>
    %354 = arith.mulf %342, %353 : vector<8x32xf32>
    %355 = arith.addf %351, %354 : vector<8x32xf32>
    %356 = math.tanh %355 : vector<8x32xf32>
    %cst_118 = arith.constant 1.000000e+00 : f32
    %357 = vector.broadcast %cst_118 : f32 to vector<8x32xf32>
    %358 = arith.subf %357, %350 : vector<8x32xf32>
    %359 = arith.mulf %358, %356 : vector<8x32xf32>
    %360 = arith.mulf %350, %304 : vector<8x32xf32>
    %361 = arith.addf %359, %360 : vector<8x32xf32>
    %362 = arith.truncf %361 : vector<8x32xf32> to vector<8x32xbf16>
    %c0_119 = arith.constant 0 : index
    %c0_120 = arith.constant 0 : index
    %363 = vector.load %arg14[%c0_119, %c0_120] : memref<32x128xbf16, #tpu.memory_space<vmem>>, vector<32x128xbf16>
    %cst_121 = arith.constant dense<0.000000e+00> : vector<8x128xf32>
    %364 = tpu.matmul %362, %363, %cst_121 {dimension_numbers = #tpu.dot_dimension_numbers<[1], [0], [0], [1], [0, 0, 1, 1], [], []>} : vector<8x32xbf16>, vector<32x128xbf16>, vector<8x128xf32> -> vector<8x128xf32>
    %365 = arith.addf %364, %320 : vector<8x128xf32>
    %c0_122 = arith.constant 0 : index
    %366 = arith.index_cast %328 : i32 to index
    %c0_123 = arith.constant 0 : index
    %367 = vector.load %arg16[%c0_122, %366, %c0_123] : memref<1x64x128xf32, #tpu.memory_space<vmem>>, vector<1x8x128xf32>
    %368 = vector.shape_cast %367 : vector<1x8x128xf32> to vector<8x128xf32>
    %369 = vector.shape_cast %365 : vector<8x128xf32> to vector<1x8x128xf32>
    tpu.vector_store %arg16[%c0_122, %366, %c0_123], %369 {strides = array<i32>} : memref<1x64x128xf32, #tpu.memory_space<vmem>>, vector<1x8x128xf32>,
    %cst_124 = arith.constant dense<0xFF800000> : vector<8xf32>
    %370 = vector.multi_reduction <maximumf>, %365, %cst_124 [1] : vector<8x128xf32> to vector<8xf32>
    %371 = vector.shape_cast %370 : vector<8xf32> to vector<8x1xf32>
    %372 = vector.broadcast %371 : vector<8x1xf32> to vector<8x128xf32>
    %373 = arith.cmpf oeq, %365, %372 : vector<8x128xf32>
    %c128_i32 = arith.constant 128 : i32
    %374 = vector.broadcast %c128_i32 : i32 to vector<8x128xi32>
    %375 = arith.select %373, %321, %374 : vector<8x128xi1>, vector<8x128xi32>
    %cst_125 = arith.constant dense<2147483647> : vector<8xi32>
    %376 = vector.multi_reduction <minsi>, %375, %cst_125 [1] : vector<8x128xi32> to vector<8xi32>
    %377 = vector.shape_cast %376 : vector<8xi32> to vector<8x1xi32>
    %378 = vector.broadcast %377 : vector<8x1xi32> to vector<8x128xi32>
    %379 = arith.cmpi eq, %321, %378 : vector<8x128xi32>
    %380 = arith.extui %379 : vector<8x128xi1> to vector<8x128xi32>
    %381 = arith.sitofp %380 : vector<8x128xi32> to vector<8x128xf32>
    %382 = arith.truncf %381 : vector<8x128xf32> to vector<8x128xbf16>
    %c0_126 = arith.constant 0 : index
    %c0_127 = arith.constant 0 : index
    %383 = vector.load %arg13[%c0_126, %c0_127] : memref<128x96xbf16, #tpu.memory_space<vmem>>, vector<128x96xbf16>
    %cst_128 = arith.constant dense<0.000000e+00> : vector<8x96xf32>
    %384 = tpu.matmul %382, %383, %cst_128 {dimension_numbers = #tpu.dot_dimension_numbers<[1], [0], [0], [1], [0, 0, 1, 1], [], []>} : vector<8x128xbf16>, vector<128x96xbf16>, vector<8x96xf32> -> vector<8x96xf32>
    %385 = arith.index_cast %328 : i32 to index
    %c0_129 = arith.constant 0 : index
    %386 = vector.load %arg19[%385, %c0_129] : memref<64x96xf32, #tpu.memory_space<vmem>>, vector<8x96xf32>
    %387 = arith.index_cast %c1_i32_110 : i32 to index
    %388 = memref.load %arg1[%387] : memref<8xi32, #tpu.memory_space<smem>>
    %c0_i32_130 = arith.constant 0 : i32
    %389 = arith.cmpi sgt, %388, %c0_i32_130 : i32
    %390 = arith.select %389, %386, %384 : vector<8x96xf32>
    %c2_i32_131 = arith.constant 2 : i32
    %c8_i32_132 = arith.constant 8 : i32
    %391 = arith.muli %c2_i32_131, %c8_i32_132 : i32
    %392 = tpu.assume_multiple %391, 8 : i32
    %393 = arith.index_cast %392 : i32 to index
    %c0_133 = arith.constant 0 : index
    %394 = vector.load %arg20[%393, %c0_133] : memref<64x96xf32, #tpu.memory_space<vmem>>, vector<8x96xf32>
    %395 = arith.addf %390, %394 : vector<8x96xf32>
    %396 = arith.truncf %361 : vector<8x32xf32> to vector<8x32xbf16>
    %c0_134 = arith.constant 0 : index
    %c0_135 = arith.constant 0 : index
    %397 = vector.load %arg10[%c0_134, %c0_135] : memref<32x96xbf16, #tpu.memory_space<vmem>>, vector<32x96xbf16>
    %cst_136 = arith.constant dense<0.000000e+00> : vector<8x96xf32>
    %398 = tpu.matmul %396, %397, %cst_136 {dimension_numbers = #tpu.dot_dimension_numbers<[1], [0], [0], [1], [0, 0, 1, 1], [], []>} : vector<8x32xbf16>, vector<32x96xbf16>, vector<8x96xf32> -> vector<8x96xf32>
    %399 = vector.extract_strided_slice %395 {offsets = [0, 0], sizes = [8, 32], strides = [1, 1]} : vector<8x96xf32> to vector<8x32xf32>
    %400 = vector.extract_strided_slice %398 {offsets = [0, 0], sizes = [8, 32], strides = [1, 1]} : vector<8x96xf32> to vector<8x32xf32>
    %401 = arith.addf %399, %400 : vector<8x32xf32>
    %402 = arith.negf %401 : vector<8x32xf32>
    %403 = math.exp %402 : vector<8x32xf32>
    %cst_137 = arith.constant 1.000000e+00 : f32
    %404 = vector.broadcast %cst_137 : f32 to vector<8x32xf32>
    %405 = arith.addf %404, %403 : vector<8x32xf32>
    %406 = arith.divf %404, %405 : vector<8x32xf32>
    %407 = vector.extract_strided_slice %395 {offsets = [0, 32], sizes = [8, 32], strides = [1, 1]} : vector<8x96xf32> to vector<8x32xf32>
    %408 = vector.extract_strided_slice %398 {offsets = [0, 32], sizes = [8, 32], strides = [1, 1]} : vector<8x96xf32> to vector<8x32xf32>
    %409 = arith.addf %407, %408 : vector<8x32xf32>
    %410 = arith.negf %409 : vector<8x32xf32>
    %411 = math.exp %410 : vector<8x32xf32>
    %cst_138 = arith.constant 1.000000e+00 : f32
    %412 = vector.broadcast %cst_138 : f32 to vector<8x32xf32>
    %413 = arith.addf %412, %411 : vector<8x32xf32>
    %414 = arith.divf %412, %413 : vector<8x32xf32>
    %415 = vector.extract_strided_slice %395 {offsets = [0, 64], sizes = [8, 32], strides = [1, 1]} : vector<8x96xf32> to vector<8x32xf32>
    %416 = vector.extract_strided_slice %398 {offsets = [0, 64], sizes = [8, 32], strides = [1, 1]} : vector<8x96xf32> to vector<8x32xf32>
    %417 = arith.addf %416, %317 : vector<8x32xf32>
    %418 = arith.mulf %406, %417 : vector<8x32xf32>
    %419 = arith.addf %415, %418 : vector<8x32xf32>
    %420 = math.tanh %419 : vector<8x32xf32>
    %cst_139 = arith.constant 1.000000e+00 : f32
    %421 = vector.broadcast %cst_139 : f32 to vector<8x32xf32>
    %422 = arith.subf %421, %414 : vector<8x32xf32>
    %423 = arith.mulf %422, %420 : vector<8x32xf32>
    %424 = arith.mulf %414, %361 : vector<8x32xf32>
    %425 = arith.addf %423, %424 : vector<8x32xf32>
    %426 = arith.truncf %425 : vector<8x32xf32> to vector<8x32xbf16>
    %c0_140 = arith.constant 0 : index
    %c0_141 = arith.constant 0 : index
    %427 = vector.load %arg14[%c0_140, %c0_141] : memref<32x128xbf16, #tpu.memory_space<vmem>>, vector<32x128xbf16>
    %cst_142 = arith.constant dense<0.000000e+00> : vector<8x128xf32>
    %428 = tpu.matmul %426, %427, %cst_142 {dimension_numbers = #tpu.dot_dimension_numbers<[1], [0], [0], [1], [0, 0, 1, 1], [], []>} : vector<8x32xbf16>, vector<32x128xbf16>, vector<8x128xf32> -> vector<8x128xf32>
    %429 = arith.addf %428, %320 : vector<8x128xf32>
    %c0_143 = arith.constant 0 : index
    %430 = arith.index_cast %392 : i32 to index
    %c0_144 = arith.constant 0 : index
    %431 = vector.load %arg16[%c0_143, %430, %c0_144] : memref<1x64x128xf32, #tpu.memory_space<vmem>>, vector<1x8x128xf32>
    %432 = vector.shape_cast %431 : vector<1x8x128xf32> to vector<8x128xf32>
    %433 = vector.shape_cast %429 : vector<8x128xf32> to vector<1x8x128xf32>
    tpu.vector_store %arg16[%c0_143, %430, %c0_144], %433 {strides = array<i32>} : memref<1x64x128xf32, #tpu.memory_space<vmem>>, vector<1x8x128xf32>,
    %cst_145 = arith.constant dense<0xFF800000> : vector<8xf32>
    %434 = vector.multi_reduction <maximumf>, %429, %cst_145 [1] : vector<8x128xf32> to vector<8xf32>
    %435 = vector.shape_cast %434 : vector<8xf32> to vector<8x1xf32>
    %436 = vector.broadcast %435 : vector<8x1xf32> to vector<8x128xf32>
    %437 = arith.cmpf oeq, %429, %436 : vector<8x128xf32>
    %c128_i32_146 = arith.constant 128 : i32
    %438 = vector.broadcast %c128_i32_146 : i32 to vector<8x128xi32>
    %439 = arith.select %437, %321, %438 : vector<8x128xi1>, vector<8x128xi32>
    %cst_147 = arith.constant dense<2147483647> : vector<8xi32>
    %440 = vector.multi_reduction <minsi>, %439, %cst_147 [1] : vector<8x128xi32> to vector<8xi32>
    %441 = vector.shape_cast %440 : vector<8xi32> to vector<8x1xi32>
    %442 = vector.broadcast %441 : vector<8x1xi32> to vector<8x128xi32>
    %443 = arith.cmpi eq, %321, %442 : vector<8x128xi32>
    %444 = arith.extui %443 : vector<8x128xi1> to vector<8x128xi32>
    %445 = arith.sitofp %444 : vector<8x128xi32> to vector<8x128xf32>
    %446 = arith.truncf %445 : vector<8x128xf32> to vector<8x128xbf16>
    %c0_148 = arith.constant 0 : index
    %c0_149 = arith.constant 0 : index
    %447 = vector.load %arg13[%c0_148, %c0_149] : memref<128x96xbf16, #tpu.memory_space<vmem>>, vector<128x96xbf16>
    %cst_150 = arith.constant dense<0.000000e+00> : vector<8x96xf32>
    %448 = tpu.matmul %446, %447, %cst_150 {dimension_numbers = #tpu.dot_dimension_numbers<[1], [0], [0], [1], [0, 0, 1, 1], [], []>} : vector<8x128xbf16>, vector<128x96xbf16>, vector<8x96xf32> -> vector<8x96xf32>
    %449 = arith.index_cast %392 : i32 to index
    %c0_151 = arith.constant 0 : index
    %450 = vector.load %arg19[%449, %c0_151] : memref<64x96xf32, #tpu.memory_space<vmem>>, vector<8x96xf32>
    %451 = arith.index_cast %c2_i32_131 : i32 to index
    %452 = memref.load %arg1[%451] : memref<8xi32, #tpu.memory_space<smem>>
    %c0_i32_152 = arith.constant 0 : i32
    %453 = arith.cmpi sgt, %452, %c0_i32_152 : i32
    %454 = arith.select %453, %450, %448 : vector<8x96xf32>
    %c3_i32_153 = arith.constant 3 : i32
    %c8_i32_154 = arith.constant 8 : i32
    %455 = arith.muli %c3_i32_153, %c8_i32_154 : i32
    %456 = tpu.assume_multiple %455, 8 : i32
    %457 = arith.index_cast %456 : i32 to index
    %c0_155 = arith.constant 0 : index
    %458 = vector.load %arg20[%457, %c0_155] : memref<64x96xf32, #tpu.memory_space<vmem>>, vector<8x96xf32>
    %459 = arith.addf %454, %458 : vector<8x96xf32>
    %460 = arith.truncf %425 : vector<8x32xf32> to vector<8x32xbf16>
    %c0_156 = arith.constant 0 : index
    %c0_157 = arith.constant 0 : index
    %461 = vector.load %arg10[%c0_156, %c0_157] : memref<32x96xbf16, #tpu.memory_space<vmem>>, vector<32x96xbf16>
    %cst_158 = arith.constant dense<0.000000e+00> : vector<8x96xf32>
    %462 = tpu.matmul %460, %461, %cst_158 {dimension_numbers = #tpu.dot_dimension_numbers<[1], [0], [0], [1], [0, 0, 1, 1], [], []>} : vector<8x32xbf16>, vector<32x96xbf16>, vector<8x96xf32> -> vector<8x96xf32>
    %463 = vector.extract_strided_slice %459 {offsets = [0, 0], sizes = [8, 32], strides = [1, 1]} : vector<8x96xf32> to vector<8x32xf32>
    %464 = vector.extract_strided_slice %462 {offsets = [0, 0], sizes = [8, 32], strides = [1, 1]} : vector<8x96xf32> to vector<8x32xf32>
    %465 = arith.addf %463, %464 : vector<8x32xf32>
    %466 = arith.negf %465 : vector<8x32xf32>
    %467 = math.exp %466 : vector<8x32xf32>
    %cst_159 = arith.constant 1.000000e+00 : f32
    %468 = vector.broadcast %cst_159 : f32 to vector<8x32xf32>
    %469 = arith.addf %468, %467 : vector<8x32xf32>
    %470 = arith.divf %468, %469 : vector<8x32xf32>
    %471 = vector.extract_strided_slice %459 {offsets = [0, 32], sizes = [8, 32], strides = [1, 1]} : vector<8x96xf32> to vector<8x32xf32>
    %472 = vector.extract_strided_slice %462 {offsets = [0, 32], sizes = [8, 32], strides = [1, 1]} : vector<8x96xf32> to vector<8x32xf32>
    %473 = arith.addf %471, %472 : vector<8x32xf32>
    %474 = arith.negf %473 : vector<8x32xf32>
    %475 = math.exp %474 : vector<8x32xf32>
    %cst_160 = arith.constant 1.000000e+00 : f32
    %476 = vector.broadcast %cst_160 : f32 to vector<8x32xf32>
    %477 = arith.addf %476, %475 : vector<8x32xf32>
    %478 = arith.divf %476, %477 : vector<8x32xf32>
    %479 = vector.extract_strided_slice %459 {offsets = [0, 64], sizes = [8, 32], strides = [1, 1]} : vector<8x96xf32> to vector<8x32xf32>
    %480 = vector.extract_strided_slice %462 {offsets = [0, 64], sizes = [8, 32], strides = [1, 1]} : vector<8x96xf32> to vector<8x32xf32>
    %481 = arith.addf %480, %317 : vector<8x32xf32>
    %482 = arith.mulf %470, %481 : vector<8x32xf32>
    %483 = arith.addf %479, %482 : vector<8x32xf32>
    %484 = math.tanh %483 : vector<8x32xf32>
    %cst_161 = arith.constant 1.000000e+00 : f32
    %485 = vector.broadcast %cst_161 : f32 to vector<8x32xf32>
    %486 = arith.subf %485, %478 : vector<8x32xf32>
    %487 = arith.mulf %486, %484 : vector<8x32xf32>
    %488 = arith.mulf %478, %425 : vector<8x32xf32>
    %489 = arith.addf %487, %488 : vector<8x32xf32>
    %490 = arith.truncf %489 : vector<8x32xf32> to vector<8x32xbf16>
    %c0_162 = arith.constant 0 : index
    %c0_163 = arith.constant 0 : index
    %491 = vector.load %arg14[%c0_162, %c0_163] : memref<32x128xbf16, #tpu.memory_space<vmem>>, vector<32x128xbf16>
    %cst_164 = arith.constant dense<0.000000e+00> : vector<8x128xf32>
    %492 = tpu.matmul %490, %491, %cst_164 {dimension_numbers = #tpu.dot_dimension_numbers<[1], [0], [0], [1], [0, 0, 1, 1], [], []>} : vector<8x32xbf16>, vector<32x128xbf16>, vector<8x128xf32> -> vector<8x128xf32>
    %493 = arith.addf %492, %320 : vector<8x128xf32>
    %c0_165 = arith.constant 0 : index
    %494 = arith.index_cast %456 : i32 to index
    %c0_166 = arith.constant 0 : index
    %495 = vector.load %arg16[%c0_165, %494, %c0_166] : memref<1x64x128xf32, #tpu.memory_space<vmem>>, vector<1x8x128xf32>
    %496 = vector.shape_cast %495 : vector<1x8x128xf32> to vector<8x128xf32>
    %497 = vector.shape_cast %493 : vector<8x128xf32> to vector<1x8x128xf32>
    tpu.vector_store %arg16[%c0_165, %494, %c0_166], %497 {strides = array<i32>} : memref<1x64x128xf32, #tpu.memory_space<vmem>>, vector<1x8x128xf32>,
    %cst_167 = arith.constant dense<0xFF800000> : vector<8xf32>
    %498 = vector.multi_reduction <maximumf>, %493, %cst_167 [1] : vector<8x128xf32> to vector<8xf32>
    %499 = vector.shape_cast %498 : vector<8xf32> to vector<8x1xf32>
    %500 = vector.broadcast %499 : vector<8x1xf32> to vector<8x128xf32>
    %501 = arith.cmpf oeq, %493, %500 : vector<8x128xf32>
    %c128_i32_168 = arith.constant 128 : i32
    %502 = vector.broadcast %c128_i32_168 : i32 to vector<8x128xi32>
    %503 = arith.select %501, %321, %502 : vector<8x128xi1>, vector<8x128xi32>
    %cst_169 = arith.constant dense<2147483647> : vector<8xi32>
    %504 = vector.multi_reduction <minsi>, %503, %cst_169 [1] : vector<8x128xi32> to vector<8xi32>
    %505 = vector.shape_cast %504 : vector<8xi32> to vector<8x1xi32>
    %506 = vector.broadcast %505 : vector<8x1xi32> to vector<8x128xi32>
    %507 = arith.cmpi eq, %321, %506 : vector<8x128xi32>
    %508 = arith.extui %507 : vector<8x128xi1> to vector<8x128xi32>
    %509 = arith.sitofp %508 : vector<8x128xi32> to vector<8x128xf32>
    %510 = arith.truncf %509 : vector<8x128xf32> to vector<8x128xbf16>
    %c0_170 = arith.constant 0 : index
    %c0_171 = arith.constant 0 : index
    %511 = vector.load %arg13[%c0_170, %c0_171] : memref<128x96xbf16, #tpu.memory_space<vmem>>, vector<128x96xbf16>
    %cst_172 = arith.constant dense<0.000000e+00> : vector<8x96xf32>
    %512 = tpu.matmul %510, %511, %cst_172 {dimension_numbers = #tpu.dot_dimension_numbers<[1], [0], [0], [1], [0, 0, 1, 1], [], []>} : vector<8x128xbf16>, vector<128x96xbf16>, vector<8x96xf32> -> vector<8x96xf32>
    %513 = arith.index_cast %456 : i32 to index
    %c0_173 = arith.constant 0 : index
    %514 = vector.load %arg19[%513, %c0_173] : memref<64x96xf32, #tpu.memory_space<vmem>>, vector<8x96xf32>
    %515 = arith.index_cast %c3_i32_153 : i32 to index
    %516 = memref.load %arg1[%515] : memref<8xi32, #tpu.memory_space<smem>>
    %c0_i32_174 = arith.constant 0 : i32
    %517 = arith.cmpi sgt, %516, %c0_i32_174 : i32
    %518 = arith.select %517, %514, %512 : vector<8x96xf32>
    %c4_i32_175 = arith.constant 4 : i32
    %c8_i32_176 = arith.constant 8 : i32
    %519 = arith.muli %c4_i32_175, %c8_i32_176 : i32
    %520 = tpu.assume_multiple %519, 8 : i32
    %521 = arith.index_cast %520 : i32 to index
    %c0_177 = arith.constant 0 : index
    %522 = vector.load %arg20[%521, %c0_177] : memref<64x96xf32, #tpu.memory_space<vmem>>, vector<8x96xf32>
    %523 = arith.addf %518, %522 : vector<8x96xf32>
    %524 = arith.truncf %489 : vector<8x32xf32> to vector<8x32xbf16>
    %c0_178 = arith.constant 0 : index
    %c0_179 = arith.constant 0 : index
    %525 = vector.load %arg10[%c0_178, %c0_179] : memref<32x96xbf16, #tpu.memory_space<vmem>>, vector<32x96xbf16>
    %cst_180 = arith.constant dense<0.000000e+00> : vector<8x96xf32>
    %526 = tpu.matmul %524, %525, %cst_180 {dimension_numbers = #tpu.dot_dimension_numbers<[1], [0], [0], [1], [0, 0, 1, 1], [], []>} : vector<8x32xbf16>, vector<32x96xbf16>, vector<8x96xf32> -> vector<8x96xf32>
    %527 = vector.extract_strided_slice %523 {offsets = [0, 0], sizes = [8, 32], strides = [1, 1]} : vector<8x96xf32> to vector<8x32xf32>
    %528 = vector.extract_strided_slice %526 {offsets = [0, 0], sizes = [8, 32], strides = [1, 1]} : vector<8x96xf32> to vector<8x32xf32>
    %529 = arith.addf %527, %528 : vector<8x32xf32>
    %530 = arith.negf %529 : vector<8x32xf32>
    %531 = math.exp %530 : vector<8x32xf32>
    %cst_181 = arith.constant 1.000000e+00 : f32
    %532 = vector.broadcast %cst_181 : f32 to vector<8x32xf32>
    %533 = arith.addf %532, %531 : vector<8x32xf32>
    %534 = arith.divf %532, %533 : vector<8x32xf32>
    %535 = vector.extract_strided_slice %523 {offsets = [0, 32], sizes = [8, 32], strides = [1, 1]} : vector<8x96xf32> to vector<8x32xf32>
    %536 = vector.extract_strided_slice %526 {offsets = [0, 32], sizes = [8, 32], strides = [1, 1]} : vector<8x96xf32> to vector<8x32xf32>
    %537 = arith.addf %535, %536 : vector<8x32xf32>
    %538 = arith.negf %537 : vector<8x32xf32>
    %539 = math.exp %538 : vector<8x32xf32>
    %cst_182 = arith.constant 1.000000e+00 : f32
    %540 = vector.broadcast %cst_182 : f32 to vector<8x32xf32>
    %541 = arith.addf %540, %539 : vector<8x32xf32>
    %542 = arith.divf %540, %541 : vector<8x32xf32>
    %543 = vector.extract_strided_slice %523 {offsets = [0, 64], sizes = [8, 32], strides = [1, 1]} : vector<8x96xf32> to vector<8x32xf32>
    %544 = vector.extract_strided_slice %526 {offsets = [0, 64], sizes = [8, 32], strides = [1, 1]} : vector<8x96xf32> to vector<8x32xf32>
    %545 = arith.addf %544, %317 : vector<8x32xf32>
    %546 = arith.mulf %534, %545 : vector<8x32xf32>
    %547 = arith.addf %543, %546 : vector<8x32xf32>
    %548 = math.tanh %547 : vector<8x32xf32>
    %cst_183 = arith.constant 1.000000e+00 : f32
    %549 = vector.broadcast %cst_183 : f32 to vector<8x32xf32>
    %550 = arith.subf %549, %542 : vector<8x32xf32>
    %551 = arith.mulf %550, %548 : vector<8x32xf32>
    %552 = arith.mulf %542, %489 : vector<8x32xf32>
    %553 = arith.addf %551, %552 : vector<8x32xf32>
    %554 = arith.truncf %553 : vector<8x32xf32> to vector<8x32xbf16>
    %c0_184 = arith.constant 0 : index
    %c0_185 = arith.constant 0 : index
    %555 = vector.load %arg14[%c0_184, %c0_185] : memref<32x128xbf16, #tpu.memory_space<vmem>>, vector<32x128xbf16>
    %cst_186 = arith.constant dense<0.000000e+00> : vector<8x128xf32>
    %556 = tpu.matmul %554, %555, %cst_186 {dimension_numbers = #tpu.dot_dimension_numbers<[1], [0], [0], [1], [0, 0, 1, 1], [], []>} : vector<8x32xbf16>, vector<32x128xbf16>, vector<8x128xf32> -> vector<8x128xf32>
    %557 = arith.addf %556, %320 : vector<8x128xf32>
    %c0_187 = arith.constant 0 : index
    %558 = arith.index_cast %520 : i32 to index
    %c0_188 = arith.constant 0 : index
    %559 = vector.load %arg16[%c0_187, %558, %c0_188] : memref<1x64x128xf32, #tpu.memory_space<vmem>>, vector<1x8x128xf32>
    %560 = vector.shape_cast %559 : vector<1x8x128xf32> to vector<8x128xf32>
    %561 = vector.shape_cast %557 : vector<8x128xf32> to vector<1x8x128xf32>
    tpu.vector_store %arg16[%c0_187, %558, %c0_188], %561 {strides = array<i32>} : memref<1x64x128xf32, #tpu.memory_space<vmem>>, vector<1x8x128xf32>,
    %cst_189 = arith.constant dense<0xFF800000> : vector<8xf32>
    %562 = vector.multi_reduction <maximumf>, %557, %cst_189 [1] : vector<8x128xf32> to vector<8xf32>
    %563 = vector.shape_cast %562 : vector<8xf32> to vector<8x1xf32>
    %564 = vector.broadcast %563 : vector<8x1xf32> to vector<8x128xf32>
    %565 = arith.cmpf oeq, %557, %564 : vector<8x128xf32>
    %c128_i32_190 = arith.constant 128 : i32
    %566 = vector.broadcast %c128_i32_190 : i32 to vector<8x128xi32>
    %567 = arith.select %565, %321, %566 : vector<8x128xi1>, vector<8x128xi32>
    %cst_191 = arith.constant dense<2147483647> : vector<8xi32>
    %568 = vector.multi_reduction <minsi>, %567, %cst_191 [1] : vector<8x128xi32> to vector<8xi32>
    %569 = vector.shape_cast %568 : vector<8xi32> to vector<8x1xi32>
    %570 = vector.broadcast %569 : vector<8x1xi32> to vector<8x128xi32>
    %571 = arith.cmpi eq, %321, %570 : vector<8x128xi32>
    %572 = arith.extui %571 : vector<8x128xi1> to vector<8x128xi32>
    %573 = arith.sitofp %572 : vector<8x128xi32> to vector<8x128xf32>
    %574 = arith.truncf %573 : vector<8x128xf32> to vector<8x128xbf16>
    %c0_192 = arith.constant 0 : index
    %c0_193 = arith.constant 0 : index
    %575 = vector.load %arg13[%c0_192, %c0_193] : memref<128x96xbf16, #tpu.memory_space<vmem>>, vector<128x96xbf16>
    %cst_194 = arith.constant dense<0.000000e+00> : vector<8x96xf32>
    %576 = tpu.matmul %574, %575, %cst_194 {dimension_numbers = #tpu.dot_dimension_numbers<[1], [0], [0], [1], [0, 0, 1, 1], [], []>} : vector<8x128xbf16>, vector<128x96xbf16>, vector<8x96xf32> -> vector<8x96xf32>
    %577 = arith.index_cast %520 : i32 to index
    %c0_195 = arith.constant 0 : index
    %578 = vector.load %arg19[%577, %c0_195] : memref<64x96xf32, #tpu.memory_space<vmem>>, vector<8x96xf32>
    %579 = arith.index_cast %c4_i32_175 : i32 to index
    %580 = memref.load %arg1[%579] : memref<8xi32, #tpu.memory_space<smem>>
    %c0_i32_196 = arith.constant 0 : i32
    %581 = arith.cmpi sgt, %580, %c0_i32_196 : i32
    %582 = arith.select %581, %578, %576 : vector<8x96xf32>
    %c5_i32_197 = arith.constant 5 : i32
    %c8_i32_198 = arith.constant 8 : i32
    %583 = arith.muli %c5_i32_197, %c8_i32_198 : i32
    %584 = tpu.assume_multiple %583, 8 : i32
    %585 = arith.index_cast %584 : i32 to index
    %c0_199 = arith.constant 0 : index
    %586 = vector.load %arg20[%585, %c0_199] : memref<64x96xf32, #tpu.memory_space<vmem>>, vector<8x96xf32>
    %587 = arith.addf %582, %586 : vector<8x96xf32>
    %588 = arith.truncf %553 : vector<8x32xf32> to vector<8x32xbf16>
    %c0_200 = arith.constant 0 : index
    %c0_201 = arith.constant 0 : index
    %589 = vector.load %arg10[%c0_200, %c0_201] : memref<32x96xbf16, #tpu.memory_space<vmem>>, vector<32x96xbf16>
    %cst_202 = arith.constant dense<0.000000e+00> : vector<8x96xf32>
    %590 = tpu.matmul %588, %589, %cst_202 {dimension_numbers = #tpu.dot_dimension_numbers<[1], [0], [0], [1], [0, 0, 1, 1], [], []>} : vector<8x32xbf16>, vector<32x96xbf16>, vector<8x96xf32> -> vector<8x96xf32>
    %591 = vector.extract_strided_slice %587 {offsets = [0, 0], sizes = [8, 32], strides = [1, 1]} : vector<8x96xf32> to vector<8x32xf32>
    %592 = vector.extract_strided_slice %590 {offsets = [0, 0], sizes = [8, 32], strides = [1, 1]} : vector<8x96xf32> to vector<8x32xf32>
    %593 = arith.addf %591, %592 : vector<8x32xf32>
    %594 = arith.negf %593 : vector<8x32xf32>
    %595 = math.exp %594 : vector<8x32xf32>
    %cst_203 = arith.constant 1.000000e+00 : f32
    %596 = vector.broadcast %cst_203 : f32 to vector<8x32xf32>
    %597 = arith.addf %596, %595 : vector<8x32xf32>
    %598 = arith.divf %596, %597 : vector<8x32xf32>
    %599 = vector.extract_strided_slice %587 {offsets = [0, 32], sizes = [8, 32], strides = [1, 1]} : vector<8x96xf32> to vector<8x32xf32>
    %600 = vector.extract_strided_slice %590 {offsets = [0, 32], sizes = [8, 32], strides = [1, 1]} : vector<8x96xf32> to vector<8x32xf32>
    %601 = arith.addf %599, %600 : vector<8x32xf32>
    %602 = arith.negf %601 : vector<8x32xf32>
    %603 = math.exp %602 : vector<8x32xf32>
    %cst_204 = arith.constant 1.000000e+00 : f32
    %604 = vector.broadcast %cst_204 : f32 to vector<8x32xf32>
    %605 = arith.addf %604, %603 : vector<8x32xf32>
    %606 = arith.divf %604, %605 : vector<8x32xf32>
    %607 = vector.extract_strided_slice %587 {offsets = [0, 64], sizes = [8, 32], strides = [1, 1]} : vector<8x96xf32> to vector<8x32xf32>
    %608 = vector.extract_strided_slice %590 {offsets = [0, 64], sizes = [8, 32], strides = [1, 1]} : vector<8x96xf32> to vector<8x32xf32>
    %609 = arith.addf %608, %317 : vector<8x32xf32>
    %610 = arith.mulf %598, %609 : vector<8x32xf32>
    %611 = arith.addf %607, %610 : vector<8x32xf32>
    %612 = math.tanh %611 : vector<8x32xf32>
    %cst_205 = arith.constant 1.000000e+00 : f32
    %613 = vector.broadcast %cst_205 : f32 to vector<8x32xf32>
    %614 = arith.subf %613, %606 : vector<8x32xf32>
    %615 = arith.mulf %614, %612 : vector<8x32xf32>
    %616 = arith.mulf %606, %553 : vector<8x32xf32>
    %617 = arith.addf %615, %616 : vector<8x32xf32>
    %618 = arith.truncf %617 : vector<8x32xf32> to vector<8x32xbf16>
    %c0_206 = arith.constant 0 : index
    %c0_207 = arith.constant 0 : index
    %619 = vector.load %arg14[%c0_206, %c0_207] : memref<32x128xbf16, #tpu.memory_space<vmem>>, vector<32x128xbf16>
    %cst_208 = arith.constant dense<0.000000e+00> : vector<8x128xf32>
    %620 = tpu.matmul %618, %619, %cst_208 {dimension_numbers = #tpu.dot_dimension_numbers<[1], [0], [0], [1], [0, 0, 1, 1], [], []>} : vector<8x32xbf16>, vector<32x128xbf16>, vector<8x128xf32> -> vector<8x128xf32>
    %621 = arith.addf %620, %320 : vector<8x128xf32>
    %c0_209 = arith.constant 0 : index
    %622 = arith.index_cast %584 : i32 to index
    %c0_210 = arith.constant 0 : index
    %623 = vector.load %arg16[%c0_209, %622, %c0_210] : memref<1x64x128xf32, #tpu.memory_space<vmem>>, vector<1x8x128xf32>
    %624 = vector.shape_cast %623 : vector<1x8x128xf32> to vector<8x128xf32>
    %625 = vector.shape_cast %621 : vector<8x128xf32> to vector<1x8x128xf32>
    tpu.vector_store %arg16[%c0_209, %622, %c0_210], %625 {strides = array<i32>} : memref<1x64x128xf32, #tpu.memory_space<vmem>>, vector<1x8x128xf32>,
    %cst_211 = arith.constant dense<0xFF800000> : vector<8xf32>
    %626 = vector.multi_reduction <maximumf>, %621, %cst_211 [1] : vector<8x128xf32> to vector<8xf32>
    %627 = vector.shape_cast %626 : vector<8xf32> to vector<8x1xf32>
    %628 = vector.broadcast %627 : vector<8x1xf32> to vector<8x128xf32>
    %629 = arith.cmpf oeq, %621, %628 : vector<8x128xf32>
    %c128_i32_212 = arith.constant 128 : i32
    %630 = vector.broadcast %c128_i32_212 : i32 to vector<8x128xi32>
    %631 = arith.select %629, %321, %630 : vector<8x128xi1>, vector<8x128xi32>
    %cst_213 = arith.constant dense<2147483647> : vector<8xi32>
    %632 = vector.multi_reduction <minsi>, %631, %cst_213 [1] : vector<8x128xi32> to vector<8xi32>
    %633 = vector.shape_cast %632 : vector<8xi32> to vector<8x1xi32>
    %634 = vector.broadcast %633 : vector<8x1xi32> to vector<8x128xi32>
    %635 = arith.cmpi eq, %321, %634 : vector<8x128xi32>
    %636 = arith.extui %635 : vector<8x128xi1> to vector<8x128xi32>
    %637 = arith.sitofp %636 : vector<8x128xi32> to vector<8x128xf32>
    %638 = arith.truncf %637 : vector<8x128xf32> to vector<8x128xbf16>
    %c0_214 = arith.constant 0 : index
    %c0_215 = arith.constant 0 : index
    %639 = vector.load %arg13[%c0_214, %c0_215] : memref<128x96xbf16, #tpu.memory_space<vmem>>, vector<128x96xbf16>
    %cst_216 = arith.constant dense<0.000000e+00> : vector<8x96xf32>
    %640 = tpu.matmul %638, %639, %cst_216 {dimension_numbers = #tpu.dot_dimension_numbers<[1], [0], [0], [1], [0, 0, 1, 1], [], []>} : vector<8x128xbf16>, vector<128x96xbf16>, vector<8x96xf32> -> vector<8x96xf32>
    %641 = arith.index_cast %584 : i32 to index
    %c0_217 = arith.constant 0 : index
    %642 = vector.load %arg19[%641, %c0_217] : memref<64x96xf32, #tpu.memory_space<vmem>>, vector<8x96xf32>
    %643 = arith.index_cast %c5_i32_197 : i32 to index
    %644 = memref.load %arg1[%643] : memref<8xi32, #tpu.memory_space<smem>>
    %c0_i32_218 = arith.constant 0 : i32
    %645 = arith.cmpi sgt, %644, %c0_i32_218 : i32
    %646 = arith.select %645, %642, %640 : vector<8x96xf32>
    %c6_i32_219 = arith.constant 6 : i32
    %c8_i32_220 = arith.constant 8 : i32
    %647 = arith.muli %c6_i32_219, %c8_i32_220 : i32
    %648 = tpu.assume_multiple %647, 8 : i32
    %649 = arith.index_cast %648 : i32 to index
    %c0_221 = arith.constant 0 : index
    %650 = vector.load %arg20[%649, %c0_221] : memref<64x96xf32, #tpu.memory_space<vmem>>, vector<8x96xf32>
    %651 = arith.addf %646, %650 : vector<8x96xf32>
    %652 = arith.truncf %617 : vector<8x32xf32> to vector<8x32xbf16>
    %c0_222 = arith.constant 0 : index
    %c0_223 = arith.constant 0 : index
    %653 = vector.load %arg10[%c0_222, %c0_223] : memref<32x96xbf16, #tpu.memory_space<vmem>>, vector<32x96xbf16>
    %cst_224 = arith.constant dense<0.000000e+00> : vector<8x96xf32>
    %654 = tpu.matmul %652, %653, %cst_224 {dimension_numbers = #tpu.dot_dimension_numbers<[1], [0], [0], [1], [0, 0, 1, 1], [], []>} : vector<8x32xbf16>, vector<32x96xbf16>, vector<8x96xf32> -> vector<8x96xf32>
    %655 = vector.extract_strided_slice %651 {offsets = [0, 0], sizes = [8, 32], strides = [1, 1]} : vector<8x96xf32> to vector<8x32xf32>
    %656 = vector.extract_strided_slice %654 {offsets = [0, 0], sizes = [8, 32], strides = [1, 1]} : vector<8x96xf32> to vector<8x32xf32>
    %657 = arith.addf %655, %656 : vector<8x32xf32>
    %658 = arith.negf %657 : vector<8x32xf32>
    %659 = math.exp %658 : vector<8x32xf32>
    %cst_225 = arith.constant 1.000000e+00 : f32
    %660 = vector.broadcast %cst_225 : f32 to vector<8x32xf32>
    %661 = arith.addf %660, %659 : vector<8x32xf32>
    %662 = arith.divf %660, %661 : vector<8x32xf32>
    %663 = vector.extract_strided_slice %651 {offsets = [0, 32], sizes = [8, 32], strides = [1, 1]} : vector<8x96xf32> to vector<8x32xf32>
    %664 = vector.extract_strided_slice %654 {offsets = [0, 32], sizes = [8, 32], strides = [1, 1]} : vector<8x96xf32> to vector<8x32xf32>
    %665 = arith.addf %663, %664 : vector<8x32xf32>
    %666 = arith.negf %665 : vector<8x32xf32>
    %667 = math.exp %666 : vector<8x32xf32>
    %cst_226 = arith.constant 1.000000e+00 : f32
    %668 = vector.broadcast %cst_226 : f32 to vector<8x32xf32>
    %669 = arith.addf %668, %667 : vector<8x32xf32>
    %670 = arith.divf %668, %669 : vector<8x32xf32>
    %671 = vector.extract_strided_slice %651 {offsets = [0, 64], sizes = [8, 32], strides = [1, 1]} : vector<8x96xf32> to vector<8x32xf32>
    %672 = vector.extract_strided_slice %654 {offsets = [0, 64], sizes = [8, 32], strides = [1, 1]} : vector<8x96xf32> to vector<8x32xf32>
    %673 = arith.addf %672, %317 : vector<8x32xf32>
    %674 = arith.mulf %662, %673 : vector<8x32xf32>
    %675 = arith.addf %671, %674 : vector<8x32xf32>
    %676 = math.tanh %675 : vector<8x32xf32>
    %cst_227 = arith.constant 1.000000e+00 : f32
    %677 = vector.broadcast %cst_227 : f32 to vector<8x32xf32>
    %678 = arith.subf %677, %670 : vector<8x32xf32>
    %679 = arith.mulf %678, %676 : vector<8x32xf32>
    %680 = arith.mulf %670, %617 : vector<8x32xf32>
    %681 = arith.addf %679, %680 : vector<8x32xf32>
    %682 = arith.truncf %681 : vector<8x32xf32> to vector<8x32xbf16>
    %c0_228 = arith.constant 0 : index
    %c0_229 = arith.constant 0 : index
    %683 = vector.load %arg14[%c0_228, %c0_229] : memref<32x128xbf16, #tpu.memory_space<vmem>>, vector<32x128xbf16>
    %cst_230 = arith.constant dense<0.000000e+00> : vector<8x128xf32>
    %684 = tpu.matmul %682, %683, %cst_230 {dimension_numbers = #tpu.dot_dimension_numbers<[1], [0], [0], [1], [0, 0, 1, 1], [], []>} : vector<8x32xbf16>, vector<32x128xbf16>, vector<8x128xf32> -> vector<8x128xf32>
    %685 = arith.addf %684, %320 : vector<8x128xf32>
    %c0_231 = arith.constant 0 : index
    %686 = arith.index_cast %648 : i32 to index
    %c0_232 = arith.constant 0 : index
    %687 = vector.load %arg16[%c0_231, %686, %c0_232] : memref<1x64x128xf32, #tpu.memory_space<vmem>>, vector<1x8x128xf32>
    %688 = vector.shape_cast %687 : vector<1x8x128xf32> to vector<8x128xf32>
    %689 = vector.shape_cast %685 : vector<8x128xf32> to vector<1x8x128xf32>
    tpu.vector_store %arg16[%c0_231, %686, %c0_232], %689 {strides = array<i32>} : memref<1x64x128xf32, #tpu.memory_space<vmem>>, vector<1x8x128xf32>,
    %cst_233 = arith.constant dense<0xFF800000> : vector<8xf32>
    %690 = vector.multi_reduction <maximumf>, %685, %cst_233 [1] : vector<8x128xf32> to vector<8xf32>
    %691 = vector.shape_cast %690 : vector<8xf32> to vector<8x1xf32>
    %692 = vector.broadcast %691 : vector<8x1xf32> to vector<8x128xf32>
    %693 = arith.cmpf oeq, %685, %692 : vector<8x128xf32>
    %c128_i32_234 = arith.constant 128 : i32
    %694 = vector.broadcast %c128_i32_234 : i32 to vector<8x128xi32>
    %695 = arith.select %693, %321, %694 : vector<8x128xi1>, vector<8x128xi32>
    %cst_235 = arith.constant dense<2147483647> : vector<8xi32>
    %696 = vector.multi_reduction <minsi>, %695, %cst_235 [1] : vector<8x128xi32> to vector<8xi32>
    %697 = vector.shape_cast %696 : vector<8xi32> to vector<8x1xi32>
    %698 = vector.broadcast %697 : vector<8x1xi32> to vector<8x128xi32>
    %699 = arith.cmpi eq, %321, %698 : vector<8x128xi32>
    %700 = arith.extui %699 : vector<8x128xi1> to vector<8x128xi32>
    %701 = arith.sitofp %700 : vector<8x128xi32> to vector<8x128xf32>
    %702 = arith.truncf %701 : vector<8x128xf32> to vector<8x128xbf16>
    %c0_236 = arith.constant 0 : index
    %c0_237 = arith.constant 0 : index
    %703 = vector.load %arg13[%c0_236, %c0_237] : memref<128x96xbf16, #tpu.memory_space<vmem>>, vector<128x96xbf16>
    %cst_238 = arith.constant dense<0.000000e+00> : vector<8x96xf32>
    %704 = tpu.matmul %702, %703, %cst_238 {dimension_numbers = #tpu.dot_dimension_numbers<[1], [0], [0], [1], [0, 0, 1, 1], [], []>} : vector<8x128xbf16>, vector<128x96xbf16>, vector<8x96xf32> -> vector<8x96xf32>
    %705 = arith.index_cast %648 : i32 to index
    %c0_239 = arith.constant 0 : index
    %706 = vector.load %arg19[%705, %c0_239] : memref<64x96xf32, #tpu.memory_space<vmem>>, vector<8x96xf32>
    %707 = arith.index_cast %c6_i32_219 : i32 to index
    %708 = memref.load %arg1[%707] : memref<8xi32, #tpu.memory_space<smem>>
    %c0_i32_240 = arith.constant 0 : i32
    %709 = arith.cmpi sgt, %708, %c0_i32_240 : i32
    %710 = arith.select %709, %706, %704 : vector<8x96xf32>
    %c7_i32_241 = arith.constant 7 : i32
    %c8_i32_242 = arith.constant 8 : i32
    %711 = arith.muli %c7_i32_241, %c8_i32_242 : i32
    %712 = tpu.assume_multiple %711, 8 : i32
    %713 = arith.index_cast %712 : i32 to index
    %c0_243 = arith.constant 0 : index
    %714 = vector.load %arg20[%713, %c0_243] : memref<64x96xf32, #tpu.memory_space<vmem>>, vector<8x96xf32>
    %715 = arith.addf %710, %714 : vector<8x96xf32>
    %716 = arith.truncf %681 : vector<8x32xf32> to vector<8x32xbf16>
    %c0_244 = arith.constant 0 : index
    %c0_245 = arith.constant 0 : index
    %717 = vector.load %arg10[%c0_244, %c0_245] : memref<32x96xbf16, #tpu.memory_space<vmem>>, vector<32x96xbf16>
    %cst_246 = arith.constant dense<0.000000e+00> : vector<8x96xf32>
    %718 = tpu.matmul %716, %717, %cst_246 {dimension_numbers = #tpu.dot_dimension_numbers<[1], [0], [0], [1], [0, 0, 1, 1], [], []>} : vector<8x32xbf16>, vector<32x96xbf16>, vector<8x96xf32> -> vector<8x96xf32>
    %719 = vector.extract_strided_slice %715 {offsets = [0, 0], sizes = [8, 32], strides = [1, 1]} : vector<8x96xf32> to vector<8x32xf32>
    %720 = vector.extract_strided_slice %718 {offsets = [0, 0], sizes = [8, 32], strides = [1, 1]} : vector<8x96xf32> to vector<8x32xf32>
    %721 = arith.addf %719, %720 : vector<8x32xf32>
    %722 = arith.negf %721 : vector<8x32xf32>
    %723 = math.exp %722 : vector<8x32xf32>
    %cst_247 = arith.constant 1.000000e+00 : f32
    %724 = vector.broadcast %cst_247 : f32 to vector<8x32xf32>
    %725 = arith.addf %724, %723 : vector<8x32xf32>
    %726 = arith.divf %724, %725 : vector<8x32xf32>
    %727 = vector.extract_strided_slice %715 {offsets = [0, 32], sizes = [8, 32], strides = [1, 1]} : vector<8x96xf32> to vector<8x32xf32>
    %728 = vector.extract_strided_slice %718 {offsets = [0, 32], sizes = [8, 32], strides = [1, 1]} : vector<8x96xf32> to vector<8x32xf32>
    %729 = arith.addf %727, %728 : vector<8x32xf32>
    %730 = arith.negf %729 : vector<8x32xf32>
    %731 = math.exp %730 : vector<8x32xf32>
    %cst_248 = arith.constant 1.000000e+00 : f32
    %732 = vector.broadcast %cst_248 : f32 to vector<8x32xf32>
    %733 = arith.addf %732, %731 : vector<8x32xf32>
    %734 = arith.divf %732, %733 : vector<8x32xf32>
    %735 = vector.extract_strided_slice %715 {offsets = [0, 64], sizes = [8, 32], strides = [1, 1]} : vector<8x96xf32> to vector<8x32xf32>
    %736 = vector.extract_strided_slice %718 {offsets = [0, 64], sizes = [8, 32], strides = [1, 1]} : vector<8x96xf32> to vector<8x32xf32>
    %737 = arith.addf %736, %317 : vector<8x32xf32>
    %738 = arith.mulf %726, %737 : vector<8x32xf32>
    %739 = arith.addf %735, %738 : vector<8x32xf32>
    %740 = math.tanh %739 : vector<8x32xf32>
    %cst_249 = arith.constant 1.000000e+00 : f32
    %741 = vector.broadcast %cst_249 : f32 to vector<8x32xf32>
    %742 = arith.subf %741, %734 : vector<8x32xf32>
    %743 = arith.mulf %742, %740 : vector<8x32xf32>
    %744 = arith.mulf %734, %681 : vector<8x32xf32>
    %745 = arith.addf %743, %744 : vector<8x32xf32>
    %746 = arith.truncf %745 : vector<8x32xf32> to vector<8x32xbf16>
    %c0_250 = arith.constant 0 : index
    %c0_251 = arith.constant 0 : index
    %747 = vector.load %arg14[%c0_250, %c0_251] : memref<32x128xbf16, #tpu.memory_space<vmem>>, vector<32x128xbf16>
    %cst_252 = arith.constant dense<0.000000e+00> : vector<8x128xf32>
    %748 = tpu.matmul %746, %747, %cst_252 {dimension_numbers = #tpu.dot_dimension_numbers<[1], [0], [0], [1], [0, 0, 1, 1], [], []>} : vector<8x32xbf16>, vector<32x128xbf16>, vector<8x128xf32> -> vector<8x128xf32>
    %749 = arith.addf %748, %320 : vector<8x128xf32>
    %c0_253 = arith.constant 0 : index
    %750 = arith.index_cast %712 : i32 to index
    %c0_254 = arith.constant 0 : index
    %751 = vector.load %arg16[%c0_253, %750, %c0_254] : memref<1x64x128xf32, #tpu.memory_space<vmem>>, vector<1x8x128xf32>
    %752 = vector.shape_cast %751 : vector<1x8x128xf32> to vector<8x128xf32>
    %753 = vector.shape_cast %749 : vector<8x128xf32> to vector<1x8x128xf32>
    tpu.vector_store %arg16[%c0_253, %750, %c0_254], %753 {strides = array<i32>} : memref<1x64x128xf32, #tpu.memory_space<vmem>>, vector<1x8x128xf32>,
    %cst_255 = arith.constant dense<0xFF800000> : vector<8xf32>
    %754 = vector.multi_reduction <maximumf>, %749, %cst_255 [1] : vector<8x128xf32> to vector<8xf32>
    %755 = vector.shape_cast %754 : vector<8xf32> to vector<8x1xf32>
    %756 = vector.broadcast %755 : vector<8x1xf32> to vector<8x128xf32>
    %757 = arith.cmpf oeq, %749, %756 : vector<8x128xf32>
    %c128_i32_256 = arith.constant 128 : i32
    %758 = vector.broadcast %c128_i32_256 : i32 to vector<8x128xi32>
    %759 = arith.select %757, %321, %758 : vector<8x128xi1>, vector<8x128xi32>
    %cst_257 = arith.constant dense<2147483647> : vector<8xi32>
    %760 = vector.multi_reduction <minsi>, %759, %cst_257 [1] : vector<8x128xi32> to vector<8xi32>
    %761 = vector.shape_cast %760 : vector<8xi32> to vector<8x1xi32>
    %762 = vector.broadcast %761 : vector<8x1xi32> to vector<8x128xi32>
    %763 = arith.cmpi eq, %321, %762 : vector<8x128xi32>
    %764 = arith.extui %763 : vector<8x128xi1> to vector<8x128xi32>
    %765 = arith.sitofp %764 : vector<8x128xi32> to vector<8x128xf32>
    %766 = arith.truncf %765 : vector<8x128xf32> to vector<8x128xbf16>
    %c0_258 = arith.constant 0 : index
    %c0_259 = arith.constant 0 : index
    %767 = vector.load %arg13[%c0_258, %c0_259] : memref<128x96xbf16, #tpu.memory_space<vmem>>, vector<128x96xbf16>
    %cst_260 = arith.constant dense<0.000000e+00> : vector<8x96xf32>
    %768 = tpu.matmul %766, %767, %cst_260 {dimension_numbers = #tpu.dot_dimension_numbers<[1], [0], [0], [1], [0, 0, 1, 1], [], []>} : vector<8x128xbf16>, vector<128x96xbf16>, vector<8x96xf32> -> vector<8x96xf32>
    %769 = arith.index_cast %712 : i32 to index
    %c0_261 = arith.constant 0 : index
    %770 = vector.load %arg19[%769, %c0_261] : memref<64x96xf32, #tpu.memory_space<vmem>>, vector<8x96xf32>
    %771 = arith.index_cast %c7_i32_241 : i32 to index
    %772 = memref.load %arg1[%771] : memref<8xi32, #tpu.memory_space<smem>>
    %c0_i32_262 = arith.constant 0 : i32
    %773 = arith.cmpi sgt, %772, %c0_i32_262 : i32
    %774 = arith.select %773, %770, %768 : vector<8x96xf32>
    %c7_i32_263 = arith.constant 7 : i32
    return
  }
  func.func @transform_0(%arg0: i32, %arg1: memref<8xi32, #tpu.memory_space<smem>>) -> (i32, i32, i32) {
    %c0_i32 = arith.constant 0 : i32
    %c0_i32_0 = arith.constant 0 : i32
    %c0_i32_1 = arith.constant 0 : i32
    return %arg0, %c0_i32, %c0_i32_0 : i32, i32, i32
  }
  func.func @transform_1(%arg0: i32, %arg1: memref<8xi32, #tpu.memory_space<smem>>) -> (i32, i32, i32) {
    %c0_i32 = arith.constant 0 : i32
    %c0_i32_0 = arith.constant 0 : i32
    %c0_i32_1 = arith.constant 0 : i32
    return %arg0, %c0_i32, %c0_i32_0 : i32, i32, i32
  }
  func.func @transform_2(%arg0: i32, %arg1: memref<8xi32, #tpu.memory_space<smem>>) -> (i32, i32) {
    %c0_i32 = arith.constant 0 : i32
    %c0_i32_0 = arith.constant 0 : i32
    %c0_i32_1 = arith.constant 0 : i32
    return %c0_i32, %c0_i32_0 : i32, i32
  }
  func.func @transform_3(%arg0: i32, %arg1: memref<8xi32, #tpu.memory_space<smem>>) -> (i32, i32) {
    %c0_i32 = arith.constant 0 : i32
    %c0_i32_0 = arith.constant 0 : i32
    %c0_i32_1 = arith.constant 0 : i32
    return %c0_i32, %c0_i32_0 : i32, i32
  }
  func.func @transform_4(%arg0: i32, %arg1: memref<8xi32, #tpu.memory_space<smem>>) -> (i32, i32) {
    %c0_i32 = arith.constant 0 : i32
    %c0_i32_0 = arith.constant 0 : i32
    %c0_i32_1 = arith.constant 0 : i32
    return %c0_i32, %c0_i32_0 : i32, i32
  }
  func.func @transform_5(%arg0: i32, %arg1: memref<8xi32, #tpu.memory_space<smem>>) -> (i32, i32) {
    %c0_i32 = arith.constant 0 : i32
    %c0_i32_0 = arith.constant 0 : i32
    %c0_i32_1 = arith.constant 0 : i32
    return %c0_i32, %c0_i32_0 : i32, i32
  }
  func.func @transform_6(%arg0: i32, %arg1: memref<8xi32, #tpu.memory_space<smem>>) -> (i32, i32) {
    %c0_i32 = arith.constant 0 : i32
    %c0_i32_0 = arith.constant 0 : i32
    %c0_i32_1 = arith.constant 0 : i32
    return %c0_i32, %c0_i32_0 : i32, i32
  }
  func.func @transform_7(%arg0: i32, %arg1: memref<8xi32, #tpu.memory_space<smem>>) -> (i32, i32) {
    %c0_i32 = arith.constant 0 : i32
    %c0_i32_0 = arith.constant 0 : i32
    %c0_i32_1 = arith.constant 0 : i32
    return %c0_i32, %c0_i32_0 : i32, i32
  }
  func.func @transform_8(%arg0: i32, %arg1: memref<8xi32, #tpu.memory_space<smem>>) -> (i32, i32) {
    %c0_i32 = arith.constant 0 : i32
    %c0_i32_0 = arith.constant 0 : i32
    %c0_i32_1 = arith.constant 0 : i32
    return %c0_i32, %c0_i32_0 : i32, i32
  }
  func.func @transform_9(%arg0: i32, %arg1: memref<8xi32, #tpu.memory_space<smem>>) -> (i32, i32) {
    %c0_i32 = arith.constant 0 : i32
    %c0_i32_0 = arith.constant 0 : i32
    %c0_i32_1 = arith.constant 0 : i32
    return %c0_i32, %c0_i32_0 : i32, i32
  }
  func.func @transform_10(%arg0: i32, %arg1: memref<8xi32, #tpu.memory_space<smem>>) -> (i32, i32) {
    %c0_i32 = arith.constant 0 : i32
    %c0_i32_0 = arith.constant 0 : i32
    %c0_i32_1 = arith.constant 0 : i32
    return %c0_i32, %c0_i32_0 : i32, i32
  }
  func.func @transform_11(%arg0: i32, %arg1: memref<8xi32, #tpu.memory_space<smem>>) -> (i32, i32) {
    %c0_i32 = arith.constant 0 : i32
    %c0_i32_0 = arith.constant 0 : i32
    %c0_i32_1 = arith.constant 0 : i32
    return %c0_i32, %c0_i32_0 : i32, i32
  }
  func.func @transform_12(%arg0: i32, %arg1: memref<8xi32, #tpu.memory_space<smem>>) -> (i32, i32) {
    %c0_i32 = arith.constant 0 : i32
    %c0_i32_0 = arith.constant 0 : i32
    %c0_i32_1 = arith.constant 0 : i32
    return %c0_i32, %c0_i32_0 : i32, i32
  }
  func.func @transform_13(%arg0: i32, %arg1: memref<8xi32, #tpu.memory_space<smem>>) -> (i32, i32) {
    %c0_i32 = arith.constant 0 : i32
    %c0_i32_0 = arith.constant 0 : i32
    %c0_i32_1 = arith.constant 0 : i32
    return %c0_i32, %c0_i32_0 : i32, i32
  }
  func.func @transform_14(%arg0: i32, %arg1: memref<8xi32, #tpu.memory_space<smem>>) -> (i32, i32, i32) {
    %c0_i32 = arith.constant 0 : i32
    %c0_i32_0 = arith.constant 0 : i32
    %c0_i32_1 = arith.constant 0 : i32
    return %arg0, %c0_i32, %c0_i32_0 : i32, i32, i32
  }
}

</mosaic_0001>

<llo_original>
// kernel: seq2seq_forward.1
$region0: #{seq2seq_forward.1}
  #allocation0 [shape = 'u32[]', space=smem, size = 0x4, offset = 0x4, fixed_abs, tag = 'smem constant byte address 0x4 - core index']
  #allocation1 [shape = 'u32[144,128]{1,0:T(1,128)}', space=vmem, size = 0x12000, scoped, tag = 'internal scratch']
  #allocation2 [shape = 'f32[64,96]{1,0:T(8,128)}', space=vmem, size = 0x8000, scoped, tag = 'scratch operand']
  #allocation3 [shape = 'f32[64,32]{1,0:T(8,128)}', space=vmem, size = 0x8000, scoped, tag = 'scratch operand']
  #allocation4 [shape = 'f32[64,96]{1,0:T(8,128)}', space=vmem, size = 0x8000, scoped, tag = 'scratch operand']
  #allocation5 [shape = 'f32[64,96]{1,0:T(8,128)}', space=vmem, size = 0x8000, scoped, tag = 'scratch operand']
  #allocation6 [shape = 's32[1]{0}', space=sflag, size = 0x4, scoped, tag = 'scoped memory for seq2seq_forward.1']
  #allocation7 [shape = 'u8[512]{0}', space=smem, size = 0x200, scoped, tag = 'prefetched SMEM operand 0']
  %s0 = inlined_call_operand.vmem [shape: s32[8], index: 0, kind: input, shape index: {}]
  %s1 = inlined_call_operand.vmem [shape: f32[1,64,16], index: 1, kind: input, shape index: {}]
  %s2 = inlined_call_operand.vmem [shape: f32[1,64,16], index: 2, kind: input, shape index: {}]
  %s3 = inlined_call_operand.vmem [shape: bf16[16,96], index: 3, kind: input, shape index: {}]
  %s4 = inlined_call_operand.vmem [shape: bf16[32,96], index: 4, kind: input, shape index: {}]
  %s5 = inlined_call_operand.vmem [shape: f32[1,96], index: 5, kind: input, shape index: {}]
  %s6 = inlined_call_operand.vmem [shape: f32[1,32], index: 6, kind: input, shape index: {}]
  %s7 = inlined_call_operand.vmem [shape: bf16[16,96], index: 7, kind: input, shape index: {}]
  %s8 = inlined_call_operand.vmem [shape: bf16[32,96], index: 8, kind: input, shape index: {}]
  %s9 = inlined_call_operand.vmem [shape: bf16[32,96], index: 9, kind: input, shape index: {}]
  %s10 = inlined_call_operand.vmem [shape: f32[1,96], index: 10, kind: input, shape index: {}]
  %s11 = inlined_call_operand.vmem [shape: f32[1,32], index: 11, kind: input, shape index: {}]
  %s12 = inlined_call_operand.vmem [shape: bf16[128,96], index: 12, kind: input, shape index: {}]
  %s13 = inlined_call_operand.vmem [shape: bf16[32,128], index: 13, kind: input, shape index: {}]
  %s14 = inlined_call_operand.vmem [shape: f32[1,128], index: 14, kind: input, shape index: {}]
  %s15 = inlined_call_operand.vmem [shape: f32[1,64,128], index: 15, kind: output, shape index: {}]
  %s16 = sld [smem:[#allocation0]]
  $region66: #{seq2seq_forward.1} parent=0
    _
  %s18 = ssub.s32 1, %s16
  %s19 = scalar_select 0, %s18, %s16
  %s20 = sshll.u32 %s0, 4
  %s21 = int_to_ptr.vmem [resolvable:$true] %s20
  %23 = dma.vmem_to_smem %s21, 16, [#allocation7], [#allocation6]
  %24 = dma.done [#allocation6], 16
  %25 = sfence
  // Predicated region
  $region2: #{seq2seq_forward.1} parent=0 // pred_check
    _
  $region3: #{seq2seq_forward.1} parent=0 // pred_check_branch
    %27 = sbr.rel (0) target = $region5
  $region4: #{seq2seq_forward.1} parent=0 // pred_region
    _
  $region5: #{seq2seq_forward.1} parent=0 // pred_fallthru
    _
  // Predicated region
  $region6: #{seq2seq_forward.1} parent=0 // pred_check
    _
  $region7: #{seq2seq_forward.1} parent=0 // pred_check_branch
    %29 = sbr.rel (0) target = $region9
  $region8: #{seq2seq_forward.1} parent=0 // pred_region
    _
  $region9: #{seq2seq_forward.1} parent=0 // pred_fallthru
    _
  // Predicated region
  $region10: #{seq2seq_forward.1} parent=0 // pred_check
    _
  $region11: #{seq2seq_forward.1} parent=0 // pred_check_branch
    %31 = sbr.rel (0) target = $region13
  $region12: #{seq2seq_forward.1} parent=0 // pred_region
    _
  $region13: #{seq2seq_forward.1} parent=0 // pred_fallthru
    _
  // Predicated region
  $region14: #{seq2seq_forward.1} parent=0 // pred_check
    _
  $region15: #{seq2seq_forward.1} parent=0 // pred_check_branch
    %33 = sbr.rel (0) target = $region17
  $region16: #{seq2seq_forward.1} parent=0 // pred_region
    _
  $region17: #{seq2seq_forward.1} parent=0 // pred_fallthru
    _
  // Predicated region
  $region18: #{seq2seq_forward.1} parent=0 // pred_check
    _
  $region19: #{seq2seq_forward.1} parent=0 // pred_check_branch
    %35 = sbr.rel (0) target = $region21
  $region20: #{seq2seq_forward.1} parent=0 // pred_region
    _
  $region21: #{seq2seq_forward.1} parent=0 // pred_fallthru
    _
  // Predicated region
  $region22: #{seq2seq_forward.1} parent=0 // pred_check
    _
  $region23: #{seq2seq_forward.1} parent=0 // pred_check_branch
    %37 = sbr.rel (0) target = $region25
  $region24: #{seq2seq_forward.1} parent=0 // pred_region
    _
  $region25: #{seq2seq_forward.1} parent=0 // pred_fallthru
    _
  // Predicated region
  $region26: #{seq2seq_forward.1} parent=0 // pred_check
    _
  $region27: #{seq2seq_forward.1} parent=0 // pred_check_branch
    %39 = sbr.rel (0) target = $region29
  $region28: #{seq2seq_forward.1} parent=0 // pred_region
    _
  $region29: #{seq2seq_forward.1} parent=0 // pred_fallthru
    _
  // Predicated region
  $region30: #{seq2seq_forward.1} parent=0 // pred_check
    _
  $region31: #{seq2seq_forward.1} parent=0 // pred_check_branch
    %41 = sbr.rel (0) target = $region33
  $region32: #{seq2seq_forward.1} parent=0 // pred_region
    _
  $region33: #{seq2seq_forward.1} parent=0 // pred_fallthru
    _
  // Predicated region
  $region34: #{seq2seq_forward.1} parent=0 // pred_check
    _
  $region35: #{seq2seq_forward.1} parent=0 // pred_check_branch
    %43 = sbr.rel (0) target = $region37
  $region36: #{seq2seq_forward.1} parent=0 // pred_region
    _
  $region37: #{seq2seq_forward.1} parent=0 // pred_fallthru
    _
  // Predicated region
  $region38: #{seq2seq_forward.1} parent=0 // pred_check
    _
  $region39: #{seq2seq_forward.1} parent=0 // pred_check_branch
    %45 = sbr.rel (0) target = $region41
  $region40: #{seq2seq_forward.1} parent=0 // pred_region
    _
  $region41: #{seq2seq_forward.1} parent=0 // pred_fallthru
    _
  // Predicated region
  $region42: #{seq2seq_forward.1} parent=0 // pred_check
    _
  $region43: #{seq2seq_forward.1} parent=0 // pred_check_branch
    %47 = sbr.rel (0) target = $region45
  $region44: #{seq2seq_forward.1} parent=0 // pred_region
    _
  $region45: #{seq2seq_forward.1} parent=0 // pred_fallthru
    _
  // Predicated region
  $region46: #{seq2seq_forward.1} parent=0 // pred_check
    _
  $region47: #{seq2seq_forward.1} parent=0 // pred_check_branch
    %49 = sbr.rel (0) target = $region49
  $region48: #{seq2seq_forward.1} parent=0 // pred_region
    _
  $region49: #{seq2seq_forward.1} parent=0 // pred_fallthru
    _
  // Predicated region
  $region50: #{seq2seq_forward.1} parent=0 // pred_check
    _
  $region51: #{seq2seq_forward.1} parent=0 // pred_check_branch
    %51 = sbr.rel (0) target = $region53
  $region52: #{seq2seq_forward.1} parent=0 // pred_region
    _
  $region53: #{seq2seq_forward.1} parent=0 // pred_fallthru
    _
  // Predicated region
  $region54: #{seq2seq_forward.1} parent=0 // pred_check
    _
  $region55: #{seq2seq_forward.1} parent=0 // pred_check_branch
    %53 = sbr.rel (0) target = $region57
  $region56: #{seq2seq_forward.1} parent=0 // pred_region
    _
  $region57: #{seq2seq_forward.1} parent=0 // pred_fallthru
    _
  %v55 = vld [vmem:[%s1] sm:$0xff]
  %v56 = vld [vmem:[%s1 + $0x8] sm:$0xff]
  %v57 = vld [vmem:[%s1 + $0x10] sm:$0xff]
  %v58 = vld [vmem:[%s1 + $0x18] sm:$0xff]
  %v59 = vld [vmem:[%s1 + $0x20] sm:$0xff]
  %v60 = vld [vmem:[%s1 + $0x28] sm:$0xff]
  %v61 = vld [vmem:[%s1 + $0x30] sm:$0xff]
  %v62 = vld [vmem:[%s1 + $0x38] sm:$0xff]
  %v63 = vpack.c.bf16 %v56, %v55
  %v64 = vpack.c.bf16 %v58, %v57
  %v65 = vpack.c.bf16 %v60, %v59
  %v66 = vpack.c.bf16 %v62, %v61
  %v67 = vld [vmem:[%s3] sm:$0xf]
  %v68 = vld [vmem:[%s3 + $0x4] sm:$0xf]
  %v69 = vld [vmem:[%s5] sm:$0x1]
  %v71 = vlaneseq
  %v72 = vshrl.u32 %v71, 7
  %v73 = vsub.s32 0, %v72
  %v74 = vrot.slane %v69, %v73
  %v78 = vunpack.c.l.b16 %v67
  %v79 = vunpack.c.l.b16 %v68
  %v80 = vpack.c.b16 %v79, %v78
  %vm82 = vcmask 130048
  %v84 = vsel %vm82, %v63, 0
  %v87 = vsel %vm82, %v64, 0
  %v90 = vsel %vm82, %v65, 0
  %v93 = vsel %vm82, %v66, 0
  %95 = vmatprep.subr.bf16.mxu0 0
  %96 = vmatpush1.bf16.msra.mxu0 0
  %97 = vmatprep.subr.bf16.mxu0 0
  %98 = vmatpush1.bf16.msra.mxu0 0
  %99 = vmatprep.subr.bf16.mxu0 0
  %100 = vmatpush1.bf16.msra.mxu0 0
  %101 = vmatprep.subr.bf16.mxu0 0
  %102 = vmatpush1.bf16.msra.mxu0 0
  %103 = vmatprep.subr.bf16.mxu0 0
  %104 = vmatpush1.bf16.msra.mxu0 0
  %105 = vmatprep.subr.bf16.mxu0 0
  %106 = vmatpush1.bf16.msra.mxu0 0
  %107 = vmatprep.subr.bf16.mxu0 0
  %108 = vmatpush1.bf16.msra.mxu0 0
  %109 = vmatprep.subr.bf16.mxu0 0
  %110 = vmatpush1.bf16.msra.mxu0 %v80
  %111 = vmatprep.subr.bf16.mxu0 0
  %112 = vmatpush2.bf16.msra.mxu0 0
  %113 = vmatprep.subr.bf16.mxu0 0
  %114 = vmatpush2.bf16.msra.mxu0 0
  %115 = vmatprep.subr.bf16.mxu0 0
  %116 = vmatpush2.bf16.msra.mxu0 0
  %117 = vmatprep.subr.bf16.mxu0 0
  %118 = vmatpush2.bf16.msra.mxu0 0
  %119 = vmatprep.subr.bf16.mxu0 0
  %120 = vmatpush2.bf16.msra.mxu0 0
  %121 = vmatprep.subr.bf16.mxu0 0
  %122 = vmatpush2.bf16.msra.mxu0 0
  %123 = vmatprep.subr.bf16.mxu0 0
  %124 = vmatpush2.bf16.msra.mxu0 0
  %125 = vmatprep.subr.bf16.mxu0 0
  %126 = vmatpush2.bf16.msra.mxu0 0
  %127 = vmatprep.mubr.bf16.mxu0 0
  %128 = vmatmul.mubr.bf16.gmra.mxu0 %v84
  %v129 = vpop.f32.mrf.mxu0
  %v130 = vadd.f32 %v74, %v129
  %v131 = vpop.f32.mrf.mxu0
  %v132 = vpop.f32.mrf.mxu0
  %v133 = vadd.f32 %v74, %v132
  %v134 = vpop.f32.mrf.mxu0
  %135 = vmatprep.mubr.bf16.mxu0 0
  %136 = vmatmul.mubr.bf16.gmra.mxu0 %v87
  %v137 = vpop.f32.mrf.mxu0
  %v138 = vadd.f32 %v74, %v137
  %v139 = vpop.f32.mrf.mxu0
  %v140 = vpop.f32.mrf.mxu0
  %v141 = vadd.f32 %v74, %v140
  %v142 = vpop.f32.mrf.mxu0
  %143 = vmatprep.mubr.bf16.mxu0 0
  %144 = vmatmul.mubr.bf16.gmra.mxu0 %v90
  %v145 = vpop.f32.mrf.mxu0
  %v146 = vadd.f32 %v74, %v145
  %v147 = vpop.f32.mrf.mxu0
  %v148 = vpop.f32.mrf.mxu0
  %v149 = vadd.f32 %v74, %v148
  %v150 = vpop.f32.mrf.mxu0
  %151 = vmatprep.mubr.bf16.mxu0 0
  %152 = vmatmul.mubr.bf16.gmra.mxu0 %v93
  %v153 = vpop.f32.mrf.mxu0
  %v154 = vadd.f32 %v74, %v153
  %v155 = vpop.f32.mrf.mxu0
  %v156 = vpop.f32.mrf.mxu0
  %v157 = vadd.f32 %v74, %v156
  %v158 = vpop.f32.mrf.mxu0
  %159 = vdwg.mxu0
  %vm160 = vcmask 785408
  %161 = vst.msk [vmem:[#allocation2] sm:$0xff] %vm160, %v130
  %162 = vst.msk [vmem:[#allocation2 + $0x8] sm:$0xff] %vm160, %v133
  %163 = vst.msk [vmem:[#allocation2 + $0x10] sm:$0xff] %vm160, %v138
  %164 = vst.msk [vmem:[#allocation2 + $0x18] sm:$0xff] %vm160, %v141
  %165 = vst.msk [vmem:[#allocation2 + $0x20] sm:$0xff] %vm160, %v146
  %166 = vst.msk [vmem:[#allocation2 + $0x28] sm:$0xff] %vm160, %v149
  %167 = vst.msk [vmem:[#allocation2 + $0x30] sm:$0xff] %vm160, %v154
  %168 = vst.msk [vmem:[#allocation2 + $0x38] sm:$0xff] %vm160, %v157
  %v169 = vld [vmem:[%s2] sm:$0xff]
  %v170 = vld [vmem:[%s2 + $0x8] sm:$0xff]
  %v171 = vld [vmem:[%s2 + $0x10] sm:$0xff]
  %v172 = vld [vmem:[%s2 + $0x18] sm:$0xff]
  %v173 = vld [vmem:[%s2 + $0x20] sm:$0xff]
  %v174 = vld [vmem:[%s2 + $0x28] sm:$0xff]
  %v175 = vld [vmem:[%s2 + $0x30] sm:$0xff]
  %v176 = vld [vmem:[%s2 + $0x38] sm:$0xff]
  %v177 = vpack.c.bf16 %v170, %v169
  %v178 = vpack.c.bf16 %v172, %v171
  %v179 = vpack.c.bf16 %v174, %v173
  %v180 = vpack.c.bf16 %v176, %v175
  %v181 = vld [vmem:[%s7] sm:$0xf]
  %v182 = vld [vmem:[%s7 + $0x4] sm:$0xf]
  %v185 = vunpack.c.l.b16 %v181
  %v186 = vunpack.c.l.b16 %v182
  %v187 = vpack.c.b16 %v186, %v185
  %v190 = vsel %vm82, %v177, 0
  %v193 = vsel %vm82, %v178, 0
  %v196 = vsel %vm82, %v179, 0
  %v199 = vsel %vm82, %v180, 0
  %201 = vmatprep.subr.bf16.mxu0 0
  %202 = vmatpush1.bf16.msra.mxu0 0
  %203 = vmatprep.subr.bf16.mxu0 0
  %204 = vmatpush1.bf16.msra.mxu0 0
  %205 = vmatprep.subr.bf16.mxu0 0
  %206 = vmatpush1.bf16.msra.mxu0 0
  %207 = vmatprep.subr.bf16.mxu0 0
  %208 = vmatpush1.bf16.msra.mxu0 0
  %209 = vmatprep.subr.bf16.mxu0 0
  %210 = vmatpush1.bf16.msra.mxu0 0
  %211 = vmatprep.subr.bf16.mxu0 0
  %212 = vmatpush1.bf16.msra.mxu0 0
  %213 = vmatprep.subr.bf16.mxu0 0
  %214 = vmatpush1.bf16.msra.mxu0 0
  %215 = vmatprep.subr.bf16.mxu0 0
  %216 = vmatpush1.bf16.msra.mxu0 %v187
  %217 = vmatprep.subr.bf16.mxu0 0
  %218 = vmatpush2.bf16.msra.mxu0 0
  %219 = vmatprep.subr.bf16.mxu0 0
  %220 = vmatpush2.bf16.msra.mxu0 0
  %221 = vmatprep.subr.bf16.mxu0 0
  %222 = vmatpush2.bf16.msra.mxu0 0
  %223 = vmatprep.subr.bf16.mxu0 0
  %224 = vmatpush2.bf16.msra.mxu0 0
  %225 = vmatprep.subr.bf16.mxu0 0
  %226 = vmatpush2.bf16.msra.mxu0 0
  %227 = vmatprep.subr.bf16.mxu0 0
  %228 = vmatpush2.bf16.msra.mxu0 0
  %229 = vmatprep.subr.bf16.mxu0 0
  %230 = vmatpush2.bf16.msra.mxu0 0
  %231 = vmatprep.subr.bf16.mxu0 0
  %232 = vmatpush2.bf16.msra.mxu0 0
  %233 = vmatprep.mubr.bf16.mxu0 0
  %234 = vmatmul.mubr.bf16.gmra.mxu0 %v190
  %v235 = vpop.f32.mrf.mxu0
  %v236 = vadd.f32 0.0, %v235
  %v237 = vpop.f32.mrf.mxu0
  %v238 = vpop.f32.mrf.mxu0
  %v239 = vadd.f32 0.0, %v238
  %v240 = vpop.f32.mrf.mxu0
  %241 = vmatprep.mubr.bf16.mxu0 0
  %242 = vmatmul.mubr.bf16.gmra.mxu0 %v193
  %v243 = vpop.f32.mrf.mxu0
  %v244 = vadd.f32 0.0, %v243
  %v245 = vpop.f32.mrf.mxu0
  %v246 = vpop.f32.mrf.mxu0
  %v247 = vadd.f32 0.0, %v246
  %v248 = vpop.f32.mrf.mxu0
  %249 = vmatprep.mubr.bf16.mxu0 0
  %250 = vmatmul.mubr.bf16.gmra.mxu0 %v196
  %v251 = vpop.f32.mrf.mxu0
  %v252 = vadd.f32 0.0, %v251
  %v253 = vpop.f32.mrf.mxu0
  %v254 = vpop.f32.mrf.mxu0
  %v255 = vadd.f32 0.0, %v254
  %v256 = vpop.f32.mrf.mxu0
  %257 = vmatprep.mubr.bf16.mxu0 0
  %258 = vmatmul.mubr.bf16.gmra.mxu0 %v199
  %v259 = vpop.f32.mrf.mxu0
  %v260 = vadd.f32 0.0, %v259
  %v261 = vpop.f32.mrf.mxu0
  %v262 = vpop.f32.mrf.mxu0
  %v263 = vadd.f32 0.0, %v262
  %v264 = vpop.f32.mrf.mxu0
  %265 = vdwg.mxu0
  %266 = vst.msk [vmem:[#allocation4] sm:$0xff] %vm160, %v236
  %267 = vst.msk [vmem:[#allocation4 + $0x8] sm:$0xff] %vm160, %v239
  %268 = vst.msk [vmem:[#allocation4 + $0x10] sm:$0xff] %vm160, %v244
  %269 = vst.msk [vmem:[#allocation4 + $0x18] sm:$0xff] %vm160, %v247
  %270 = vst.msk [vmem:[#allocation4 + $0x20] sm:$0xff] %vm160, %v252
  %271 = vst.msk [vmem:[#allocation4 + $0x28] sm:$0xff] %vm160, %v255
  %272 = vst.msk [vmem:[#allocation4 + $0x30] sm:$0xff] %vm160, %v260
  %273 = vst.msk [vmem:[#allocation4 + $0x38] sm:$0xff] %vm160, %v263
  %v274 = vld [vmem:[%s6] sm:$0x1]
  %v276 = vlaneseq
  %v277 = vshrl.u32 %v276, 7
  %v278 = vsub.s32 0, %v277
  %v279 = vrot.slane %v274, %v278
  %v280 = vld [vmem:[#allocation2] sm:$0xff]
  %v281 = vld [vmem:[%s4] sm:$0xf]
  %v282 = vld [vmem:[%s4 + $0x4] sm:$0xf]
  %v283 = vld [vmem:[%s4 + $0x8] sm:$0xf]
  %v284 = vld [vmem:[%s4 + $0xc] sm:$0xf]
  %v289 = vunpack.c.l.b16 %v281
  %v290 = vunpack.c.l.b16 %v282
  %v291 = vunpack.c.l.b16 %v283
  %v292 = vunpack.c.l.b16 %v284
  %v293 = vpack.c.b16 %v290, %v289
  %v294 = vpack.c.b16 %v292, %v291
  %vm297 = vcmask 261120
  %v299 = vsel %vm297, 0, 0
  %301 = vmatprep.subr.bf16.mxu0 0
  %302 = vmatpush1.bf16.msra.mxu0 0
  %303 = vmatprep.subr.bf16.mxu0 0
  %304 = vmatpush1.bf16.msra.mxu0 0
  %305 = vmatprep.subr.bf16.mxu0 0
  %306 = vmatpush1.bf16.msra.mxu0 0
  %307 = vmatprep.subr.bf16.mxu0 0
  %308 = vmatpush1.bf16.msra.mxu0 0
  %309 = vmatprep.subr.bf16.mxu0 0
  %310 = vmatpush1.bf16.msra.mxu0 0
  %311 = vmatprep.subr.bf16.mxu0 0
  %312 = vmatpush1.bf16.msra.mxu0 0
  %313 = vmatprep.subr.bf16.mxu0 0
  %314 = vmatpush1.bf16.msra.mxu0 %v294
  %315 = vmatprep.subr.bf16.mxu0 0
  %316 = vmatpush1.bf16.msra.mxu0 %v293
  %317 = vmatprep.subr.bf16.mxu0 0
  %318 = vmatpush2.bf16.msra.mxu0 0
  %319 = vmatprep.subr.bf16.mxu0 0
  %320 = vmatpush2.bf16.msra.mxu0 0
  %321 = vmatprep.subr.bf16.mxu0 0
  %322 = vmatpush2.bf16.msra.mxu0 0
  %323 = vmatprep.subr.bf16.mxu0 0
  %324 = vmatpush2.bf16.msra.mxu0 0
  %325 = vmatprep.subr.bf16.mxu0 0
  %326 = vmatpush2.bf16.msra.mxu0 0
  %327 = vmatprep.subr.bf16.mxu0 0
  %328 = vmatpush2.bf16.msra.mxu0 0
  %329 = vmatprep.subr.bf16.mxu0 0
  %330 = vmatpush2.bf16.msra.mxu0 0
  %331 = vmatprep.subr.bf16.mxu0 0
  %332 = vmatpush2.bf16.msra.mxu0 0
  %333 = vmatprep.mubr.bf16.mxu0 0
  %334 = vmatmul.mubr.bf16.gmra.mxu0 %v299
  %v335 = vpop.f32.mrf.mxu0
  %v336 = vadd.f32 0.0, %v335
  %v337 = vpop.f32.mrf.mxu0
  %v338 = vpop.f32.mrf.mxu0
  %v339 = vpop.f32.mrf.mxu0
  %340 = vdwg.mxu0
  %v341 = vadd.f32 %v280, %v336
  %v342 = vxor.u32 %v341, 2147483648
  %v343 = vmul.f32 %v342, 1.442695
  %v344 = vpow.pop %v343
  %v345 = vadd.f32 %v344, 1.0
  %v346 = vrcp.pop %v345
  %v347 = vmul.f32 1.0, %v346
  %348 = vrot.lane.b32.xlu0 %v279, 64
  %v349 = vpop.permute.xlu0 %348
  %v351 = vadd.f32 %v336, %v349
  %353 = vrot.lane.b32.xlu0 %v351, 64
  %v354 = vpop.permute.xlu0 %353
  %v356 = vmul.f32 %v347, %v354
  %358 = vrot.lane.b32.xlu0 %v356, 64
  %v359 = vpop.permute.xlu0 %358
  %v361 = vadd.f32 %v280, %v359
  %v362 = vtanh.pop %v361
  %v363 = vsub.f32 1.0, %v347
  %365 = vrot.lane.b32.xlu0 %v362, 96
  %v366 = vpop.permute.xlu0 %365
  %v368 = vmul.f32 %v363, %v366
  %v369 = vmul.f32 %v347, 0.0
  %v370 = vadd.f32 %v368, %v369
  %372 = vrot.lane.b32.xlu0 %v370, 96
  %v373 = vpop.permute.xlu0 %372
  %375 = vst.msk [vmem:[#allocation3] sm:$0xff] %vm297, %v373
  %s376 = scalar_lea.vmem [#allocation2], 8
  %v377 = vld [vmem:[%s376] sm:$0xff]
  %v378 = vpack.c.bf16 %v370, %v370
  %v379 = vld [vmem:[%s4] sm:$0xf]
  %v380 = vld [vmem:[%s4 + $0x4] sm:$0xf]
  %v381 = vld [vmem:[%s4 + $0x8] sm:$0xf]
  %v382 = vld [vmem:[%s4 + $0xc] sm:$0xf]
  %384 = vrot.lane.b32.xlu0 %v378, 96
  %v385 = vpop.permute.xlu0 %384
  %v390 = vunpack.c.l.b16 %v379
  %v391 = vunpack.c.l.b16 %v380
  %v392 = vunpack.c.l.b16 %v381
  %v393 = vunpack.c.l.b16 %v382
  %v394 = vpack.c.b16 %v391, %v390
  %v395 = vpack.c.b16 %v393, %v392
  %v399 = vsel %vm297, %v385, 0
  %401 = vmatprep.subr.bf16.mxu0 0
  %402 = vmatpush1.bf16.msra.mxu0 0
  %403 = vmatprep.subr.bf16.mxu0 0
  %404 = vmatpush1.bf16.msra.mxu0 0
  %405 = vmatprep.subr.bf16.mxu0 0
  %406 = vmatpush1.bf16.msra.mxu0 0
  %407 = vmatprep.subr.bf16.mxu0 0
  %408 = vmatpush1.bf16.msra.mxu0 0
  %409 = vmatprep.subr.bf16.mxu0 0
  %410 = vmatpush1.bf16.msra.mxu0 0
  %411 = vmatprep.subr.bf16.mxu0 0
  %412 = vmatpush1.bf16.msra.mxu0 0
  %413 = vmatprep.subr.bf16.mxu0 0
  %414 = vmatpush1.bf16.msra.mxu0 %v395
  %415 = vmatprep.subr.bf16.mxu0 0
  %416 = vmatpush1.bf16.msra.mxu0 %v394
  %417 = vmatprep.subr.bf16.mxu0 0
  %418 = vmatpush2.bf16.msra.mxu0 0
  %419 = vmatprep.subr.bf16.mxu0 0
  %420 = vmatpush2.bf16.msra.mxu0 0
  %421 = vmatprep.subr.bf16.mxu0 0
  %422 = vmatpush2.bf16.msra.mxu0 0
  %423 = vmatprep.subr.bf16.mxu0 0
  %424 = vmatpush2.bf16.msra.mxu0 0
  %425 = vmatprep.subr.bf16.mxu0 0
  %426 = vmatpush2.bf16.msra.mxu0 0
  %427 = vmatprep.subr.bf16.mxu0 0
  %428 = vmatpush2.bf16.msra.mxu0 0
  %429 = vmatprep.subr.bf16.mxu0 0
  %430 = vmatpush2.bf16.msra.mxu0 0
  %431 = vmatprep.subr.bf16.mxu0 0
  %432 = vmatpush2.bf16.msra.mxu0 0
  %433 = vmatprep.mubr.bf16.mxu0 0
  %434 = vmatmul.mubr.bf16.gmra.mxu0 %v399
  %v435 = vpop.f32.mrf.mxu0
  %v436 = vadd.f32 0.0, %v435
  %v437 = vpop.f32.mrf.mxu0
  %v438 = vpop.f32.mrf.mxu0
  %v439 = vpop.f32.mrf.mxu0
  %440 = vdwg.mxu0
  %v441 = vadd.f32 %v377, %v436
  %v442 = vxor.u32 %v441, 2147483648
  %v443 = vmul.f32 %v442, 1.442695
  %v444 = vpow.pop %v443
  %v445 = vadd.f32 %v444, 1.0
  %v446 = vrcp.pop %v445
  %v447 = vmul.f32 1.0, %v446
  %v448 = vadd.f32 %v436, %v349
  %450 = vrot.lane.b32.xlu0 %v448, 64
  %v451 = vpop.permute.xlu0 %450
  %v453 = vmul.f32 %v447, %v451
  %455 = vrot.lane.b32.xlu0 %v453, 64
  %v456 = vpop.permute.xlu0 %455
  %v458 = vadd.f32 %v377, %v456
  %v459 = vtanh.pop %v458
  %v460 = vsub.f32 1.0, %v447
  %462 = vrot.lane.b32.xlu0 %v459, 96
  %v463 = vpop.permute.xlu0 %462
  %v465 = vmul.f32 %v460, %v463
  %v466 = vmul.f32 %v447, %v370
  %v467 = vadd.f32 %v465, %v466
  %469 = vrot.lane.b32.xlu0 %v467, 96
  %v470 = vpop.permute.xlu0 %469
  %s472 = scalar_lea.vmem [#allocation3], 8
  %473 = vst.msk [vmem:[%s472] sm:$0xff] %vm297, %v470
  %s474 = scalar_lea.vmem [#allocation2], 16
  %v475 = vld [vmem:[%s474] sm:$0xff]
  %v476 = vpack.c.bf16 %v467, %v467
  %v477 = vld [vmem:[%s4] sm:$0xf]
  %v478 = vld [vmem:[%s4 + $0x4] sm:$0xf]
  %v479 = vld [vmem:[%s4 + $0x8] sm:$0xf]
  %v480 = vld [vmem:[%s4 + $0xc] sm:$0xf]
  %482 = vrot.lane.b32.xlu0 %v476, 96
  %v483 = vpop.permute.xlu0 %482
  %v488 = vunpack.c.l.b16 %v477
  %v489 = vunpack.c.l.b16 %v478
  %v490 = vunpack.c.l.b16 %v479
  %v491 = vunpack.c.l.b16 %v480
  %v492 = vpack.c.b16 %v489, %v488
  %v493 = vpack.c.b16 %v491, %v490
  %v497 = vsel %vm297, %v483, 0
  %499 = vmatprep.subr.bf16.mxu0 0
  %500 = vmatpush1.bf16.msra.mxu0 0
  %501 = vmatprep.subr.bf16.mxu0 0
  %502 = vmatpush1.bf16.msra.mxu0 0
  %503 = vmatprep.subr.bf16.mxu0 0
  %504 = vmatpush1.bf16.msra.mxu0 0
  %505 = vmatprep.subr.bf16.mxu0 0
  %506 = vmatpush1.bf16.msra.mxu0 0
  %507 = vmatprep.subr.bf16.mxu0 0
  %508 = vmatpush1.bf16.msra.mxu0 0
  %509 = vmatprep.subr.bf16.mxu0 0
  %510 = vmatpush1.bf16.msra.mxu0 0
  %511 = vmatprep.subr.bf16.mxu0 0
  %512 = vmatpush1.bf16.msra.mxu0 %v493
  %513 = vmatprep.subr.bf16.mxu0 0
  %514 = vmatpush1.bf16.msra.mxu0 %v492
  %515 = vmatprep.subr.bf16.mxu0 0
  %516 = vmatpush2.bf16.msra.mxu0 0
  %517 = vmatprep.subr.bf16.mxu0 0
  %518 = vmatpush2.bf16.msra.mxu0 0
  %519 = vmatprep.subr.bf16.mxu0 0
  %520 = vmatpush2.bf16.msra.mxu0 0
  %521 = vmatprep.subr.bf16.mxu0 0
  %522 = vmatpush2.bf16.msra.mxu0 0
  %523 = vmatprep.subr.bf16.mxu0 0
  %524 = vmatpush2.bf16.msra.mxu0 0
  %525 = vmatprep.subr.bf16.mxu0 0
  %526 = vmatpush2.bf16.msra.mxu0 0
  %527 = vmatprep.subr.bf16.mxu0 0
  %528 = vmatpush2.bf16.msra.mxu0 0
  %529 = vmatprep.subr.bf16.mxu0 0
  %530 = vmatpush2.bf16.msra.mxu0 0
  %531 = vmatprep.mubr.bf16.mxu0 0
  %532 = vmatmul.mubr.bf16.gmra.mxu0 %v497
  %v533 = vpop.f32.mrf.mxu0
  %v534 = vadd.f32 0.0, %v533
  %v535 = vpop.f32.mrf.mxu0
  %v536 = vpop.f32.mrf.mxu0
  %v537 = vpop.f32.mrf.mxu0
  %538 = vdwg.mxu0
  %v539 = vadd.f32 %v475, %v534
  %v540 = vxor.u32 %v539, 2147483648
  %v541 = vmul.f32 %v540, 1.442695
  %v542 = vpow.pop %v541
  %v543 = vadd.f32 %v542, 1.0
  %v544 = vrcp.pop %v543
  %v545 = vmul.f32 1.0, %v544
  %v546 = vadd.f32 %v534, %v349
  %548 = vrot.lane.b32.xlu0 %v546, 64
  %v549 = vpop.permute.xlu0 %548
  %v551 = vmul.f32 %v545, %v549
  %553 = vrot.lane.b32.xlu0 %v551, 64
  %v554 = vpop.permute.xlu0 %553
  %v556 = vadd.f32 %v475, %v554
  %v557 = vtanh.pop %v556
  %v558 = vsub.f32 1.0, %v545
  %560 = vrot.lane.b32.xlu0 %v557, 96
  %v561 = vpop.permute.xlu0 %560
  %v563 = vmul.f32 %v558, %v561
  %v564 = vmul.f32 %v545, %v467
  %v565 = vadd.f32 %v563, %v564
  %567 = vrot.lane.b32.xlu0 %v565, 96
  %v568 = vpop.permute.xlu0 %567
  %s570 = scalar_lea.vmem [#allocation3], 16
  %571 = vst.msk [vmem:[%s570] sm:$0xff] %vm297, %v568
  %s572 = scalar_lea.vmem [#allocation2], 24
  %v573 = vld [vmem:[%s572] sm:$0xff]
  %v574 = vpack.c.bf16 %v565, %v565
  %v575 = vld [vmem:[%s4] sm:$0xf]
  %v576 = vld [vmem:[%s4 + $0x4] sm:$0xf]
  %v577 = vld [vmem:[%s4 + $0x8] sm:$0xf]
  %v578 = vld [vmem:[%s4 + $0xc] sm:$0xf]
  %580 = vrot.lane.b32.xlu0 %v574, 96
  %v581 = vpop.permute.xlu0 %580
  %v586 = vunpack.c.l.b16 %v575
  %v587 = vunpack.c.l.b16 %v576
  %v588 = vunpack.c.l.b16 %v577
  %v589 = vunpack.c.l.b16 %v578
  %v590 = vpack.c.b16 %v587, %v586
  %v591 = vpack.c.b16 %v589, %v588
  %v595 = vsel %vm297, %v581, 0
  %597 = vmatprep.subr.bf16.mxu0 0
  %598 = vmatpush1.bf16.msra.mxu0 0
  %599 = vmatprep.subr.bf16.mxu0 0
  %600 = vmatpush1.bf16.msra.mxu0 0
  %601 = vmatprep.subr.bf16.mxu0 0
  %602 = vmatpush1.bf16.msra.mxu0 0
  %603 = vmatprep.subr.bf16.mxu0 0
  %604 = vmatpush1.bf16.msra.mxu0 0
  %605 = vmatprep.subr.bf16.mxu0 0
  %606 = vmatpush1.bf16.msra.mxu0 0
  %607 = vmatprep.subr.bf16.mxu0 0
  %608 = vmatpush1.bf16.msra.mxu0 0
  %609 = vmatprep.subr.bf16.mxu0 0
  %610 = vmatpush1.bf16.msra.mxu0 %v591
  %611 = vmatprep.subr.bf16.mxu0 0
  %612 = vmatpush1.bf16.msra.mxu0 %v590
  %613 = vmatprep.subr.bf16.mxu0 0
  %614 = vmatpush2.bf16.msra.mxu0 0
  %615 = vmatprep.subr.bf16.mxu0 0
  %616 = vmatpush2.bf16.msra.mxu0 0
  %617 = vmatprep.subr.bf16.mxu0 0
  %618 = vmatpush2.bf16.msra.mxu0 0
  %619 = vmatprep.subr.bf16.mxu0 0
  %620 = vmatpush2.bf16.msra.mxu0 0
  %621 = vmatprep.subr.bf16.mxu0 0
  %622 = vmatpush2.bf16.msra.mxu0 0
  %623 = vmatprep.subr.bf16.mxu0 0
  %624 = vmatpush2.bf16.msra.mxu0 0
  %625 = vmatprep.subr.bf16.mxu0 0
  %626 = vmatpush2.bf16.msra.mxu0 0
  %627 = vmatprep.subr.bf16.mxu0 0
  %628 = vmatpush2.bf16.msra.mxu0 0
  %629 = vmatprep.mubr.bf16.mxu0 0
  %630 = vmatmul.mubr.bf16.gmra.mxu0 %v595
  %v631 = vpop.f32.mrf.mxu0
  %v632 = vadd.f32 0.0, %v631
  %v633 = vpop.f32.mrf.mxu0
  %v634 = vpop.f32.mrf.mxu0
  %v635 = vpop.f32.mrf.mxu0
  %636 = vdwg.mxu0
  %v637 = vadd.f32 %v573, %v632
  %v638 = vxor.u32 %v637, 2147483648
  %v639 = vmul.f32 %v638, 1.442695
  %v640 = vpow.pop %v639
  %v641 = vadd.f32 %v640, 1.0
  %v642 = vrcp.pop %v641
  %v643 = vmul.f32 1.0, %v642
  %v644 = vadd.f32 %v632, %v349
  %646 = vrot.lane.b32.xlu0 %v644, 64
  %v647 = vpop.permute.xlu0 %646
  %v649 = vmul.f32 %v643, %v647
  %651 = vrot.lane.b32.xlu0 %v649, 64
  %v652 = vpop.permute.xlu0 %651
  %v654 = vadd.f32 %v573, %v652
  %v655 = vtanh.pop %v654
  %v656 = vsub.f32 1.0, %v643
  %658 = vrot.lane.b32.xlu0 %v655, 96
  %v659 = vpop.permute.xlu0 %658
  %v661 = vmul.f32 %v656, %v659
  %v662 = vmul.f32 %v643, %v565
  %v663 = vadd.f32 %v661, %v662
  %665 = vrot.lane.b32.xlu0 %v663, 96
  %v666 = vpop.permute.xlu0 %665
  %s668 = scalar_lea.vmem [#allocation3], 24
  %669 = vst.msk [vmem:[%s668] sm:$0xff] %vm297, %v666
  %s670 = scalar_lea.vmem [#allocation2], 32
  %v671 = vld [vmem:[%s670] sm:$0xff]
  %v672 = vpack.c.bf16 %v663, %v663
  %v673 = vld [vmem:[%s4] sm:$0xf]
  %v674 = vld [vmem:[%s4 + $0x4] sm:$0xf]
  %v675 = vld [vmem:[%s4 + $0x8] sm:$0xf]
  %v676 = vld [vmem:[%s4 + $0xc] sm:$0xf]
  %678 = vrot.lane.b32.xlu0 %v672, 96
  %v679 = vpop.permute.xlu0 %678
  %v684 = vunpack.c.l.b16 %v673
  %v685 = vunpack.c.l.b16 %v674
  %v686 = vunpack.c.l.b16 %v675
  %v687 = vunpack.c.l.b16 %v676
  %v688 = vpack.c.b16 %v685, %v684
  %v689 = vpack.c.b16 %v687, %v686
  %v693 = vsel %vm297, %v679, 0
  %695 = vmatprep.subr.bf16.mxu0 0
  %696 = vmatpush1.bf16.msra.mxu0 0
  %697 = vmatprep.subr.bf16.mxu0 0
  %698 = vmatpush1.bf16.msra.mxu0 0
  %699 = vmatprep.subr.bf16.mxu0 0
  %700 = vmatpush1.bf16.msra.mxu0 0
  %701 = vmatprep.subr.bf16.mxu0 0
  %702 = vmatpush1.bf16.msra.mxu0 0
  %703 = vmatprep.subr.bf16.mxu0 0
  %704 = vmatpush1.bf16.msra.mxu0 0
  %705 = vmatprep.subr.bf16.mxu0 0
  %706 = vmatpush1.bf16.msra.mxu0 0
  %707 = vmatprep.subr.bf16.mxu0 0
  %708 = vmatpush1.bf16.msra.mxu0 %v689
  %709 = vmatprep.subr.bf16.mxu0 0
  %710 = vmatpush1.bf16.msra.mxu0 %v688
  %711 = vmatprep.subr.bf16.mxu0 0
  %712 = vmatpush2.bf16.msra.mxu0 0
  %713 = vmatprep.subr.bf16.mxu0 0
  %714 = vmatpush2.bf16.msra.mxu0 0
  %715 = vmatprep.subr.bf16.mxu0 0
  %716 = vmatpush2.bf16.msra.mxu0 0
  %717 = vmatprep.subr.bf16.mxu0 0
  %718 = vmatpush2.bf16.msra.mxu0 0
  %719 = vmatprep.subr.bf16.mxu0 0
  %720 = vmatpush2.bf16.msra.mxu0 0
  %721 = vmatprep.subr.bf16.mxu0 0
  %722 = vmatpush2.bf16.msra.mxu0 0
  %723 = vmatprep.subr.bf16.mxu0 0
  %724 = vmatpush2.bf16.msra.mxu0 0
  %725 = vmatprep.subr.bf16.mxu0 0
  %726 = vmatpush2.bf16.msra.mxu0 0
  %727 = vmatprep.mubr.bf16.mxu0 0
  %728 = vmatmul.mubr.bf16.gmra.mxu0 %v693
  %v729 = vpop.f32.mrf.mxu0
  %v730 = vadd.f32 0.0, %v729
  %v731 = vpop.f32.mrf.mxu0
  %v732 = vpop.f32.mrf.mxu0
  %v733 = vpop.f32.mrf.mxu0
  %734 = vdwg.mxu0
  %v735 = vadd.f32 %v671, %v730
  %v736 = vxor.u32 %v735, 2147483648
  %v737 = vmul.f32 %v736, 1.442695
  %v738 = vpow.pop %v737
  %v739 = vadd.f32 %v738, 1.0
  %v740 = vrcp.pop %v739
  %v741 = vmul.f32 1.0, %v740
  %v742 = vadd.f32 %v730, %v349
  %744 = vrot.lane.b32.xlu0 %v742, 64
  %v745 = vpop.permute.xlu0 %744
  %v747 = vmul.f32 %v741, %v745
  %749 = vrot.lane.b32.xlu0 %v747, 64
  %v750 = vpop.permute.xlu0 %749
  %v752 = vadd.f32 %v671, %v750
  %v753 = vtanh.pop %v752
  %v754 = vsub.f32 1.0, %v741
  %756 = vrot.lane.b32.xlu0 %v753, 96
  %v757 = vpop.permute.xlu0 %756
  %v759 = vmul.f32 %v754, %v757
  %v760 = vmul.f32 %v741, %v663
  %v761 = vadd.f32 %v759, %v760
  %763 = vrot.lane.b32.xlu0 %v761, 96
  %v764 = vpop.permute.xlu0 %763
  %s766 = scalar_lea.vmem [#allocation3], 32
  %767 = vst.msk [vmem:[%s766] sm:$0xff] %vm297, %v764
  %s768 = scalar_lea.vmem [#allocation2], 40
  %v769 = vld [vmem:[%s768] sm:$0xff]
  %v770 = vpack.c.bf16 %v761, %v761
  %v771 = vld [vmem:[%s4] sm:$0xf]
  %v772 = vld [vmem:[%s4 + $0x4] sm:$0xf]
  %v773 = vld [vmem:[%s4 + $0x8] sm:$0xf]
  %v774 = vld [vmem:[%s4 + $0xc] sm:$0xf]
  %776 = vrot.lane.b32.xlu0 %v770, 96
  %v777 = vpop.permute.xlu0 %776
  %v782 = vunpack.c.l.b16 %v771
  %v783 = vunpack.c.l.b16 %v772
  %v784 = vunpack.c.l.b16 %v773
  %v785 = vunpack.c.l.b16 %v774
  %v786 = vpack.c.b16 %v783, %v782
  %v787 = vpack.c.b16 %v785, %v784
  %v791 = vsel %vm297, %v777, 0
  %793 = vmatprep.subr.bf16.mxu0 0
  %794 = vmatpush1.bf16.msra.mxu0 0
  %795 = vmatprep.subr.bf16.mxu0 0
  %796 = vmatpush1.bf16.msra.mxu0 0
  %797 = vmatprep.subr.bf16.mxu0 0
  %798 = vmatpush1.bf16.msra.mxu0 0
  %799 = vmatprep.subr.bf16.mxu0 0
  %800 = vmatpush1.bf16.msra.mxu0 0
  %801 = vmatprep.subr.bf16.mxu0 0
  %802 = vmatpush1.bf16.msra.mxu0 0
  %803 = vmatprep.subr.bf16.mxu0 0
  %804 = vmatpush1.bf16.msra.mxu0 0
  %805 = vmatprep.subr.bf16.mxu0 0
  %806 = vmatpush1.bf16.msra.mxu0 %v787
  %807 = vmatprep.subr.bf16.mxu0 0
  %808 = vmatpush1.bf16.msra.mxu0 %v786
  %809 = vmatprep.subr.bf16.mxu0 0
  %810 = vmatpush2.bf16.msra.mxu0 0
  %811 = vmatprep.subr.bf16.mxu0 0
  %812 = vmatpush2.bf16.msra.mxu0 0
  %813 = vmatprep.subr.bf16.mxu0 0
  %814 = vmatpush2.bf16.msra.mxu0 0
  %815 = vmatprep.subr.bf16.mxu0 0
  %816 = vmatpush2.bf16.msra.mxu0 0
  %817 = vmatprep.subr.bf16.mxu0 0
  %818 = vmatpush2.bf16.msra.mxu0 0
  %819 = vmatprep.subr.bf16.mxu0 0
  %820 = vmatpush2.bf16.msra.mxu0 0
  %821 = vmatprep.subr.bf16.mxu0 0
  %822 = vmatpush2.bf16.msra.mxu0 0
  %823 = vmatprep.subr.bf16.mxu0 0
  %824 = vmatpush2.bf16.msra.mxu0 0
  %825 = vmatprep.mubr.bf16.mxu0 0
  %826 = vmatmul.mubr.bf16.gmra.mxu0 %v791
  %v827 = vpop.f32.mrf.mxu0
  %v828 = vadd.f32 0.0, %v827
  %v829 = vpop.f32.mrf.mxu0
  %v830 = vpop.f32.mrf.mxu0
  %v831 = vpop.f32.mrf.mxu0
  %832 = vdwg.mxu0
  %v833 = vadd.f32 %v769, %v828
  %v834 = vxor.u32 %v833, 2147483648
  %v835 = vmul.f32 %v834, 1.442695
  %v836 = vpow.pop %v835
  %v837 = vadd.f32 %v836, 1.0
  %v838 = vrcp.pop %v837
  %v839 = vmul.f32 1.0, %v838
  %v840 = vadd.f32 %v828, %v349
  %842 = vrot.lane.b32.xlu0 %v840, 64
  %v843 = vpop.permute.xlu0 %842
  %v845 = vmul.f32 %v839, %v843
  %847 = vrot.lane.b32.xlu0 %v845, 64
  %v848 = vpop.permute.xlu0 %847
  %v850 = vadd.f32 %v769, %v848
  %v851 = vtanh.pop %v850
  %v852 = vsub.f32 1.0, %v839
  %854 = vrot.lane.b32.xlu0 %v851, 96
  %v855 = vpop.permute.xlu0 %854
  %v857 = vmul.f32 %v852, %v855
  %v858 = vmul.f32 %v839, %v761
  %v859 = vadd.f32 %v857, %v858
  %861 = vrot.lane.b32.xlu0 %v859, 96
  %v862 = vpop.permute.xlu0 %861
  %s864 = scalar_lea.vmem [#allocation3], 40
  %865 = vst.msk [vmem:[%s864] sm:$0xff] %vm297, %v862
  %s866 = scalar_lea.vmem [#allocation2], 48
  %v867 = vld [vmem:[%s866] sm:$0xff]
  %v868 = vpack.c.bf16 %v859, %v859
  %v869 = vld [vmem:[%s4] sm:$0xf]
  %v870 = vld [vmem:[%s4 + $0x4] sm:$0xf]
  %v871 = vld [vmem:[%s4 + $0x8] sm:$0xf]
  %v872 = vld [vmem:[%s4 + $0xc] sm:$0xf]
  %874 = vrot.lane.b32.xlu0 %v868, 96
  %v875 = vpop.permute.xlu0 %874
  %v880 = vunpack.c.l.b16 %v869
  %v881 = vunpack.c.l.b16 %v870
  %v882 = vunpack.c.l.b16 %v871
  %v883 = vunpack.c.l.b16 %v872
  %v884 = vpack.c.b16 %v881, %v880
  %v885 = vpack.c.b16 %v883, %v882
  %v889 = vsel %vm297, %v875, 0
  %891 = vmatprep.subr.bf16.mxu0 0
  %892 = vmatpush1.bf16.msra.mxu0 0
  %893 = vmatprep.subr.bf16.mxu0 0
  %894 = vmatpush1.bf16.msra.mxu0 0
  %895 = vmatprep.subr.bf16.mxu0 0
  %896 = vmatpush1.bf16.msra.mxu0 0
  %897 = vmatprep.subr.bf16.mxu0 0
  %898 = vmatpush1.bf16.msra.mxu0 0
  %899 = vmatprep.subr.bf16.mxu0 0
  %900 = vmatpush1.bf16.msra.mxu0 0
  %901 = vmatprep.subr.bf16.mxu0 0
  %902 = vmatpush1.bf16.msra.mxu0 0
  %903 = vmatprep.subr.bf16.mxu0 0
  %904 = vmatpush1.bf16.msra.mxu0 %v885
  %905 = vmatprep.subr.bf16.mxu0 0
  %906 = vmatpush1.bf16.msra.mxu0 %v884
  %907 = vmatprep.subr.bf16.mxu0 0
  %908 = vmatpush2.bf16.msra.mxu0 0
  %909 = vmatprep.subr.bf16.mxu0 0
  %910 = vmatpush2.bf16.msra.mxu0 0
  %911 = vmatprep.subr.bf16.mxu0 0
  %912 = vmatpush2.bf16.msra.mxu0 0
  %913 = vmatprep.subr.bf16.mxu0 0
  %914 = vmatpush2.bf16.msra.mxu0 0
  %915 = vmatprep.subr.bf16.mxu0 0
  %916 = vmatpush2.bf16.msra.mxu0 0
  %917 = vmatprep.subr.bf16.mxu0 0
  %918 = vmatpush2.bf16.msra.mxu0 0
  %919 = vmatprep.subr.bf16.mxu0 0
  %920 = vmatpush2.bf16.msra.mxu0 0
  %921 = vmatprep.subr.bf16.mxu0 0
  %922 = vmatpush2.bf16.msra.mxu0 0
  %923 = vmatprep.mubr.bf16.mxu0 0
  %924 = vmatmul.mubr.bf16.gmra.mxu0 %v889
  %v925 = vpop.f32.mrf.mxu0
  %v926 = vadd.f32 0.0, %v925
  %v927 = vpop.f32.mrf.mxu0
  %v928 = vpop.f32.mrf.mxu0
  %v929 = vpop.f32.mrf.mxu0
  %930 = vdwg.mxu0
  %v931 = vadd.f32 %v867, %v926
  %v932 = vxor.u32 %v931, 2147483648
  %v933 = vmul.f32 %v932, 1.442695
  %v934 = vpow.pop %v933
  %v935 = vadd.f32 %v934, 1.0
  %v936 = vrcp.pop %v935
  %v937 = vmul.f32 1.0, %v936
  %v938 = vadd.f32 %v926, %v349
  %940 = vrot.lane.b32.xlu0 %v938, 64
  %v941 = vpop.permute.xlu0 %940
  %v943 = vmul.f32 %v937, %v941
  %945 = vrot.lane.b32.xlu0 %v943, 64
  %v946 = vpop.permute.xlu0 %945
  %v948 = vadd.f32 %v867, %v946
  %v949 = vtanh.pop %v948
  %v950 = vsub.f32 1.0, %v937
  %952 = vrot.lane.b32.xlu0 %v949, 96
  %v953 = vpop.permute.xlu0 %952
  %v955 = vmul.f32 %v950, %v953
  %v956 = vmul.f32 %v937, %v859
  %v957 = vadd.f32 %v955, %v956
  %959 = vrot.lane.b32.xlu0 %v957, 96
  %v960 = vpop.permute.xlu0 %959
  %s962 = scalar_lea.vmem [#allocation3], 48
  %963 = vst.msk [vmem:[%s962] sm:$0xff] %vm297, %v960
  %s964 = scalar_lea.vmem [#allocation2], 56
  %v965 = vld [vmem:[%s964] sm:$0xff]
  %v966 = vpack.c.bf16 %v957, %v957
  %v967 = vld [vmem:[%s4] sm:$0xf]
  %v968 = vld [vmem:[%s4 + $0x4] sm:$0xf]
  %v969 = vld [vmem:[%s4 + $0x8] sm:$0xf]
  %v970 = vld [vmem:[%s4 + $0xc] sm:$0xf]
  %972 = vrot.lane.b32.xlu0 %v966, 96
  %v973 = vpop.permute.xlu0 %972
  %v978 = vunpack.c.l.b16 %v967
  %v979 = vunpack.c.l.b16 %v968
  %v980 = vunpack.c.l.b16 %v969
  %v981 = vunpack.c.l.b16 %v970
  %v982 = vpack.c.b16 %v979, %v978
  %v983 = vpack.c.b16 %v981, %v980
  %v987 = vsel %vm297, %v973, 0
  %989 = vmatprep.subr.bf16.mxu0 0
  %990 = vmatpush1.bf16.msra.mxu0 0
  %991 = vmatprep.subr.bf16.mxu0 0
  %992 = vmatpush1.bf16.msra.mxu0 0
  %993 = vmatprep.subr.bf16.mxu0 0
  %994 = vmatpush1.bf16.msra.mxu0 0
  %995 = vmatprep.subr.bf16.mxu0 0
  %996 = vmatpush1.bf16.msra.mxu0 0
  %997 = vmatprep.subr.bf16.mxu0 0
  %998 = vmatpush1.bf16.msra.mxu0 0
  %999 = vmatprep.subr.bf16.mxu0 0
  %1000 = vmatpush1.bf16.msra.mxu0 0
  %1001 = vmatprep.subr.bf16.mxu0 0
  %1002 = vmatpush1.bf16.msra.mxu0 %v983
  %1003 = vmatprep.subr.bf16.mxu0 0
  %1004 = vmatpush1.bf16.msra.mxu0 %v982
  %1005 = vmatprep.subr.bf16.mxu0 0
  %1006 = vmatpush2.bf16.msra.mxu0 0
  %1007 = vmatprep.subr.bf16.mxu0 0
  %1008 = vmatpush2.bf16.msra.mxu0 0
  %1009 = vmatprep.subr.bf16.mxu0 0
  %1010 = vmatpush2.bf16.msra.mxu0 0
  %1011 = vmatprep.subr.bf16.mxu0 0
  %1012 = vmatpush2.bf16.msra.mxu0 0
  %1013 = vmatprep.subr.bf16.mxu0 0
  %1014 = vmatpush2.bf16.msra.mxu0 0
  %1015 = vmatprep.subr.bf16.mxu0 0
  %1016 = vmatpush2.bf16.msra.mxu0 0
  %1017 = vmatprep.subr.bf16.mxu0 0
  %1018 = vmatpush2.bf16.msra.mxu0 0
  %1019 = vmatprep.subr.bf16.mxu0 0
  %1020 = vmatpush2.bf16.msra.mxu0 0
  %1021 = vmatprep.mubr.bf16.mxu0 0
  %1022 = vmatmul.mubr.bf16.gmra.mxu0 %v987
  %v1023 = vpop.f32.mrf.mxu0
  %v1024 = vadd.f32 0.0, %v1023
  %v1025 = vpop.f32.mrf.mxu0
  %v1026 = vpop.f32.mrf.mxu0
  %v1027 = vpop.f32.mrf.mxu0
  %1028 = vdwg.mxu0
  %v1029 = vadd.f32 %v965, %v1024
  %v1030 = vxor.u32 %v1029, 2147483648
  %v1031 = vmul.f32 %v1030, 1.442695
  %v1032 = vpow.pop %v1031
  %v1033 = vadd.f32 %v1032, 1.0
  %v1034 = vrcp.pop %v1033
  %v1035 = vmul.f32 1.0, %v1034
  %v1036 = vadd.f32 %v1024, %v349
  %1038 = vrot.lane.b32.xlu0 %v1036, 64
  %v1039 = vpop.permute.xlu0 %1038
  %v1041 = vmul.f32 %v1035, %v1039
  %1043 = vrot.lane.b32.xlu0 %v1041, 64
  %v1044 = vpop.permute.xlu0 %1043
  %v1046 = vadd.f32 %v965, %v1044
  %v1047 = vtanh.pop %v1046
  %v1048 = vsub.f32 1.0, %v1035
  %1050 = vrot.lane.b32.xlu0 %v1047, 96
  %v1051 = vpop.permute.xlu0 %1050
  %v1053 = vmul.f32 %v1048, %v1051
  %v1054 = vmul.f32 %v1035, %v957
  %v1055 = vadd.f32 %v1053, %v1054
  %1057 = vrot.lane.b32.xlu0 %v1055, 96
  %v1058 = vpop.permute.xlu0 %1057
  %s1060 = scalar_lea.vmem [#allocation3], 56
  %1061 = vst.msk [vmem:[%s1060] sm:$0xff] %vm297, %v1058
  %v1062 = vld [vmem:[#allocation3] sm:$0xff]
  %v1063 = vld [vmem:[#allocation3 + $0x8] sm:$0xff]
  %v1064 = vld [vmem:[#allocation3 + $0x10] sm:$0xff]
  %v1065 = vld [vmem:[#allocation3 + $0x18] sm:$0xff]
  %v1066 = vld [vmem:[#allocation3 + $0x20] sm:$0xff]
  %v1067 = vld [vmem:[#allocation3 + $0x28] sm:$0xff]
  %v1068 = vld [vmem:[#allocation3 + $0x30] sm:$0xff]
  %v1069 = vld [vmem:[#allocation3 + $0x38] sm:$0xff]
  %v1070 = vpack.c.bf16 %v1063, %v1062
  %v1071 = vpack.c.bf16 %v1065, %v1064
  %v1072 = vpack.c.bf16 %v1067, %v1066
  %v1073 = vpack.c.bf16 %v1069, %v1068
  %v1074 = vld [vmem:[%s8] sm:$0xf]
  %v1075 = vld [vmem:[%s8 + $0x4] sm:$0xf]
  %v1076 = vld [vmem:[%s8 + $0x8] sm:$0xf]
  %v1077 = vld [vmem:[%s8 + $0xc] sm:$0xf]
  %v1078 = vld [vmem:[%s10] sm:$0x1]
  %v1080 = vlaneseq
  %v1081 = vshrl.u32 %v1080, 7
  %v1082 = vsub.s32 0, %v1081
  %v1083 = vrot.slane %v1078, %v1082
  %v1089 = vunpack.c.l.b16 %v1074
  %v1090 = vunpack.c.l.b16 %v1075
  %v1091 = vunpack.c.l.b16 %v1076
  %v1092 = vunpack.c.l.b16 %v1077
  %v1093 = vpack.c.b16 %v1090, %v1089
  %v1094 = vpack.c.b16 %v1092, %v1091
  %v1098 = vsel %vm297, %v1070, 0
  %v1101 = vsel %vm297, %v1071, 0
  %v1104 = vsel %vm297, %v1072, 0
  %v1107 = vsel %vm297, %v1073, 0
  %1109 = vmatprep.subr.bf16.mxu0 0
  %1110 = vmatpush1.bf16.msra.mxu0 0
  %1111 = vmatprep.subr.bf16.mxu0 0
  %1112 = vmatpush1.bf16.msra.mxu0 0
  %1113 = vmatprep.subr.bf16.mxu0 0
  %1114 = vmatpush1.bf16.msra.mxu0 0
  %1115 = vmatprep.subr.bf16.mxu0 0
  %1116 = vmatpush1.bf16.msra.mxu0 0
  %1117 = vmatprep.subr.bf16.mxu0 0
  %1118 = vmatpush1.bf16.msra.mxu0 0
  %1119 = vmatprep.subr.bf16.mxu0 0
  %1120 = vmatpush1.bf16.msra.mxu0 0
  %1121 = vmatprep.subr.bf16.mxu0 0
  %1122 = vmatpush1.bf16.msra.mxu0 %v1094
  %1123 = vmatprep.subr.bf16.mxu0 0
  %1124 = vmatpush1.bf16.msra.mxu0 %v1093
  %1125 = vmatprep.subr.bf16.mxu0 0
  %1126 = vmatpush2.bf16.msra.mxu0 0
  %1127 = vmatprep.subr.bf16.mxu0 0
  %1128 = vmatpush2.bf16.msra.mxu0 0
  %1129 = vmatprep.subr.bf16.mxu0 0
  %1130 = vmatpush2.bf16.msra.mxu0 0
  %1131 = vmatprep.subr.bf16.mxu0 0
  %1132 = vmatpush2.bf16.msra.mxu0 0
  %1133 = vmatprep.subr.bf16.mxu0 0
  %1134 = vmatpush2.bf16.msra.mxu0 0
  %1135 = vmatprep.subr.bf16.mxu0 0
  %1136 = vmatpush2.bf16.msra.mxu0 0
  %1137 = vmatprep.subr.bf16.mxu0 0
  %1138 = vmatpush2.bf16.msra.mxu0 0
  %1139 = vmatprep.subr.bf16.mxu0 0
  %1140 = vmatpush2.bf16.msra.mxu0 0
  %1141 = vmatprep.mubr.bf16.mxu0 0
  %1142 = vmatmul.mubr.bf16.gmra.mxu0 %v1098
  %v1143 = vpop.f32.mrf.mxu0
  %v1144 = vadd.f32 %v1083, %v1143
  %v1145 = vpop.f32.mrf.mxu0
  %v1146 = vpop.f32.mrf.mxu0
  %v1147 = vadd.f32 %v1083, %v1146
  %v1148 = vpop.f32.mrf.mxu0
  %1149 = vmatprep.mubr.bf16.mxu0 0
  %1150 = vmatmul.mubr.bf16.gmra.mxu0 %v1101
  %v1151 = vpop.f32.mrf.mxu0
  %v1152 = vadd.f32 %v1083, %v1151
  %v1153 = vpop.f32.mrf.mxu0
  %v1154 = vpop.f32.mrf.mxu0
  %v1155 = vadd.f32 %v1083, %v1154
  %v1156 = vpop.f32.mrf.mxu0
  %1157 = vmatprep.mubr.bf16.mxu0 0
  %1158 = vmatmul.mubr.bf16.gmra.mxu0 %v1104
  %v1159 = vpop.f32.mrf.mxu0
  %v1160 = vadd.f32 %v1083, %v1159
  %v1161 = vpop.f32.mrf.mxu0
  %v1162 = vpop.f32.mrf.mxu0
  %v1163 = vadd.f32 %v1083, %v1162
  %v1164 = vpop.f32.mrf.mxu0
  %1165 = vmatprep.mubr.bf16.mxu0 0
  %1166 = vmatmul.mubr.bf16.gmra.mxu0 %v1107
  %v1167 = vpop.f32.mrf.mxu0
  %v1168 = vadd.f32 %v1083, %v1167
  %v1169 = vpop.f32.mrf.mxu0
  %v1170 = vpop.f32.mrf.mxu0
  %v1171 = vadd.f32 %v1083, %v1170
  %v1172 = vpop.f32.mrf.mxu0
  %1173 = vdwg.mxu0
  %1174 = vst.msk [vmem:[#allocation5] sm:$0xff] %vm160, %v1144
  %1175 = vst.msk [vmem:[#allocation5 + $0x8] sm:$0xff] %vm160, %v1147
  %1176 = vst.msk [vmem:[#allocation5 + $0x10] sm:$0xff] %vm160, %v1152
  %1177 = vst.msk [vmem:[#allocation5 + $0x18] sm:$0xff] %vm160, %v1155
  %1178 = vst.msk [vmem:[#allocation5 + $0x20] sm:$0xff] %vm160, %v1160
  %1179 = vst.msk [vmem:[#allocation5 + $0x28] sm:$0xff] %vm160, %v1163
  %1180 = vst.msk [vmem:[#allocation5 + $0x30] sm:$0xff] %vm160, %v1168
  %1181 = vst.msk [vmem:[#allocation5 + $0x38] sm:$0xff] %vm160, %v1171
  %v1182 = vld [vmem:[%s11] sm:$0x1]
  %v1184 = vlaneseq
  %v1185 = vshrl.u32 %v1184, 7
  %v1186 = vsub.s32 0, %v1185
  %v1187 = vrot.slane %v1182, %v1186
  %v1188 = vld [vmem:[%s14] sm:$0x1]
  %v1190 = vlaneseq
  %v1191 = vshrl.u32 %v1190, 7
  %v1192 = vsub.s32 0, %v1191
  %v1193 = vrot.slane %v1188, %v1192
  %v1195 = vlaneseq
  %v1196 = vand.u32 %v1195, 127
  %1197 = vst [vmem:[%s15] sm:$0xff] 0.0
  %v1198 = vld [vmem:[#allocation4] sm:$0xff]
  %s1199 = scalar_lea.vmem [#allocation5], 8
  %v1200 = vld [vmem:[%s1199] sm:$0xff]
  %v1201 = vadd.f32 %v1198, %v1200
  %v1202 = vpack.c.bf16 %v1055, %v1055
  %v1203 = vld [vmem:[%s9] sm:$0xf]
  %v1204 = vld [vmem:[%s9 + $0x4] sm:$0xf]
  %v1205 = vld [vmem:[%s9 + $0x8] sm:$0xf]
  %v1206 = vld [vmem:[%s9 + $0xc] sm:$0xf]
  %1208 = vrot.lane.b32.xlu0 %v1202, 96
  %v1209 = vpop.permute.xlu0 %1208
  %v1214 = vunpack.c.l.b16 %v1203
  %v1215 = vunpack.c.l.b16 %v1204
  %v1216 = vunpack.c.l.b16 %v1205
  %v1217 = vunpack.c.l.b16 %v1206
  %v1218 = vpack.c.b16 %v1215, %v1214
  %v1219 = vpack.c.b16 %v1217, %v1216
  %v1223 = vsel %vm297, %v1209, 0
  %1225 = vmatprep.subr.bf16.mxu0 0
  %1226 = vmatpush1.bf16.msra.mxu0 0
  %1227 = vmatprep.subr.bf16.mxu0 0
  %1228 = vmatpush1.bf16.msra.mxu0 0
  %1229 = vmatprep.subr.bf16.mxu0 0
  %1230 = vmatpush1.bf16.msra.mxu0 0
  %1231 = vmatprep.subr.bf16.mxu0 0
  %1232 = vmatpush1.bf16.msra.mxu0 0
  %1233 = vmatprep.subr.bf16.mxu0 0
  %1234 = vmatpush1.bf16.msra.mxu0 0
  %1235 = vmatprep.subr.bf16.mxu0 0
  %1236 = vmatpush1.bf16.msra.mxu0 0
  %1237 = vmatprep.subr.bf16.mxu0 0
  %1238 = vmatpush1.bf16.msra.mxu0 %v1219
  %1239 = vmatprep.subr.bf16.mxu0 0
  %1240 = vmatpush1.bf16.msra.mxu0 %v1218
  %1241 = vmatprep.subr.bf16.mxu0 0
  %1242 = vmatpush2.bf16.msra.mxu0 0
  %1243 = vmatprep.subr.bf16.mxu0 0
  %1244 = vmatpush2.bf16.msra.mxu0 0
  %1245 = vmatprep.subr.bf16.mxu0 0
  %1246 = vmatpush2.bf16.msra.mxu0 0
  %1247 = vmatprep.subr.bf16.mxu0 0
  %1248 = vmatpush2.bf16.msra.mxu0 0
  %1249 = vmatprep.subr.bf16.mxu0 0
  %1250 = vmatpush2.bf16.msra.mxu0 0
  %1251 = vmatprep.subr.bf16.mxu0 0
  %1252 = vmatpush2.bf16.msra.mxu0 0
  %1253 = vmatprep.subr.bf16.mxu0 0
  %1254 = vmatpush2.bf16.msra.mxu0 0
  %1255 = vmatprep.subr.bf16.mxu0 0
  %1256 = vmatpush2.bf16.msra.mxu0 0
  %1257 = vmatprep.mubr.bf16.mxu0 0
  %1258 = vmatmul.mubr.bf16.gmra.mxu0 %v1223
  %v1259 = vpop.f32.mrf.mxu0
  %v1260 = vadd.f32 0.0, %v1259
  %v1261 = vpop.f32.mrf.mxu0
  %v1262 = vpop.f32.mrf.mxu0
  %v1263 = vpop.f32.mrf.mxu0
  %1264 = vdwg.mxu0
  %v1265 = vadd.f32 %v1201, %v1260
  %v1266 = vxor.u32 %v1265, 2147483648
  %v1267 = vmul.f32 %v1266, 1.442695
  %v1268 = vpow.pop %v1267
  %v1269 = vadd.f32 %v1268, 1.0
  %v1270 = vrcp.pop %v1269
  %v1271 = vmul.f32 1.0, %v1270
  %1272 = vrot.lane.b32.xlu0 %v1187, 64
  %v1273 = vpop.permute.xlu0 %1272
  %v1275 = vadd.f32 %v1260, %v1273
  %1277 = vrot.lane.b32.xlu0 %v1275, 64
  %v1278 = vpop.permute.xlu0 %1277
  %v1280 = vmul.f32 %v1271, %v1278
  %1282 = vrot.lane.b32.xlu0 %v1280, 64
  %v1283 = vpop.permute.xlu0 %1282
  %v1285 = vadd.f32 %v1201, %v1283
  %v1286 = vtanh.pop %v1285
  %v1287 = vsub.f32 1.0, %v1271
  %1289 = vrot.lane.b32.xlu0 %v1286, 96
  %v1290 = vpop.permute.xlu0 %1289
  %v1292 = vmul.f32 %v1287, %v1290
  %v1293 = vmul.f32 %v1271, %v1055
  %v1294 = vadd.f32 %v1292, %v1293
  %v1295 = vpack.c.bf16 %v1294, %v1294
  %v1296 = vld [vmem:[%s13] sm:$0xf]
  %v1297 = vld [vmem:[%s13 + $0x4] sm:$0xf]
  %v1298 = vld [vmem:[%s13 + $0x8] sm:$0xf]
  %v1299 = vld [vmem:[%s13 + $0xc] sm:$0xf]
  %1301 = vrot.lane.b32.xlu0 %v1295, 96
  %v1302 = vpop.permute.xlu0 %1301
  %v1307 = vunpack.c.l.b16 %v1296
  %v1308 = vunpack.c.l.b16 %v1297
  %v1309 = vunpack.c.l.b16 %v1298
  %v1310 = vunpack.c.l.b16 %v1299
  %v1311 = vpack.c.b16 %v1308, %v1307
  %v1312 = vpack.c.b16 %v1310, %v1309
  %v1316 = vsel %vm297, %v1302, 0
  %1318 = vmatprep.subr.bf16.mxu0 0
  %1319 = vmatpush1.bf16.msra.mxu0 0
  %1320 = vmatprep.subr.bf16.mxu0 0
  %1321 = vmatpush1.bf16.msra.mxu0 0
  %1322 = vmatprep.subr.bf16.mxu0 0
  %1323 = vmatpush1.bf16.msra.mxu0 0
  %1324 = vmatprep.subr.bf16.mxu0 0
  %1325 = vmatpush1.bf16.msra.mxu0 0
  %1326 = vmatprep.subr.bf16.mxu0 0
  %1327 = vmatpush1.bf16.msra.mxu0 0
  %1328 = vmatprep.subr.bf16.mxu0 0
  %1329 = vmatpush1.bf16.msra.mxu0 0
  %1330 = vmatprep.subr.bf16.mxu0 0
  %1331 = vmatpush1.bf16.msra.mxu0 %v1312
  %1332 = vmatprep.subr.bf16.mxu0 0
  %1333 = vmatpush1.bf16.msra.mxu0 %v1311
  %1334 = vmatprep.subr.bf16.mxu0 0
  %1335 = vmatpush2.bf16.msra.mxu0 0
  %1336 = vmatprep.subr.bf16.mxu0 0
  %1337 = vmatpush2.bf16.msra.mxu0 0
  %1338 = vmatprep.subr.bf16.mxu0 0
  %1339 = vmatpush2.bf16.msra.mxu0 0
  %1340 = vmatprep.subr.bf16.mxu0 0
  %1341 = vmatpush2.bf16.msra.mxu0 0
  %1342 = vmatprep.subr.bf16.mxu0 0
  %1343 = vmatpush2.bf16.msra.mxu0 0
  %1344 = vmatprep.subr.bf16.mxu0 0
  %1345 = vmatpush2.bf16.msra.mxu0 0
  %1346 = vmatprep.subr.bf16.mxu0 0
  %1347 = vmatpush2.bf16.msra.mxu0 0
  %1348 = vmatprep.subr.bf16.mxu0 0
  %1349 = vmatpush2.bf16.msra.mxu0 0
  %1350 = vmatprep.mubr.bf16.mxu0 0
  %1351 = vmatmul.mubr.bf16.gmra.mxu0 %v1316
  %v1352 = vpop.f32.mrf.mxu0
  %v1353 = vadd.f32 %v1193, %v1352
  %v1354 = vpop.f32.mrf.mxu0
  %v1355 = vpop.f32.mrf.mxu0
  %v1356 = vpop.f32.mrf.mxu0
  %1357 = vdwg.mxu0
  %s1358 = scalar_lea.vmem %s15, 8
  %1359 = vst [vmem:[%s1358] sm:$0xff] %v1353
  %1360 = vmax.xlane.f32.xlu0 %v1353
  %v1361 = vpop.xlane.xlu0 %1360
  %vm1362 = vcmp.eq.f32.partialorder %v1353, %v1361
  %v1363 = vsel %vm1362, %v1196, 128
  %v1364 = vand.u32 %v1363, 65535
  %v1365 = vshra.s32 %v1363, 16
  %v1366 = vcvt.s32.f32 %v1364
  %v1367 = vcvt.s32.f32 %v1365
  %1368 = vmin.xlane.f32.xlu0 %v1367
  %v1369 = vpop.xlane.xlu0 %1368
  %vm1370 = vcmp.eq.f32.partialorder %v1367, %v1369
  %v1371 = vsel %vm1370, %v1366, inf
  %1372 = vmin.xlane.f32.xlu0 %v1371
  %v1373 = vpop.xlane.xlu0 %1372
  %v1374 = vcvt.f32.s32 %v1373
  %v1375 = vcvt.f32.s32 %v1369
  %v1376 = vshll.u32 %v1375, 16
  %v1377 = vadd.s32 %v1376, %v1374
  %vm1378 = vcmp.eq.s32.totalorder %v1196, %v1377
  %v1379 = vsel %vm1378, 1, 0
  %v1380 = vcvt.s32.f32 %v1379
  %v1381 = vpack.c.bf16 %v1380, %v1380
  %v1382 = vld [vmem:[%s12] sm:$0xf]
  %v1383 = vld [vmem:[%s12 + $0x4] sm:$0xf]
  %v1384 = vld [vmem:[%s12 + $0x8] sm:$0xf]
  %v1385 = vld [vmem:[%s12 + $0xc] sm:$0xf]
  %v1386 = vld [vmem:[%s12 + $0x10] sm:$0xf]
  %v1387 = vld [vmem:[%s12 + $0x14] sm:$0xf]
  %v1388 = vld [vmem:[%s12 + $0x18] sm:$0xf]
  %v1389 = vld [vmem:[%s12 + $0x1c] sm:$0xf]
  %v1390 = vld [vmem:[%s12 + $0x20] sm:$0xf]
  %v1391 = vld [vmem:[%s12 + $0x24] sm:$0xf]
  %v1392 = vld [vmem:[%s12 + $0x28] sm:$0xf]
  %v1393 = vld [vmem:[%s12 + $0x2c] sm:$0xf]
  %v1394 = vld [vmem:[%s12 + $0x30] sm:$0xf]
  %v1395 = vld [vmem:[%s12 + $0x34] sm:$0xf]
  %v1396 = vld [vmem:[%s12 + $0x38] sm:$0xf]
  %v1397 = vld [vmem:[%s12 + $0x3c] sm:$0xf]
  %v1414 = vunpack.c.l.b16 %v1382
  %v1415 = vunpack.c.l.b16 %v1383
  %v1416 = vunpack.c.l.b16 %v1384
  %v1417 = vunpack.c.l.b16 %v1385
  %v1418 = vunpack.c.l.b16 %v1386
  %v1419 = vunpack.c.l.b16 %v1387
  %v1420 = vunpack.c.l.b16 %v1388
  %v1421 = vunpack.c.l.b16 %v1389
  %v1422 = vunpack.c.l.b16 %v1390
  %v1423 = vunpack.c.l.b16 %v1391
  %v1424 = vunpack.c.l.b16 %v1392
  %v1425 = vunpack.c.l.b16 %v1393
  %v1426 = vunpack.c.l.b16 %v1394
  %v1427 = vunpack.c.l.b16 %v1395
  %v1428 = vunpack.c.l.b16 %v1396
  %v1429 = vunpack.c.l.b16 %v1397
  %v1430 = vpack.c.b16 %v1415, %v1414
  %v1431 = vpack.c.b16 %v1417, %v1416
  %v1432 = vpack.c.b16 %v1419, %v1418
  %v1433 = vpack.c.b16 %v1421, %v1420
  %v1434 = vpack.c.b16 %v1423, %v1422
  %v1435 = vpack.c.b16 %v1425, %v1424
  %v1436 = vpack.c.b16 %v1427, %v1426
  %v1437 = vpack.c.b16 %v1429, %v1428
  %1446 = vmatprep.subr.bf16.mxu0 0
  %1447 = vmatpush1.bf16.msra.mxu0 %v1437
  %1448 = vmatprep.subr.bf16.mxu0 0
  %1449 = vmatpush1.bf16.msra.mxu0 %v1436
  %1450 = vmatprep.subr.bf16.mxu0 0
  %1451 = vmatpush1.bf16.msra.mxu0 %v1435
  %1452 = vmatprep.subr.bf16.mxu0 0
  %1453 = vmatpush1.bf16.msra.mxu0 %v1434
  %1454 = vmatprep.subr.bf16.mxu0 0
  %1455 = vmatpush1.bf16.msra.mxu0 %v1433
  %1456 = vmatprep.subr.bf16.mxu0 0
  %1457 = vmatpush1.bf16.msra.mxu0 %v1432
  %1458 = vmatprep.subr.bf16.mxu0 0
  %1459 = vmatpush1.bf16.msra.mxu0 %v1431
  %1460 = vmatprep.subr.bf16.mxu0 0
  %1461 = vmatpush1.bf16.msra.mxu0 %v1430
  %1462 = vmatprep.subr.bf16.mxu0 0
  %1463 = vmatpush2.bf16.msra.mxu0 0
  %1464 = vmatprep.subr.bf16.mxu0 0
  %1465 = vmatpush2.bf16.msra.mxu0 0
  %1466 = vmatprep.subr.bf16.mxu0 0
  %1467 = vmatpush2.bf16.msra.mxu0 0
  %1468 = vmatprep.subr.bf16.mxu0 0
  %1469 = vmatpush2.bf16.msra.mxu0 0
  %1470 = vmatprep.subr.bf16.mxu0 0
  %1471 = vmatpush2.bf16.msra.mxu0 0
  %1472 = vmatprep.subr.bf16.mxu0 0
  %1473 = vmatpush2.bf16.msra.mxu0 0
  %1474 = vmatprep.subr.bf16.mxu0 0
  %1475 = vmatpush2.bf16.msra.mxu0 0
  %1476 = vmatprep.subr.bf16.mxu0 0
  %1477 = vmatpush2.bf16.msra.mxu0 0
  %1478 = vmatprep.mubr.bf16.mxu0 0
  %1479 = vmatmul.mubr.bf16.gmra.mxu0 %v1381
  %v1480 = vpop.f32.mrf.mxu0
  %v1481 = vadd.f32 0.0, %v1480
  %v1482 = vpop.f32.mrf.mxu0
  %v1483 = vpop.f32.mrf.mxu0
  %v1484 = vpop.f32.mrf.mxu0
  %1485 = vdwg.mxu0
  %s1486 = scalar_lea.vmem [#allocation4], 8
  %v1487 = vld [vmem:[%s1486] sm:$0xff]
  %s1488 = sld [smem:[#allocation7 + $0x1]]
  %p1489 = scmp.gt.s32.totalorder %s1488, 0
  %s1490 = scalar_select %p1489, 1, 0
  %v1491 = vstv %s1490
  %vm1492 = vcmp.eq.s32.totalorder %v1491, 1
  %v1493 = vsel %vm1492, %v1487, %v1481
  %s1494 = scalar_lea.vmem [#allocation5], 16
  %v1495 = vld [vmem:[%s1494] sm:$0xff]
  %v1496 = vadd.f32 %v1493, %v1495
  %v1497 = vld [vmem:[%s9] sm:$0xf]
  %v1498 = vld [vmem:[%s9 + $0x4] sm:$0xf]
  %v1499 = vld [vmem:[%s9 + $0x8] sm:$0xf]
  %v1500 = vld [vmem:[%s9 + $0xc] sm:$0xf]
  %v1505 = vunpack.c.l.b16 %v1497
  %v1506 = vunpack.c.l.b16 %v1498
  %v1507 = vunpack.c.l.b16 %v1499
  %v1508 = vunpack.c.l.b16 %v1500
  %v1509 = vpack.c.b16 %v1506, %v1505
  %v1510 = vpack.c.b16 %v1508, %v1507
  %1513 = vmatprep.subr.bf16.mxu0 0
  %1514 = vmatpush1.bf16.msra.mxu0 0
  %1515 = vmatprep.subr.bf16.mxu0 0
  %1516 = vmatpush1.bf16.msra.mxu0 0
  %1517 = vmatprep.subr.bf16.mxu0 0
  %1518 = vmatpush1.bf16.msra.mxu0 0
  %1519 = vmatprep.subr.bf16.mxu0 0
  %1520 = vmatpush1.bf16.msra.mxu0 0
  %1521 = vmatprep.subr.bf16.mxu0 0
  %1522 = vmatpush1.bf16.msra.mxu0 0
  %1523 = vmatprep.subr.bf16.mxu0 0
  %1524 = vmatpush1.bf16.msra.mxu0 0
  %1525 = vmatprep.subr.bf16.mxu0 0
  %1526 = vmatpush1.bf16.msra.mxu0 %v1510
  %1527 = vmatprep.subr.bf16.mxu0 0
  %1528 = vmatpush1.bf16.msra.mxu0 %v1509
  %1529 = vmatprep.subr.bf16.mxu0 0
  %1530 = vmatpush2.bf16.msra.mxu0 0
  %1531 = vmatprep.subr.bf16.mxu0 0
  %1532 = vmatpush2.bf16.msra.mxu0 0
  %1533 = vmatprep.subr.bf16.mxu0 0
  %1534 = vmatpush2.bf16.msra.mxu0 0
  %1535 = vmatprep.subr.bf16.mxu0 0
  %1536 = vmatpush2.bf16.msra.mxu0 0
  %1537 = vmatprep.subr.bf16.mxu0 0
  %1538 = vmatpush2.bf16.msra.mxu0 0
  %1539 = vmatprep.subr.bf16.mxu0 0
  %1540 = vmatpush2.bf16.msra.mxu0 0
  %1541 = vmatprep.subr.bf16.mxu0 0
  %1542 = vmatpush2.bf16.msra.mxu0 0
  %1543 = vmatprep.subr.bf16.mxu0 0
  %1544 = vmatpush2.bf16.msra.mxu0 0
  %1545 = vmatprep.mubr.bf16.mxu0 0
  %1546 = vmatmul.mubr.bf16.gmra.mxu0 %v1316
  %v1547 = vpop.f32.mrf.mxu0
  %v1548 = vadd.f32 0.0, %v1547
  %v1549 = vpop.f32.mrf.mxu0
  %v1550 = vpop.f32.mrf.mxu0
  %v1551 = vpop.f32.mrf.mxu0
  %1552 = vdwg.mxu0
  %v1553 = vadd.f32 %v1496, %v1548
  %v1554 = vxor.u32 %v1553, 2147483648
  %v1555 = vmul.f32 %v1554, 1.442695
  %v1556 = vpow.pop %v1555
  %v1557 = vadd.f32 %v1556, 1.0
  %v1558 = vrcp.pop %v1557
  %v1559 = vmul.f32 1.0, %v1558
  %v1560 = vadd.f32 %v1548, %v1273
  %1562 = vrot.lane.b32.xlu0 %v1560, 64
  %v1563 = vpop.permute.xlu0 %1562
  %v1565 = vmul.f32 %v1559, %v1563
  %1567 = vrot.lane.b32.xlu0 %v1565, 64
  %v1568 = vpop.permute.xlu0 %1567
  %v1570 = vadd.f32 %v1496, %v1568
  %v1571 = vtanh.pop %v1570
  %v1572 = vsub.f32 1.0, %v1559
  %1574 = vrot.lane.b32.xlu0 %v1571, 96
  %v1575 = vpop.permute.xlu0 %1574
  %v1577 = vmul.f32 %v1572, %v1575
  %v1578 = vmul.f32 %v1559, %v1294
  %v1579 = vadd.f32 %v1577, %v1578
  %v1580 = vpack.c.bf16 %v1579, %v1579
  %v1581 = vld [vmem:[%s13] sm:$0xf]
  %v1582 = vld [vmem:[%s13 + $0x4] sm:$0xf]
  %v1583 = vld [vmem:[%s13 + $0x8] sm:$0xf]
  %v1584 = vld [vmem:[%s13 + $0xc] sm:$0xf]
  %1586 = vrot.lane.b32.xlu0 %v1580, 96
  %v1587 = vpop.permute.xlu0 %1586
  %v1592 = vunpack.c.l.b16 %v1581
  %v1593 = vunpack.c.l.b16 %v1582
  %v1594 = vunpack.c.l.b16 %v1583
  %v1595 = vunpack.c.l.b16 %v1584
  %v1596 = vpack.c.b16 %v1593, %v1592
  %v1597 = vpack.c.b16 %v1595, %v1594
  %v1601 = vsel %vm297, %v1587, 0
  %1603 = vmatprep.subr.bf16.mxu0 0
  %1604 = vmatpush1.bf16.msra.mxu0 0
  %1605 = vmatprep.subr.bf16.mxu0 0
  %1606 = vmatpush1.bf16.msra.mxu0 0
  %1607 = vmatprep.subr.bf16.mxu0 0
  %1608 = vmatpush1.bf16.msra.mxu0 0
  %1609 = vmatprep.subr.bf16.mxu0 0
  %1610 = vmatpush1.bf16.msra.mxu0 0
  %1611 = vmatprep.subr.bf16.mxu0 0
  %1612 = vmatpush1.bf16.msra.mxu0 0
  %1613 = vmatprep.subr.bf16.mxu0 0
  %1614 = vmatpush1.bf16.msra.mxu0 0
  %1615 = vmatprep.subr.bf16.mxu0 0
  %1616 = vmatpush1.bf16.msra.mxu0 %v1597
  %1617 = vmatprep.subr.bf16.mxu0 0
  %1618 = vmatpush1.bf16.msra.mxu0 %v1596
  %1619 = vmatprep.subr.bf16.mxu0 0
  %1620 = vmatpush2.bf16.msra.mxu0 0
  %1621 = vmatprep.subr.bf16.mxu0 0
  %1622 = vmatpush2.bf16.msra.mxu0 0
  %1623 = vmatprep.subr.bf16.mxu0 0
  %1624 = vmatpush2.bf16.msra.mxu0 0
  %1625 = vmatprep.subr.bf16.mxu0 0
  %1626 = vmatpush2.bf16.msra.mxu0 0
  %1627 = vmatprep.subr.bf16.mxu0 0
  %1628 = vmatpush2.bf16.msra.mxu0 0
  %1629 = vmatprep.subr.bf16.mxu0 0
  %1630 = vmatpush2.bf16.msra.mxu0 0
  %1631 = vmatprep.subr.bf16.mxu0 0
  %1632 = vmatpush2.bf16.msra.mxu0 0
  %1633 = vmatprep.subr.bf16.mxu0 0
  %1634 = vmatpush2.bf16.msra.mxu0 0
  %1635 = vmatprep.mubr.bf16.mxu0 0
  %1636 = vmatmul.mubr.bf16.gmra.mxu0 %v1601
  %v1637 = vpop.f32.mrf.mxu0
  %v1638 = vadd.f32 %v1193, %v1637
  %v1639 = vpop.f32.mrf.mxu0
  %v1640 = vpop.f32.mrf.mxu0
  %v1641 = vpop.f32.mrf.mxu0
  %1642 = vdwg.mxu0
  %s1643 = scalar_lea.vmem %s15, 16
  %1644 = vst [vmem:[%s1643] sm:$0xff] %v1638
  %1645 = vmax.xlane.f32.xlu0 %v1638
  %v1646 = vpop.xlane.xlu0 %1645
  %vm1647 = vcmp.eq.f32.partialorder %v1638, %v1646
  %v1648 = vsel %vm1647, %v1196, 128
  %v1649 = vand.u32 %v1648, 65535
  %v1650 = vshra.s32 %v1648, 16
  %v1651 = vcvt.s32.f32 %v1649
  %v1652 = vcvt.s32.f32 %v1650
  %1653 = vmin.xlane.f32.xlu0 %v1652
  %v1654 = vpop.xlane.xlu0 %1653
  %vm1655 = vcmp.eq.f32.partialorder %v1652, %v1654
  %v1656 = vsel %vm1655, %v1651, inf
  %1657 = vmin.xlane.f32.xlu0 %v1656
  %v1658 = vpop.xlane.xlu0 %1657
  %v1659 = vcvt.f32.s32 %v1658
  %v1660 = vcvt.f32.s32 %v1654
  %v1661 = vshll.u32 %v1660, 16
  %v1662 = vadd.s32 %v1661, %v1659
  %vm1663 = vcmp.eq.s32.totalorder %v1196, %v1662
  %v1664 = vsel %vm1663, 1, 0
  %v1665 = vcvt.s32.f32 %v1664
  %v1666 = vpack.c.bf16 %v1665, %v1665
  %v1667 = vld [vmem:[%s12] sm:$0xf]
  %v1668 = vld [vmem:[%s12 + $0x4] sm:$0xf]
  %v1669 = vld [vmem:[%s12 + $0x8] sm:$0xf]
  %v1670 = vld [vmem:[%s12 + $0xc] sm:$0xf]
  %v1671 = vld [vmem:[%s12 + $0x10] sm:$0xf]
  %v1672 = vld [vmem:[%s12 + $0x14] sm:$0xf]
  %v1673 = vld [vmem:[%s12 + $0x18] sm:$0xf]
  %v1674 = vld [vmem:[%s12 + $0x1c] sm:$0xf]
  %v1675 = vld [vmem:[%s12 + $0x20] sm:$0xf]
  %v1676 = vld [vmem:[%s12 + $0x24] sm:$0xf]
  %v1677 = vld [vmem:[%s12 + $0x28] sm:$0xf]
  %v1678 = vld [vmem:[%s12 + $0x2c] sm:$0xf]
  %v1679 = vld [vmem:[%s12 + $0x30] sm:$0xf]
  %v1680 = vld [vmem:[%s12 + $0x34] sm:$0xf]
  %v1681 = vld [vmem:[%s12 + $0x38] sm:$0xf]
  %v1682 = vld [vmem:[%s12 + $0x3c] sm:$0xf]
  %v1699 = vunpack.c.l.b16 %v1667
  %v1700 = vunpack.c.l.b16 %v1668
  %v1701 = vunpack.c.l.b16 %v1669
  %v1702 = vunpack.c.l.b16 %v1670
  %v1703 = vunpack.c.l.b16 %v1671
  %v1704 = vunpack.c.l.b16 %v1672
  %v1705 = vunpack.c.l.b16 %v1673
  %v1706 = vunpack.c.l.b16 %v1674
  %v1707 = vunpack.c.l.b16 %v1675
  %v1708 = vunpack.c.l.b16 %v1676
  %v1709 = vunpack.c.l.b16 %v1677
  %v1710 = vunpack.c.l.b16 %v1678
  %v1711 = vunpack.c.l.b16 %v1679
  %v1712 = vunpack.c.l.b16 %v1680
  %v1713 = vunpack.c.l.b16 %v1681
  %v1714 = vunpack.c.l.b16 %v1682
  %v1715 = vpack.c.b16 %v1700, %v1699
  %v1716 = vpack.c.b16 %v1702, %v1701
  %v1717 = vpack.c.b16 %v1704, %v1703
  %v1718 = vpack.c.b16 %v1706, %v1705
  %v1719 = vpack.c.b16 %v1708, %v1707
  %v1720 = vpack.c.b16 %v1710, %v1709
  %v1721 = vpack.c.b16 %v1712, %v1711
  %v1722 = vpack.c.b16 %v1714, %v1713
  %1731 = vmatprep.subr.bf16.mxu0 0
  %1732 = vmatpush1.bf16.msra.mxu0 %v1722
  %1733 = vmatprep.subr.bf16.mxu0 0
  %1734 = vmatpush1.bf16.msra.mxu0 %v1721
  %1735 = vmatprep.subr.bf16.mxu0 0
  %1736 = vmatpush1.bf16.msra.mxu0 %v1720
  %1737 = vmatprep.subr.bf16.mxu0 0
  %1738 = vmatpush1.bf16.msra.mxu0 %v1719
  %1739 = vmatprep.subr.bf16.mxu0 0
  %1740 = vmatpush1.bf16.msra.mxu0 %v1718
  %1741 = vmatprep.subr.bf16.mxu0 0
  %1742 = vmatpush1.bf16.msra.mxu0 %v1717
  %1743 = vmatprep.subr.bf16.mxu0 0
  %1744 = vmatpush1.bf16.msra.mxu0 %v1716
  %1745 = vmatprep.subr.bf16.mxu0 0
  %1746 = vmatpush1.bf16.msra.mxu0 %v1715
  %1747 = vmatprep.subr.bf16.mxu0 0
  %1748 = vmatpush2.bf16.msra.mxu0 0
  %1749 = vmatprep.subr.bf16.mxu0 0
  %1750 = vmatpush2.bf16.msra.mxu0 0
  %1751 = vmatprep.subr.bf16.mxu0 0
  %1752 = vmatpush2.bf16.msra.mxu0 0
  %1753 = vmatprep.subr.bf16.mxu0 0
  %1754 = vmatpush2.bf16.msra.mxu0 0
  %1755 = vmatprep.subr.bf16.mxu0 0
  %1756 = vmatpush2.bf16.msra.mxu0 0
  %1757 = vmatprep.subr.bf16.mxu0 0
  %1758 = vmatpush2.bf16.msra.mxu0 0
  %1759 = vmatprep.subr.bf16.mxu0 0
  %1760 = vmatpush2.bf16.msra.mxu0 0
  %1761 = vmatprep.subr.bf16.mxu0 0
  %1762 = vmatpush2.bf16.msra.mxu0 0
  %1763 = vmatprep.mubr.bf16.mxu0 0
  %1764 = vmatmul.mubr.bf16.gmra.mxu0 %v1666
  %v1765 = vpop.f32.mrf.mxu0
  %v1766 = vadd.f32 0.0, %v1765
  %v1767 = vpop.f32.mrf.mxu0
  %v1768 = vpop.f32.mrf.mxu0
  %v1769 = vpop.f32.mrf.mxu0
  %1770 = vdwg.mxu0
  %s1771 = scalar_lea.vmem [#allocation4], 16
  %v1772 = vld [vmem:[%s1771] sm:$0xff]
  %s1773 = sld [smem:[#allocation7 + $0x2]]
  %p1774 = scmp.gt.s32.totalorder %s1773, 0
  %s1775 = scalar_select %p1774, 1, 0
  %v1776 = vstv %s1775
  %vm1777 = vcmp.eq.s32.totalorder %v1776, 1
  %v1778 = vsel %vm1777, %v1772, %v1766
  %s1779 = scalar_lea.vmem [#allocation5], 24
  %v1780 = vld [vmem:[%s1779] sm:$0xff]
  %v1781 = vadd.f32 %v1778, %v1780
  %v1782 = vld [vmem:[%s9] sm:$0xf]
  %v1783 = vld [vmem:[%s9 + $0x4] sm:$0xf]
  %v1784 = vld [vmem:[%s9 + $0x8] sm:$0xf]
  %v1785 = vld [vmem:[%s9 + $0xc] sm:$0xf]
  %v1790 = vunpack.c.l.b16 %v1782
  %v1791 = vunpack.c.l.b16 %v1783
  %v1792 = vunpack.c.l.b16 %v1784
  %v1793 = vunpack.c.l.b16 %v1785
  %v1794 = vpack.c.b16 %v1791, %v1790
  %v1795 = vpack.c.b16 %v1793, %v1792
  %1798 = vmatprep.subr.bf16.mxu0 0
  %1799 = vmatpush1.bf16.msra.mxu0 0
  %1800 = vmatprep.subr.bf16.mxu0 0
  %1801 = vmatpush1.bf16.msra.mxu0 0
  %1802 = vmatprep.subr.bf16.mxu0 0
  %1803 = vmatpush1.bf16.msra.mxu0 0
  %1804 = vmatprep.subr.bf16.mxu0 0
  %1805 = vmatpush1.bf16.msra.mxu0 0
  %1806 = vmatprep.subr.bf16.mxu0 0
  %1807 = vmatpush1.bf16.msra.mxu0 0
  %1808 = vmatprep.subr.bf16.mxu0 0
  %1809 = vmatpush1.bf16.msra.mxu0 0
  %1810 = vmatprep.subr.bf16.mxu0 0
  %1811 = vmatpush1.bf16.msra.mxu0 %v1795
  %1812 = vmatprep.subr.bf16.mxu0 0
  %1813 = vmatpush1.bf16.msra.mxu0 %v1794
  %1814 = vmatprep.subr.bf16.mxu0 0
  %1815 = vmatpush2.bf16.msra.mxu0 0
  %1816 = vmatprep.subr.bf16.mxu0 0
  %1817 = vmatpush2.bf16.msra.mxu0 0
  %1818 = vmatprep.subr.bf16.mxu0 0
  %1819 = vmatpush2.bf16.msra.mxu0 0
  %1820 = vmatprep.subr.bf16.mxu0 0
  %1821 = vmatpush2.bf16.msra.mxu0 0
  %1822 = vmatprep.subr.bf16.mxu0 0
  %1823 = vmatpush2.bf16.msra.mxu0 0
  %1824 = vmatprep.subr.bf16.mxu0 0
  %1825 = vmatpush2.bf16.msra.mxu0 0
  %1826 = vmatprep.subr.bf16.mxu0 0
  %1827 = vmatpush2.bf16.msra.mxu0 0
  %1828 = vmatprep.subr.bf16.mxu0 0
  %1829 = vmatpush2.bf16.msra.mxu0 0
  %1830 = vmatprep.mubr.bf16.mxu0 0
  %1831 = vmatmul.mubr.bf16.gmra.mxu0 %v1601
  %v1832 = vpop.f32.mrf.mxu0
  %v1833 = vadd.f32 0.0, %v1832
  %v1834 = vpop.f32.mrf.mxu0
  %v1835 = vpop.f32.mrf.mxu0
  %v1836 = vpop.f32.mrf.mxu0
  %1837 = vdwg.mxu0
  %v1838 = vadd.f32 %v1781, %v1833
  %v1839 = vxor.u32 %v1838, 2147483648
  %v1840 = vmul.f32 %v1839, 1.442695
  %v1841 = vpow.pop %v1840
  %v1842 = vadd.f32 %v1841, 1.0
  %v1843 = vrcp.pop %v1842
  %v1844 = vmul.f32 1.0, %v1843
  %v1845 = vadd.f32 %v1833, %v1273
  %1847 = vrot.lane.b32.xlu0 %v1845, 64
  %v1848 = vpop.permute.xlu0 %1847
  %v1850 = vmul.f32 %v1844, %v1848
  %1852 = vrot.lane.b32.xlu0 %v1850, 64
  %v1853 = vpop.permute.xlu0 %1852
  %v1855 = vadd.f32 %v1781, %v1853
  %v1856 = vtanh.pop %v1855
  %v1857 = vsub.f32 1.0, %v1844
  %1859 = vrot.lane.b32.xlu0 %v1856, 96
  %v1860 = vpop.permute.xlu0 %1859
  %v1862 = vmul.f32 %v1857, %v1860
  %v1863 = vmul.f32 %v1844, %v1579
  %v1864 = vadd.f32 %v1862, %v1863
  %v1865 = vpack.c.bf16 %v1864, %v1864
  %v1866 = vld [vmem:[%s13] sm:$0xf]
  %v1867 = vld [vmem:[%s13 + $0x4] sm:$0xf]
  %v1868 = vld [vmem:[%s13 + $0x8] sm:$0xf]
  %v1869 = vld [vmem:[%s13 + $0xc] sm:$0xf]
  %1871 = vrot.lane.b32.xlu0 %v1865, 96
  %v1872 = vpop.permute.xlu0 %1871
  %v1877 = vunpack.c.l.b16 %v1866
  %v1878 = vunpack.c.l.b16 %v1867
  %v1879 = vunpack.c.l.b16 %v1868
  %v1880 = vunpack.c.l.b16 %v1869
  %v1881 = vpack.c.b16 %v1878, %v1877
  %v1882 = vpack.c.b16 %v1880, %v1879
  %v1886 = vsel %vm297, %v1872, 0
  %1888 = vmatprep.subr.bf16.mxu0 0
  %1889 = vmatpush1.bf16.msra.mxu0 0
  %1890 = vmatprep.subr.bf16.mxu0 0
  %1891 = vmatpush1.bf16.msra.mxu0 0
  %1892 = vmatprep.subr.bf16.mxu0 0
  %1893 = vmatpush1.bf16.msra.mxu0 0
  %1894 = vmatprep.subr.bf16.mxu0 0
  %1895 = vmatpush1.bf16.msra.mxu0 0
  %1896 = vmatprep.subr.bf16.mxu0 0
  %1897 = vmatpush1.bf16.msra.mxu0 0
  %1898 = vmatprep.subr.bf16.mxu0 0
  %1899 = vmatpush1.bf16.msra.mxu0 0
  %1900 = vmatprep.subr.bf16.mxu0 0
  %1901 = vmatpush1.bf16.msra.mxu0 %v1882
  %1902 = vmatprep.subr.bf16.mxu0 0
  %1903 = vmatpush1.bf16.msra.mxu0 %v1881
  %1904 = vmatprep.subr.bf16.mxu0 0
  %1905 = vmatpush2.bf16.msra.mxu0 0
  %1906 = vmatprep.subr.bf16.mxu0 0
  %1907 = vmatpush2.bf16.msra.mxu0 0
  %1908 = vmatprep.subr.bf16.mxu0 0
  %1909 = vmatpush2.bf16.msra.mxu0 0
  %1910 = vmatprep.subr.bf16.mxu0 0
  %1911 = vmatpush2.bf16.msra.mxu0 0
  %1912 = vmatprep.subr.bf16.mxu0 0
  %1913 = vmatpush2.bf16.msra.mxu0 0
  %1914 = vmatprep.subr.bf16.mxu0 0
  %1915 = vmatpush2.bf16.msra.mxu0 0
  %1916 = vmatprep.subr.bf16.mxu0 0
  %1917 = vmatpush2.bf16.msra.mxu0 0
  %1918 = vmatprep.subr.bf16.mxu0 0
  %1919 = vmatpush2.bf16.msra.mxu0 0
  %1920 = vmatprep.mubr.bf16.mxu0 0
  %1921 = vmatmul.mubr.bf16.gmra.mxu0 %v1886
  %v1922 = vpop.f32.mrf.mxu0
  %v1923 = vadd.f32 %v1193, %v1922
  %v1924 = vpop.f32.mrf.mxu0
  %v1925 = vpop.f32.mrf.mxu0
  %v1926 = vpop.f32.mrf.mxu0
  %1927 = vdwg.mxu0
  %s1928 = scalar_lea.vmem %s15, 24
  %1929 = vst [vmem:[%s1928] sm:$0xff] %v1923
  %1930 = vmax.xlane.f32.xlu0 %v1923
  %v1931 = vpop.xlane.xlu0 %1930
  %vm1932 = vcmp.eq.f32.partialorder %v1923, %v1931
  %v1933 = vsel %vm1932, %v1196, 128
  %v1934 = vand.u32 %v1933, 65535
  %v1935 = vshra.s32 %v1933, 16
  %v1936 = vcvt.s32.f32 %v1934
  %v1937 = vcvt.s32.f32 %v1935
  %1938 = vmin.xlane.f32.xlu0 %v1937
  %v1939 = vpop.xlane.xlu0 %1938
  %vm1940 = vcmp.eq.f32.partialorder %v1937, %v1939
  %v1941 = vsel %vm1940, %v1936, inf
  %1942 = vmin.xlane.f32.xlu0 %v1941
  %v1943 = vpop.xlane.xlu0 %1942
  %v1944 = vcvt.f32.s32 %v1943
  %v1945 = vcvt.f32.s32 %v1939
  %v1946 = vshll.u32 %v1945, 16
  %v1947 = vadd.s32 %v1946, %v1944
  %vm1948 = vcmp.eq.s32.totalorder %v1196, %v1947
  %v1949 = vsel %vm1948, 1, 0
  %v1950 = vcvt.s32.f32 %v1949
  %v1951 = vpack.c.bf16 %v1950, %v1950
  %v1952 = vld [vmem:[%s12] sm:$0xf]
  %v1953 = vld [vmem:[%s12 + $0x4] sm:$0xf]
  %v1954 = vld [vmem:[%s12 + $0x8] sm:$0xf]
  %v1955 = vld [vmem:[%s12 + $0xc] sm:$0xf]
  %v1956 = vld [vmem:[%s12 + $0x10] sm:$0xf]
  %v1957 = vld [vmem:[%s12 + $0x14] sm:$0xf]
  %v1958 = vld [vmem:[%s12 + $0x18] sm:$0xf]
  %v1959 = vld [vmem:[%s12 + $0x1c] sm:$0xf]
  %v1960 = vld [vmem:[%s12 + $0x20] sm:$0xf]
  %v1961 = vld [vmem:[%s12 + $0x24] sm:$0xf]
  %v1962 = vld [vmem:[%s12 + $0x28] sm:$0xf]
  %v1963 = vld [vmem:[%s12 + $0x2c] sm:$0xf]
  %v1964 = vld [vmem:[%s12 + $0x30] sm:$0xf]
  %v1965 = vld [vmem:[%s12 + $0x34] sm:$0xf]
  %v1966 = vld [vmem:[%s12 + $0x38] sm:$0xf]
  %v1967 = vld [vmem:[%s12 + $0x3c] sm:$0xf]
  %v1984 = vunpack.c.l.b16 %v1952
  %v1985 = vunpack.c.l.b16 %v1953
  %v1986 = vunpack.c.l.b16 %v1954
  %v1987 = vunpack.c.l.b16 %v1955
  %v1988 = vunpack.c.l.b16 %v1956
  %v1989 = vunpack.c.l.b16 %v1957
  %v1990 = vunpack.c.l.b16 %v1958
  %v1991 = vunpack.c.l.b16 %v1959
  %v1992 = vunpack.c.l.b16 %v1960
  %v1993 = vunpack.c.l.b16 %v1961
  %v1994 = vunpack.c.l.b16 %v1962
  %v1995 = vunpack.c.l.b16 %v1963
  %v1996 = vunpack.c.l.b16 %v1964
  %v1997 = vunpack.c.l.b16 %v1965
  %v1998 = vunpack.c.l.b16 %v1966
  %v1999 = vunpack.c.l.b16 %v1967
  %v2000 = vpack.c.b16 %v1985, %v1984
  %v2001 = vpack.c.b16 %v1987, %v1986
  %v2002 = vpack.c.b16 %v1989, %v1988
  %v2003 = vpack.c.b16 %v1991, %v1990
  %v2004 = vpack.c.b16 %v1993, %v1992
  %v2005 = vpack.c.b16 %v1995, %v1994
  %v2006 = vpack.c.b16 %v1997, %v1996
  %v2007 = vpack.c.b16 %v1999, %v1998
  %2016 = vmatprep.subr.bf16.mxu0 0
  %2017 = vmatpush1.bf16.msra.mxu0 %v2007
  %2018 = vmatprep.subr.bf16.mxu0 0
  %2019 = vmatpush1.bf16.msra.mxu0 %v2006
  %2020 = vmatprep.subr.bf16.mxu0 0
  %2021 = vmatpush1.bf16.msra.mxu0 %v2005
  %2022 = vmatprep.subr.bf16.mxu0 0
  %2023 = vmatpush1.bf16.msra.mxu0 %v2004
  %2024 = vmatprep.subr.bf16.mxu0 0
  %2025 = vmatpush1.bf16.msra.mxu0 %v2003
  %2026 = vmatprep.subr.bf16.mxu0 0
  %2027 = vmatpush1.bf16.msra.mxu0 %v2002
  %2028 = vmatprep.subr.bf16.mxu0 0
  %2029 = vmatpush1.bf16.msra.mxu0 %v2001
  %2030 = vmatprep.subr.bf16.mxu0 0
  %2031 = vmatpush1.bf16.msra.mxu0 %v2000
  %2032 = vmatprep.subr.bf16.mxu0 0
  %2033 = vmatpush2.bf16.msra.mxu0 0
  %2034 = vmatprep.subr.bf16.mxu0 0
  %2035 = vmatpush2.bf16.msra.mxu0 0
  %2036 = vmatprep.subr.bf16.mxu0 0
  %2037 = vmatpush2.bf16.msra.mxu0 0
  %2038 = vmatprep.subr.bf16.mxu0 0
  %2039 = vmatpush2.bf16.msra.mxu0 0
  %2040 = vmatprep.subr.bf16.mxu0 0
  %2041 = vmatpush2.bf16.msra.mxu0 0
  %2042 = vmatprep.subr.bf16.mxu0 0
  %2043 = vmatpush2.bf16.msra.mxu0 0
  %2044 = vmatprep.subr.bf16.mxu0 0
  %2045 = vmatpush2.bf16.msra.mxu0 0
  %2046 = vmatprep.subr.bf16.mxu0 0
  %2047 = vmatpush2.bf16.msra.mxu0 0
  %2048 = vmatprep.mubr.bf16.mxu0 0
  %2049 = vmatmul.mubr.bf16.gmra.mxu0 %v1951
  %v2050 = vpop.f32.mrf.mxu0
  %v2051 = vadd.f32 0.0, %v2050
  %v2052 = vpop.f32.mrf.mxu0
  %v2053 = vpop.f32.mrf.mxu0
  %v2054 = vpop.f32.mrf.mxu0
  %2055 = vdwg.mxu0
  %s2056 = scalar_lea.vmem [#allocation4], 24
  %v2057 = vld [vmem:[%s2056] sm:$0xff]
  %s2058 = sld [smem:[#allocation7 + $0x3]]
  %p2059 = scmp.gt.s32.totalorder %s2058, 0
  %s2060 = scalar_select %p2059, 1, 0
  %v2061 = vstv %s2060
  %vm2062 = vcmp.eq.s32.totalorder %v2061, 1
  %v2063 = vsel %vm2062, %v2057, %v2051
  %s2064 = scalar_lea.vmem [#allocation5], 32
  %v2065 = vld [vmem:[%s2064] sm:$0xff]
  %v2066 = vadd.f32 %v2063, %v2065
  %v2067 = vld [vmem:[%s9] sm:$0xf]
  %v2068 = vld [vmem:[%s9 + $0x4] sm:$0xf]
  %v2069 = vld [vmem:[%s9 + $0x8] sm:$0xf]
  %v2070 = vld [vmem:[%s9 + $0xc] sm:$0xf]
  %v2075 = vunpack.c.l.b16 %v2067
  %v2076 = vunpack.c.l.b16 %v2068
  %v2077 = vunpack.c.l.b16 %v2069
  %v2078 = vunpack.c.l.b16 %v2070
  %v2079 = vpack.c.b16 %v2076, %v2075
  %v2080 = vpack.c.b16 %v2078, %v2077
  %2083 = vmatprep.subr.bf16.mxu0 0
  %2084 = vmatpush1.bf16.msra.mxu0 0
  %2085 = vmatprep.subr.bf16.mxu0 0
  %2086 = vmatpush1.bf16.msra.mxu0 0
  %2087 = vmatprep.subr.bf16.mxu0 0
  %2088 = vmatpush1.bf16.msra.mxu0 0
  %2089 = vmatprep.subr.bf16.mxu0 0
  %2090 = vmatpush1.bf16.msra.mxu0 0
  %2091 = vmatprep.subr.bf16.mxu0 0
  %2092 = vmatpush1.bf16.msra.mxu0 0
  %2093 = vmatprep.subr.bf16.mxu0 0
  %2094 = vmatpush1.bf16.msra.mxu0 0
  %2095 = vmatprep.subr.bf16.mxu0 0
  %2096 = vmatpush1.bf16.msra.mxu0 %v2080
  %2097 = vmatprep.subr.bf16.mxu0 0
  %2098 = vmatpush1.bf16.msra.mxu0 %v2079
  %2099 = vmatprep.subr.bf16.mxu0 0
  %2100 = vmatpush2.bf16.msra.mxu0 0
  %2101 = vmatprep.subr.bf16.mxu0 0
  %2102 = vmatpush2.bf16.msra.mxu0 0
  %2103 = vmatprep.subr.bf16.mxu0 0
  %2104 = vmatpush2.bf16.msra.mxu0 0
  %2105 = vmatprep.subr.bf16.mxu0 0
  %2106 = vmatpush2.bf16.msra.mxu0 0
  %2107 = vmatprep.subr.bf16.mxu0 0
  %2108 = vmatpush2.bf16.msra.mxu0 0
  %2109 = vmatprep.subr.bf16.mxu0 0
  %2110 = vmatpush2.bf16.msra.mxu0 0
  %2111 = vmatprep.subr.bf16.mxu0 0
  %2112 = vmatpush2.bf16.msra.mxu0 0
  %2113 = vmatprep.subr.bf16.mxu0 0
  %2114 = vmatpush2.bf16.msra.mxu0 0
  %2115 = vmatprep.mubr.bf16.mxu0 0
  %2116 = vmatmul.mubr.bf16.gmra.mxu0 %v1886
  %v2117 = vpop.f32.mrf.mxu0
  %v2118 = vadd.f32 0.0, %v2117
  %v2119 = vpop.f32.mrf.mxu0
  %v2120 = vpop.f32.mrf.mxu0
  %v2121 = vpop.f32.mrf.mxu0
  %2122 = vdwg.mxu0
  %v2123 = vadd.f32 %v2066, %v2118
  %v2124 = vxor.u32 %v2123, 2147483648
  %v2125 = vmul.f32 %v2124, 1.442695
  %v2126 = vpow.pop %v2125
  %v2127 = vadd.f32 %v2126, 1.0
  %v2128 = vrcp.pop %v2127
  %v2129 = vmul.f32 1.0, %v2128
  %v2130 = vadd.f32 %v2118, %v1273
  %2132 = vrot.lane.b32.xlu0 %v2130, 64
  %v2133 = vpop.permute.xlu0 %2132
  %v2135 = vmul.f32 %v2129, %v2133
  %2137 = vrot.lane.b32.xlu0 %v2135, 64
  %v2138 = vpop.permute.xlu0 %2137
  %v2140 = vadd.f32 %v2066, %v2138
  %v2141 = vtanh.pop %v2140
  %v2142 = vsub.f32 1.0, %v2129
  %2144 = vrot.lane.b32.xlu0 %v2141, 96
  %v2145 = vpop.permute.xlu0 %2144
  %v2147 = vmul.f32 %v2142, %v2145
  %v2148 = vmul.f32 %v2129, %v1864
  %v2149 = vadd.f32 %v2147, %v2148
  %v2150 = vpack.c.bf16 %v2149, %v2149
  %v2151 = vld [vmem:[%s13] sm:$0xf]
  %v2152 = vld [vmem:[%s13 + $0x4] sm:$0xf]
  %v2153 = vld [vmem:[%s13 + $0x8] sm:$0xf]
  %v2154 = vld [vmem:[%s13 + $0xc] sm:$0xf]
  %2156 = vrot.lane.b32.xlu0 %v2150, 96
  %v2157 = vpop.permute.xlu0 %2156
  %v2162 = vunpack.c.l.b16 %v2151
  %v2163 = vunpack.c.l.b16 %v2152
  %v2164 = vunpack.c.l.b16 %v2153
  %v2165 = vunpack.c.l.b16 %v2154
  %v2166 = vpack.c.b16 %v2163, %v2162
  %v2167 = vpack.c.b16 %v2165, %v2164
  %v2171 = vsel %vm297, %v2157, 0
  %2173 = vmatprep.subr.bf16.mxu0 0
  %2174 = vmatpush1.bf16.msra.mxu0 0
  %2175 = vmatprep.subr.bf16.mxu0 0
  %2176 = vmatpush1.bf16.msra.mxu0 0
  %2177 = vmatprep.subr.bf16.mxu0 0
  %2178 = vmatpush1.bf16.msra.mxu0 0
  %2179 = vmatprep.subr.bf16.mxu0 0
  %2180 = vmatpush1.bf16.msra.mxu0 0
  %2181 = vmatprep.subr.bf16.mxu0 0
  %2182 = vmatpush1.bf16.msra.mxu0 0
  %2183 = vmatprep.subr.bf16.mxu0 0
  %2184 = vmatpush1.bf16.msra.mxu0 0
  %2185 = vmatprep.subr.bf16.mxu0 0
  %2186 = vmatpush1.bf16.msra.mxu0 %v2167
  %2187 = vmatprep.subr.bf16.mxu0 0
  %2188 = vmatpush1.bf16.msra.mxu0 %v2166
  %2189 = vmatprep.subr.bf16.mxu0 0
  %2190 = vmatpush2.bf16.msra.mxu0 0
  %2191 = vmatprep.subr.bf16.mxu0 0
  %2192 = vmatpush2.bf16.msra.mxu0 0
  %2193 = vmatprep.subr.bf16.mxu0 0
  %2194 = vmatpush2.bf16.msra.mxu0 0
  %2195 = vmatprep.subr.bf16.mxu0 0
  %2196 = vmatpush2.bf16.msra.mxu0 0
  %2197 = vmatprep.subr.bf16.mxu0 0
  %2198 = vmatpush2.bf16.msra.mxu0 0
  %2199 = vmatprep.subr.bf16.mxu0 0
  %2200 = vmatpush2.bf16.msra.mxu0 0
  %2201 = vmatprep.subr.bf16.mxu0 0
  %2202 = vmatpush2.bf16.msra.mxu0 0
  %2203 = vmatprep.subr.bf16.mxu0 0
  %2204 = vmatpush2.bf16.msra.mxu0 0
  %2205 = vmatprep.mubr.bf16.mxu0 0
  %2206 = vmatmul.mubr.bf16.gmra.mxu0 %v2171
  %v2207 = vpop.f32.mrf.mxu0
  %v2208 = vadd.f32 %v1193, %v2207
  %v2209 = vpop.f32.mrf.mxu0
  %v2210 = vpop.f32.mrf.mxu0
  %v2211 = vpop.f32.mrf.mxu0
  %2212 = vdwg.mxu0
  %s2213 = scalar_lea.vmem %s15, 32
  %2214 = vst [vmem:[%s2213] sm:$0xff] %v2208
  %2215 = vmax.xlane.f32.xlu0 %v2208
  %v2216 = vpop.xlane.xlu0 %2215
  %vm2217 = vcmp.eq.f32.partialorder %v2208, %v2216
  %v2218 = vsel %vm2217, %v1196, 128
  %v2219 = vand.u32 %v2218, 65535
  %v2220 = vshra.s32 %v2218, 16
  %v2221 = vcvt.s32.f32 %v2219
  %v2222 = vcvt.s32.f32 %v2220
  %2223 = vmin.xlane.f32.xlu0 %v2222
  %v2224 = vpop.xlane.xlu0 %2223
  %vm2225 = vcmp.eq.f32.partialorder %v2222, %v2224
  %v2226 = vsel %vm2225, %v2221, inf
  %2227 = vmin.xlane.f32.xlu0 %v2226
  %v2228 = vpop.xlane.xlu0 %2227
  %v2229 = vcvt.f32.s32 %v2228
  %v2230 = vcvt.f32.s32 %v2224
  %v2231 = vshll.u32 %v2230, 16
  %v2232 = vadd.s32 %v2231, %v2229
  %vm2233 = vcmp.eq.s32.totalorder %v1196, %v2232
  %v2234 = vsel %vm2233, 1, 0
  %v2235 = vcvt.s32.f32 %v2234
  %v2236 = vpack.c.bf16 %v2235, %v2235
  %v2237 = vld [vmem:[%s12] sm:$0xf]
  %v2238 = vld [vmem:[%s12 + $0x4] sm:$0xf]
  %v2239 = vld [vmem:[%s12 + $0x8] sm:$0xf]
  %v2240 = vld [vmem:[%s12 + $0xc] sm:$0xf]
  %v2241 = vld [vmem:[%s12 + $0x10] sm:$0xf]
  %v2242 = vld [vmem:[%s12 + $0x14] sm:$0xf]
  %v2243 = vld [vmem:[%s12 + $0x18] sm:$0xf]
  %v2244 = vld [vmem:[%s12 + $0x1c] sm:$0xf]
  %v2245 = vld [vmem:[%s12 + $0x20] sm:$0xf]
  %v2246 = vld [vmem:[%s12 + $0x24] sm:$0xf]
  %v2247 = vld [vmem:[%s12 + $0x28] sm:$0xf]
  %v2248 = vld [vmem:[%s12 + $0x2c] sm:$0xf]
  %v2249 = vld [vmem:[%s12 + $0x30] sm:$0xf]
  %v2250 = vld [vmem:[%s12 + $0x34] sm:$0xf]
  %v2251 = vld [vmem:[%s12 + $0x38] sm:$0xf]
  %v2252 = vld [vmem:[%s12 + $0x3c] sm:$0xf]
  %v2269 = vunpack.c.l.b16 %v2237
  %v2270 = vunpack.c.l.b16 %v2238
  %v2271 = vunpack.c.l.b16 %v2239
  %v2272 = vunpack.c.l.b16 %v2240
  %v2273 = vunpack.c.l.b16 %v2241
  %v2274 = vunpack.c.l.b16 %v2242
  %v2275 = vunpack.c.l.b16 %v2243
  %v2276 = vunpack.c.l.b16 %v2244
  %v2277 = vunpack.c.l.b16 %v2245
  %v2278 = vunpack.c.l.b16 %v2246
  %v2279 = vunpack.c.l.b16 %v2247
  %v2280 = vunpack.c.l.b16 %v2248
  %v2281 = vunpack.c.l.b16 %v2249
  %v2282 = vunpack.c.l.b16 %v2250
  %v2283 = vunpack.c.l.b16 %v2251
  %v2284 = vunpack.c.l.b16 %v2252
  %v2285 = vpack.c.b16 %v2270, %v2269
  %v2286 = vpack.c.b16 %v2272, %v2271
  %v2287 = vpack.c.b16 %v2274, %v2273
  %v2288 = vpack.c.b16 %v2276, %v2275
  %v2289 = vpack.c.b16 %v2278, %v2277
  %v2290 = vpack.c.b16 %v2280, %v2279
  %v2291 = vpack.c.b16 %v2282, %v2281
  %v2292 = vpack.c.b16 %v2284, %v2283
  %2301 = vmatprep.subr.bf16.mxu0 0
  %2302 = vmatpush1.bf16.msra.mxu0 %v2292
  %2303 = vmatprep.subr.bf16.mxu0 0
  %2304 = vmatpush1.bf16.msra.mxu0 %v2291
  %2305 = vmatprep.subr.bf16.mxu0 0
  %2306 = vmatpush1.bf16.msra.mxu0 %v2290
  %2307 = vmatprep.subr.bf16.mxu0 0
  %2308 = vmatpush1.bf16.msra.mxu0 %v2289
  %2309 = vmatprep.subr.bf16.mxu0 0
  %2310 = vmatpush1.bf16.msra.mxu0 %v2288
  %2311 = vmatprep.subr.bf16.mxu0 0
  %2312 = vmatpush1.bf16.msra.mxu0 %v2287
  %2313 = vmatprep.subr.bf16.mxu0 0
  %2314 = vmatpush1.bf16.msra.mxu0 %v2286
  %2315 = vmatprep.subr.bf16.mxu0 0
  %2316 = vmatpush1.bf16.msra.mxu0 %v2285
  %2317 = vmatprep.subr.bf16.mxu0 0
  %2318 = vmatpush2.bf16.msra.mxu0 0
  %2319 = vmatprep.subr.bf16.mxu0 0
  %2320 = vmatpush2.bf16.msra.mxu0 0
  %2321 = vmatprep.subr.bf16.mxu0 0
  %2322 = vmatpush2.bf16.msra.mxu0 0
  %2323 = vmatprep.subr.bf16.mxu0 0
  %2324 = vmatpush2.bf16.msra.mxu0 0
  %2325 = vmatprep.subr.bf16.mxu0 0
  %2326 = vmatpush2.bf16.msra.mxu0 0
  %2327 = vmatprep.subr.bf16.mxu0 0
  %2328 = vmatpush2.bf16.msra.mxu0 0
  %2329 = vmatprep.subr.bf16.mxu0 0
  %2330 = vmatpush2.bf16.msra.mxu0 0
  %2331 = vmatprep.subr.bf16.mxu0 0
  %2332 = vmatpush2.bf16.msra.mxu0 0
  %2333 = vmatprep.mubr.bf16.mxu0 0
  %2334 = vmatmul.mubr.bf16.gmra.mxu0 %v2236
  %v2335 = vpop.f32.mrf.mxu0
  %v2336 = vadd.f32 0.0, %v2335
  %v2337 = vpop.f32.mrf.mxu0
  %v2338 = vpop.f32.mrf.mxu0
  %v2339 = vpop.f32.mrf.mxu0
  %2340 = vdwg.mxu0
  %s2341 = scalar_lea.vmem [#allocation4], 32
  %v2342 = vld [vmem:[%s2341] sm:$0xff]
  %s2343 = sld [smem:[#allocation7 + $0x4]]
  %p2344 = scmp.gt.s32.totalorder %s2343, 0
  %s2345 = scalar_select %p2344, 1, 0
  %v2346 = vstv %s2345
  %vm2347 = vcmp.eq.s32.totalorder %v2346, 1
  %v2348 = vsel %vm2347, %v2342, %v2336
  %s2349 = scalar_lea.vmem [#allocation5], 40
  %v2350 = vld [vmem:[%s2349] sm:$0xff]
  %v2351 = vadd.f32 %v2348, %v2350
  %v2352 = vld [vmem:[%s9] sm:$0xf]
  %v2353 = vld [vmem:[%s9 + $0x4] sm:$0xf]
  %v2354 = vld [vmem:[%s9 + $0x8] sm:$0xf]
  %v2355 = vld [vmem:[%s9 + $0xc] sm:$0xf]
  %v2360 = vunpack.c.l.b16 %v2352
  %v2361 = vunpack.c.l.b16 %v2353
  %v2362 = vunpack.c.l.b16 %v2354
  %v2363 = vunpack.c.l.b16 %v2355
  %v2364 = vpack.c.b16 %v2361, %v2360
  %v2365 = vpack.c.b16 %v2363, %v2362
  %2368 = vmatprep.subr.bf16.mxu0 0
  %2369 = vmatpush1.bf16.msra.mxu0 0
  %2370 = vmatprep.subr.bf16.mxu0 0
  %2371 = vmatpush1.bf16.msra.mxu0 0
  %2372 = vmatprep.subr.bf16.mxu0 0
  %2373 = vmatpush1.bf16.msra.mxu0 0
  %2374 = vmatprep.subr.bf16.mxu0 0
  %2375 = vmatpush1.bf16.msra.mxu0 0
  %2376 = vmatprep.subr.bf16.mxu0 0
  %2377 = vmatpush1.bf16.msra.mxu0 0
  %2378 = vmatprep.subr.bf16.mxu0 0
  %2379 = vmatpush1.bf16.msra.mxu0 0
  %2380 = vmatprep.subr.bf16.mxu0 0
  %2381 = vmatpush1.bf16.msra.mxu0 %v2365
  %2382 = vmatprep.subr.bf16.mxu0 0
  %2383 = vmatpush1.bf16.msra.mxu0 %v2364
  %2384 = vmatprep.subr.bf16.mxu0 0
  %2385 = vmatpush2.bf16.msra.mxu0 0
  %2386 = vmatprep.subr.bf16.mxu0 0
  %2387 = vmatpush2.bf16.msra.mxu0 0
  %2388 = vmatprep.subr.bf16.mxu0 0
  %2389 = vmatpush2.bf16.msra.mxu0 0
  %2390 = vmatprep.subr.bf16.mxu0 0
  %2391 = vmatpush2.bf16.msra.mxu0 0
  %2392 = vmatprep.subr.bf16.mxu0 0
  %2393 = vmatpush2.bf16.msra.mxu0 0
  %2394 = vmatprep.subr.bf16.mxu0 0
  %2395 = vmatpush2.bf16.msra.mxu0 0
  %2396 = vmatprep.subr.bf16.mxu0 0
  %2397 = vmatpush2.bf16.msra.mxu0 0
  %2398 = vmatprep.subr.bf16.mxu0 0
  %2399 = vmatpush2.bf16.msra.mxu0 0
  %2400 = vmatprep.mubr.bf16.mxu0 0
  %2401 = vmatmul.mubr.bf16.gmra.mxu0 %v2171
  %v2402 = vpop.f32.mrf.mxu0
  %v2403 = vadd.f32 0.0, %v2402
  %v2404 = vpop.f32.mrf.mxu0
  %v2405 = vpop.f32.mrf.mxu0
  %v2406 = vpop.f32.mrf.mxu0
  %2407 = vdwg.mxu0
  %v2408 = vadd.f32 %v2351, %v2403
  %v2409 = vxor.u32 %v2408, 2147483648
  %v2410 = vmul.f32 %v2409, 1.442695
  %v2411 = vpow.pop %v2410
  %v2412 = vadd.f32 %v2411, 1.0
  %v2413 = vrcp.pop %v2412
  %v2414 = vmul.f32 1.0, %v2413
  %v2415 = vadd.f32 %v2403, %v1273
  %2417 = vrot.lane.b32.xlu0 %v2415, 64
  %v2418 = vpop.permute.xlu0 %2417
  %v2420 = vmul.f32 %v2414, %v2418
  %2422 = vrot.lane.b32.xlu0 %v2420, 64
  %v2423 = vpop.permute.xlu0 %2422
  %v2425 = vadd.f32 %v2351, %v2423
  %v2426 = vtanh.pop %v2425
  %v2427 = vsub.f32 1.0, %v2414
  %2429 = vrot.lane.b32.xlu0 %v2426, 96
  %v2430 = vpop.permute.xlu0 %2429
  %v2432 = vmul.f32 %v2427, %v2430
  %v2433 = vmul.f32 %v2414, %v2149
  %v2434 = vadd.f32 %v2432, %v2433
  %v2435 = vpack.c.bf16 %v2434, %v2434
  %v2436 = vld [vmem:[%s13] sm:$0xf]
  %v2437 = vld [vmem:[%s13 + $0x4] sm:$0xf]
  %v2438 = vld [vmem:[%s13 + $0x8] sm:$0xf]
  %v2439 = vld [vmem:[%s13 + $0xc] sm:$0xf]
  %2441 = vrot.lane.b32.xlu0 %v2435, 96
  %v2442 = vpop.permute.xlu0 %2441
  %v2447 = vunpack.c.l.b16 %v2436
  %v2448 = vunpack.c.l.b16 %v2437
  %v2449 = vunpack.c.l.b16 %v2438
  %v2450 = vunpack.c.l.b16 %v2439
  %v2451 = vpack.c.b16 %v2448, %v2447
  %v2452 = vpack.c.b16 %v2450, %v2449
  %v2456 = vsel %vm297, %v2442, 0
  %2458 = vmatprep.subr.bf16.mxu0 0
  %2459 = vmatpush1.bf16.msra.mxu0 0
  %2460 = vmatprep.subr.bf16.mxu0 0
  %2461 = vmatpush1.bf16.msra.mxu0 0
  %2462 = vmatprep.subr.bf16.mxu0 0
  %2463 = vmatpush1.bf16.msra.mxu0 0
  %2464 = vmatprep.subr.bf16.mxu0 0
  %2465 = vmatpush1.bf16.msra.mxu0 0
  %2466 = vmatprep.subr.bf16.mxu0 0
  %2467 = vmatpush1.bf16.msra.mxu0 0
  %2468 = vmatprep.subr.bf16.mxu0 0
  %2469 = vmatpush1.bf16.msra.mxu0 0
  %2470 = vmatprep.subr.bf16.mxu0 0
  %2471 = vmatpush1.bf16.msra.mxu0 %v2452
  %2472 = vmatprep.subr.bf16.mxu0 0
  %2473 = vmatpush1.bf16.msra.mxu0 %v2451
  %2474 = vmatprep.subr.bf16.mxu0 0
  %2475 = vmatpush2.bf16.msra.mxu0 0
  %2476 = vmatprep.subr.bf16.mxu0 0
  %2477 = vmatpush2.bf16.msra.mxu0 0
  %2478 = vmatprep.subr.bf16.mxu0 0
  %2479 = vmatpush2.bf16.msra.mxu0 0
  %2480 = vmatprep.subr.bf16.mxu0 0
  %2481 = vmatpush2.bf16.msra.mxu0 0
  %2482 = vmatprep.subr.bf16.mxu0 0
  %2483 = vmatpush2.bf16.msra.mxu0 0
  %2484 = vmatprep.subr.bf16.mxu0 0
  %2485 = vmatpush2.bf16.msra.mxu0 0
  %2486 = vmatprep.subr.bf16.mxu0 0
  %2487 = vmatpush2.bf16.msra.mxu0 0
  %2488 = vmatprep.subr.bf16.mxu0 0
  %2489 = vmatpush2.bf16.msra.mxu0 0
  %2490 = vmatprep.mubr.bf16.mxu0 0
  %2491 = vmatmul.mubr.bf16.gmra.mxu0 %v2456
  %v2492 = vpop.f32.mrf.mxu0
  %v2493 = vadd.f32 %v1193, %v2492
  %v2494 = vpop.f32.mrf.mxu0
  %v2495 = vpop.f32.mrf.mxu0
  %v2496 = vpop.f32.mrf.mxu0
  %2497 = vdwg.mxu0
  %s2498 = scalar_lea.vmem %s15, 40
  %2499 = vst [vmem:[%s2498] sm:$0xff] %v2493
  %2500 = vmax.xlane.f32.xlu0 %v2493
  %v2501 = vpop.xlane.xlu0 %2500
  %vm2502 = vcmp.eq.f32.partialorder %v2493, %v2501
  %v2503 = vsel %vm2502, %v1196, 128
  %v2504 = vand.u32 %v2503, 65535
  %v2505 = vshra.s32 %v2503, 16
  %v2506 = vcvt.s32.f32 %v2504
  %v2507 = vcvt.s32.f32 %v2505
  %2508 = vmin.xlane.f32.xlu0 %v2507
  %v2509 = vpop.xlane.xlu0 %2508
  %vm2510 = vcmp.eq.f32.partialorder %v2507, %v2509
  %v2511 = vsel %vm2510, %v2506, inf
  %2512 = vmin.xlane.f32.xlu0 %v2511
  %v2513 = vpop.xlane.xlu0 %2512
  %v2514 = vcvt.f32.s32 %v2513
  %v2515 = vcvt.f32.s32 %v2509
  %v2516 = vshll.u32 %v2515, 16
  %v2517 = vadd.s32 %v2516, %v2514
  %vm2518 = vcmp.eq.s32.totalorder %v1196, %v2517
  %v2519 = vsel %vm2518, 1, 0
  %v2520 = vcvt.s32.f32 %v2519
  %v2521 = vpack.c.bf16 %v2520, %v2520
  %v2522 = vld [vmem:[%s12] sm:$0xf]
  %v2523 = vld [vmem:[%s12 + $0x4] sm:$0xf]
  %v2524 = vld [vmem:[%s12 + $0x8] sm:$0xf]
  %v2525 = vld [vmem:[%s12 + $0xc] sm:$0xf]
  %v2526 = vld [vmem:[%s12 + $0x10] sm:$0xf]
  %v2527 = vld [vmem:[%s12 + $0x14] sm:$0xf]
  %v2528 = vld [vmem:[%s12 + $0x18] sm:$0xf]
  %v2529 = vld [vmem:[%s12 + $0x1c] sm:$0xf]
  %v2530 = vld [vmem:[%s12 + $0x20] sm:$0xf]
  %v2531 = vld [vmem:[%s12 + $0x24] sm:$0xf]
  %v2532 = vld [vmem:[%s12 + $0x28] sm:$0xf]
  %v2533 = vld [vmem:[%s12 + $0x2c] sm:$0xf]
  %v2534 = vld [vmem:[%s12 + $0x30] sm:$0xf]
  %v2535 = vld [vmem:[%s12 + $0x34] sm:$0xf]
  %v2536 = vld [vmem:[%s12 + $0x38] sm:$0xf]
  %v2537 = vld [vmem:[%s12 + $0x3c] sm:$0xf]
  %v2554 = vunpack.c.l.b16 %v2522
  %v2555 = vunpack.c.l.b16 %v2523
  %v2556 = vunpack.c.l.b16 %v2524
  %v2557 = vunpack.c.l.b16 %v2525
  %v2558 = vunpack.c.l.b16 %v2526
  %v2559 = vunpack.c.l.b16 %v2527
  %v2560 = vunpack.c.l.b16 %v2528
  %v2561 = vunpack.c.l.b16 %v2529
  %v2562 = vunpack.c.l.b16 %v2530
  %v2563 = vunpack.c.l.b16 %v2531
  %v2564 = vunpack.c.l.b16 %v2532
  %v2565 = vunpack.c.l.b16 %v2533
  %v2566 = vunpack.c.l.b16 %v2534
  %v2567 = vunpack.c.l.b16 %v2535
  %v2568 = vunpack.c.l.b16 %v2536
  %v2569 = vunpack.c.l.b16 %v2537
  %v2570 = vpack.c.b16 %v2555, %v2554
  %v2571 = vpack.c.b16 %v2557, %v2556
  %v2572 = vpack.c.b16 %v2559, %v2558
  %v2573 = vpack.c.b16 %v2561, %v2560
  %v2574 = vpack.c.b16 %v2563, %v2562
  %v2575 = vpack.c.b16 %v2565, %v2564
  %v2576 = vpack.c.b16 %v2567, %v2566
  %v2577 = vpack.c.b16 %v2569, %v2568
  %2586 = vmatprep.subr.bf16.mxu0 0
  %2587 = vmatpush1.bf16.msra.mxu0 %v2577
  %2588 = vmatprep.subr.bf16.mxu0 0
  %2589 = vmatpush1.bf16.msra.mxu0 %v2576
  %2590 = vmatprep.subr.bf16.mxu0 0
  %2591 = vmatpush1.bf16.msra.mxu0 %v2575
  %2592 = vmatprep.subr.bf16.mxu0 0
  %2593 = vmatpush1.bf16.msra.mxu0 %v2574
  %2594 = vmatprep.subr.bf16.mxu0 0
  %2595 = vmatpush1.bf16.msra.mxu0 %v2573
  %2596 = vmatprep.subr.bf16.mxu0 0
  %2597 = vmatpush1.bf16.msra.mxu0 %v2572
  %2598 = vmatprep.subr.bf16.mxu0 0
  %2599 = vmatpush1.bf16.msra.mxu0 %v2571
  %2600 = vmatprep.subr.bf16.mxu0 0
  %2601 = vmatpush1.bf16.msra.mxu0 %v2570
  %2602 = vmatprep.subr.bf16.mxu0 0
  %2603 = vmatpush2.bf16.msra.mxu0 0
  %2604 = vmatprep.subr.bf16.mxu0 0
  %2605 = vmatpush2.bf16.msra.mxu0 0
  %2606 = vmatprep.subr.bf16.mxu0 0
  %2607 = vmatpush2.bf16.msra.mxu0 0
  %2608 = vmatprep.subr.bf16.mxu0 0
  %2609 = vmatpush2.bf16.msra.mxu0 0
  %2610 = vmatprep.subr.bf16.mxu0 0
  %2611 = vmatpush2.bf16.msra.mxu0 0
  %2612 = vmatprep.subr.bf16.mxu0 0
  %2613 = vmatpush2.bf16.msra.mxu0 0
  %2614 = vmatprep.subr.bf16.mxu0 0
  %2615 = vmatpush2.bf16.msra.mxu0 0
  %2616 = vmatprep.subr.bf16.mxu0 0
  %2617 = vmatpush2.bf16.msra.mxu0 0
  %2618 = vmatprep.mubr.bf16.mxu0 0
  %2619 = vmatmul.mubr.bf16.gmra.mxu0 %v2521
  %v2620 = vpop.f32.mrf.mxu0
  %v2621 = vadd.f32 0.0, %v2620
  %v2622 = vpop.f32.mrf.mxu0
  %v2623 = vpop.f32.mrf.mxu0
  %v2624 = vpop.f32.mrf.mxu0
  %2625 = vdwg.mxu0
  %s2626 = scalar_lea.vmem [#allocation4], 40
  %v2627 = vld [vmem:[%s2626] sm:$0xff]
  %s2628 = sld [smem:[#allocation7 + $0x5]]
  %p2629 = scmp.gt.s32.totalorder %s2628, 0
  %s2630 = scalar_select %p2629, 1, 0
  %v2631 = vstv %s2630
  %vm2632 = vcmp.eq.s32.totalorder %v2631, 1
  %v2633 = vsel %vm2632, %v2627, %v2621
  %s2634 = scalar_lea.vmem [#allocation5], 48
  %v2635 = vld [vmem:[%s2634] sm:$0xff]
  %v2636 = vadd.f32 %v2633, %v2635
  %v2637 = vld [vmem:[%s9] sm:$0xf]
  %v2638 = vld [vmem:[%s9 + $0x4] sm:$0xf]
  %v2639 = vld [vmem:[%s9 + $0x8] sm:$0xf]
  %v2640 = vld [vmem:[%s9 + $0xc] sm:$0xf]
  %v2645 = vunpack.c.l.b16 %v2637
  %v2646 = vunpack.c.l.b16 %v2638
  %v2647 = vunpack.c.l.b16 %v2639
  %v2648 = vunpack.c.l.b16 %v2640
  %v2649 = vpack.c.b16 %v2646, %v2645
  %v2650 = vpack.c.b16 %v2648, %v2647
  %2653 = vmatprep.subr.bf16.mxu0 0
  %2654 = vmatpush1.bf16.msra.mxu0 0
  %2655 = vmatprep.subr.bf16.mxu0 0
  %2656 = vmatpush1.bf16.msra.mxu0 0
  %2657 = vmatprep.subr.bf16.mxu0 0
  %2658 = vmatpush1.bf16.msra.mxu0 0
  %2659 = vmatprep.subr.bf16.mxu0 0
  %2660 = vmatpush1.bf16.msra.mxu0 0
  %2661 = vmatprep.subr.bf16.mxu0 0
  %2662 = vmatpush1.bf16.msra.mxu0 0
  %2663 = vmatprep.subr.bf16.mxu0 0
  %2664 = vmatpush1.bf16.msra.mxu0 0
  %2665 = vmatprep.subr.bf16.mxu0 0
  %2666 = vmatpush1.bf16.msra.mxu0 %v2650
  %2667 = vmatprep.subr.bf16.mxu0 0
  %2668 = vmatpush1.bf16.msra.mxu0 %v2649
  %2669 = vmatprep.subr.bf16.mxu0 0
  %2670 = vmatpush2.bf16.msra.mxu0 0
  %2671 = vmatprep.subr.bf16.mxu0 0
  %2672 = vmatpush2.bf16.msra.mxu0 0
  %2673 = vmatprep.subr.bf16.mxu0 0
  %2674 = vmatpush2.bf16.msra.mxu0 0
  %2675 = vmatprep.subr.bf16.mxu0 0
  %2676 = vmatpush2.bf16.msra.mxu0 0
  %2677 = vmatprep.subr.bf16.mxu0 0
  %2678 = vmatpush2.bf16.msra.mxu0 0
  %2679 = vmatprep.subr.bf16.mxu0 0
  %2680 = vmatpush2.bf16.msra.mxu0 0
  %2681 = vmatprep.subr.bf16.mxu0 0
  %2682 = vmatpush2.bf16.msra.mxu0 0
  %2683 = vmatprep.subr.bf16.mxu0 0
  %2684 = vmatpush2.bf16.msra.mxu0 0
  %2685 = vmatprep.mubr.bf16.mxu0 0
  %2686 = vmatmul.mubr.bf16.gmra.mxu0 %v2456
  %v2687 = vpop.f32.mrf.mxu0
  %v2688 = vadd.f32 0.0, %v2687
  %v2689 = vpop.f32.mrf.mxu0
  %v2690 = vpop.f32.mrf.mxu0
  %v2691 = vpop.f32.mrf.mxu0
  %2692 = vdwg.mxu0
  %v2693 = vadd.f32 %v2636, %v2688
  %v2694 = vxor.u32 %v2693, 2147483648
  %v2695 = vmul.f32 %v2694, 1.442695
  %v2696 = vpow.pop %v2695
  %v2697 = vadd.f32 %v2696, 1.0
  %v2698 = vrcp.pop %v2697
  %v2699 = vmul.f32 1.0, %v2698
  %v2700 = vadd.f32 %v2688, %v1273
  %2702 = vrot.lane.b32.xlu0 %v2700, 64
  %v2703 = vpop.permute.xlu0 %2702
  %v2705 = vmul.f32 %v2699, %v2703
  %2707 = vrot.lane.b32.xlu0 %v2705, 64
  %v2708 = vpop.permute.xlu0 %2707
  %v2710 = vadd.f32 %v2636, %v2708
  %v2711 = vtanh.pop %v2710
  %v2712 = vsub.f32 1.0, %v2699
  %2714 = vrot.lane.b32.xlu0 %v2711, 96
  %v2715 = vpop.permute.xlu0 %2714
  %v2717 = vmul.f32 %v2712, %v2715
  %v2718 = vmul.f32 %v2699, %v2434
  %v2719 = vadd.f32 %v2717, %v2718
  %v2720 = vpack.c.bf16 %v2719, %v2719
  %v2721 = vld [vmem:[%s13] sm:$0xf]
  %v2722 = vld [vmem:[%s13 + $0x4] sm:$0xf]
  %v2723 = vld [vmem:[%s13 + $0x8] sm:$0xf]
  %v2724 = vld [vmem:[%s13 + $0xc] sm:$0xf]
  %2726 = vrot.lane.b32.xlu0 %v2720, 96
  %v2727 = vpop.permute.xlu0 %2726
  %v2732 = vunpack.c.l.b16 %v2721
  %v2733 = vunpack.c.l.b16 %v2722
  %v2734 = vunpack.c.l.b16 %v2723
  %v2735 = vunpack.c.l.b16 %v2724
  %v2736 = vpack.c.b16 %v2733, %v2732
  %v2737 = vpack.c.b16 %v2735, %v2734
  %v2741 = vsel %vm297, %v2727, 0
  %2743 = vmatprep.subr.bf16.mxu0 0
  %2744 = vmatpush1.bf16.msra.mxu0 0
  %2745 = vmatprep.subr.bf16.mxu0 0
  %2746 = vmatpush1.bf16.msra.mxu0 0
  %2747 = vmatprep.subr.bf16.mxu0 0
  %2748 = vmatpush1.bf16.msra.mxu0 0
  %2749 = vmatprep.subr.bf16.mxu0 0
  %2750 = vmatpush1.bf16.msra.mxu0 0
  %2751 = vmatprep.subr.bf16.mxu0 0
  %2752 = vmatpush1.bf16.msra.mxu0 0
  %2753 = vmatprep.subr.bf16.mxu0 0
  %2754 = vmatpush1.bf16.msra.mxu0 0
  %2755 = vmatprep.subr.bf16.mxu0 0
  %2756 = vmatpush1.bf16.msra.mxu0 %v2737
  %2757 = vmatprep.subr.bf16.mxu0 0
  %2758 = vmatpush1.bf16.msra.mxu0 %v2736
  %2759 = vmatprep.subr.bf16.mxu0 0
  %2760 = vmatpush2.bf16.msra.mxu0 0
  %2761 = vmatprep.subr.bf16.mxu0 0
  %2762 = vmatpush2.bf16.msra.mxu0 0
  %2763 = vmatprep.subr.bf16.mxu0 0
  %2764 = vmatpush2.bf16.msra.mxu0 0
  %2765 = vmatprep.subr.bf16.mxu0 0
  %2766 = vmatpush2.bf16.msra.mxu0 0
  %2767 = vmatprep.subr.bf16.mxu0 0
  %2768 = vmatpush2.bf16.msra.mxu0 0
  %2769 = vmatprep.subr.bf16.mxu0 0
  %2770 = vmatpush2.bf16.msra.mxu0 0
  %2771 = vmatprep.subr.bf16.mxu0 0
  %2772 = vmatpush2.bf16.msra.mxu0 0
  %2773 = vmatprep.subr.bf16.mxu0 0
  %2774 = vmatpush2.bf16.msra.mxu0 0
  %2775 = vmatprep.mubr.bf16.mxu0 0
  %2776 = vmatmul.mubr.bf16.gmra.mxu0 %v2741
  %v2777 = vpop.f32.mrf.mxu0
  %v2778 = vadd.f32 %v1193, %v2777
  %v2779 = vpop.f32.mrf.mxu0
  %v2780 = vpop.f32.mrf.mxu0
  %v2781 = vpop.f32.mrf.mxu0
  %2782 = vdwg.mxu0
  %s2783 = scalar_lea.vmem %s15, 48
  %2784 = vst [vmem:[%s2783] sm:$0xff] %v2778
  %2785 = vmax.xlane.f32.xlu0 %v2778
  %v2786 = vpop.xlane.xlu0 %2785
  %vm2787 = vcmp.eq.f32.partialorder %v2778, %v2786
  %v2788 = vsel %vm2787, %v1196, 128
  %v2789 = vand.u32 %v2788, 65535
  %v2790 = vshra.s32 %v2788, 16
  %v2791 = vcvt.s32.f32 %v2789
  %v2792 = vcvt.s32.f32 %v2790
  %2793 = vmin.xlane.f32.xlu0 %v2792
  %v2794 = vpop.xlane.xlu0 %2793
  %vm2795 = vcmp.eq.f32.partialorder %v2792, %v2794
  %v2796 = vsel %vm2795, %v2791, inf
  %2797 = vmin.xlane.f32.xlu0 %v2796
  %v2798 = vpop.xlane.xlu0 %2797
  %v2799 = vcvt.f32.s32 %v2798
  %v2800 = vcvt.f32.s32 %v2794
  %v2801 = vshll.u32 %v2800, 16
  %v2802 = vadd.s32 %v2801, %v2799
  %vm2803 = vcmp.eq.s32.totalorder %v1196, %v2802
  %v2804 = vsel %vm2803, 1, 0
  %v2805 = vcvt.s32.f32 %v2804
  %v2806 = vpack.c.bf16 %v2805, %v2805
  %v2807 = vld [vmem:[%s12] sm:$0xf]
  %v2808 = vld [vmem:[%s12 + $0x4] sm:$0xf]
  %v2809 = vld [vmem:[%s12 + $0x8] sm:$0xf]
  %v2810 = vld [vmem:[%s12 + $0xc] sm:$0xf]
  %v2811 = vld [vmem:[%s12 + $0x10] sm:$0xf]
  %v2812 = vld [vmem:[%s12 + $0x14] sm:$0xf]
  %v2813 = vld [vmem:[%s12 + $0x18] sm:$0xf]
  %v2814 = vld [vmem:[%s12 + $0x1c] sm:$0xf]
  %v2815 = vld [vmem:[%s12 + $0x20] sm:$0xf]
  %v2816 = vld [vmem:[%s12 + $0x24] sm:$0xf]
  %v2817 = vld [vmem:[%s12 + $0x28] sm:$0xf]
  %v2818 = vld [vmem:[%s12 + $0x2c] sm:$0xf]
  %v2819 = vld [vmem:[%s12 + $0x30] sm:$0xf]
  %v2820 = vld [vmem:[%s12 + $0x34] sm:$0xf]
  %v2821 = vld [vmem:[%s12 + $0x38] sm:$0xf]
  %v2822 = vld [vmem:[%s12 + $0x3c] sm:$0xf]
  %v2839 = vunpack.c.l.b16 %v2807
  %v2840 = vunpack.c.l.b16 %v2808
  %v2841 = vunpack.c.l.b16 %v2809
  %v2842 = vunpack.c.l.b16 %v2810
  %v2843 = vunpack.c.l.b16 %v2811
  %v2844 = vunpack.c.l.b16 %v2812
  %v2845 = vunpack.c.l.b16 %v2813
  %v2846 = vunpack.c.l.b16 %v2814
  %v2847 = vunpack.c.l.b16 %v2815
  %v2848 = vunpack.c.l.b16 %v2816
  %v2849 = vunpack.c.l.b16 %v2817
  %v2850 = vunpack.c.l.b16 %v2818
  %v2851 = vunpack.c.l.b16 %v2819
  %v2852 = vunpack.c.l.b16 %v2820
  %v2853 = vunpack.c.l.b16 %v2821
  %v2854 = vunpack.c.l.b16 %v2822
  %v2855 = vpack.c.b16 %v2840, %v2839
  %v2856 = vpack.c.b16 %v2842, %v2841
  %v2857 = vpack.c.b16 %v2844, %v2843
  %v2858 = vpack.c.b16 %v2846, %v2845
  %v2859 = vpack.c.b16 %v2848, %v2847
  %v2860 = vpack.c.b16 %v2850, %v2849
  %v2861 = vpack.c.b16 %v2852, %v2851
  %v2862 = vpack.c.b16 %v2854, %v2853
  %2871 = vmatprep.subr.bf16.mxu0 0
  %2872 = vmatpush1.bf16.msra.mxu0 %v2862
  %2873 = vmatprep.subr.bf16.mxu0 0
  %2874 = vmatpush1.bf16.msra.mxu0 %v2861
  %2875 = vmatprep.subr.bf16.mxu0 0
  %2876 = vmatpush1.bf16.msra.mxu0 %v2860
  %2877 = vmatprep.subr.bf16.mxu0 0
  %2878 = vmatpush1.bf16.msra.mxu0 %v2859
  %2879 = vmatprep.subr.bf16.mxu0 0
  %2880 = vmatpush1.bf16.msra.mxu0 %v2858
  %2881 = vmatprep.subr.bf16.mxu0 0
  %2882 = vmatpush1.bf16.msra.mxu0 %v2857
  %2883 = vmatprep.subr.bf16.mxu0 0
  %2884 = vmatpush1.bf16.msra.mxu0 %v2856
  %2885 = vmatprep.subr.bf16.mxu0 0
  %2886 = vmatpush1.bf16.msra.mxu0 %v2855
  %2887 = vmatprep.subr.bf16.mxu0 0
  %2888 = vmatpush2.bf16.msra.mxu0 0
  %2889 = vmatprep.subr.bf16.mxu0 0
  %2890 = vmatpush2.bf16.msra.mxu0 0
  %2891 = vmatprep.subr.bf16.mxu0 0
  %2892 = vmatpush2.bf16.msra.mxu0 0
  %2893 = vmatprep.subr.bf16.mxu0 0
  %2894 = vmatpush2.bf16.msra.mxu0 0
  %2895 = vmatprep.subr.bf16.mxu0 0
  %2896 = vmatpush2.bf16.msra.mxu0 0
  %2897 = vmatprep.subr.bf16.mxu0 0
  %2898 = vmatpush2.bf16.msra.mxu0 0
  %2899 = vmatprep.subr.bf16.mxu0 0
  %2900 = vmatpush2.bf16.msra.mxu0 0
  %2901 = vmatprep.subr.bf16.mxu0 0
  %2902 = vmatpush2.bf16.msra.mxu0 0
  %2903 = vmatprep.mubr.bf16.mxu0 0
  %2904 = vmatmul.mubr.bf16.gmra.mxu0 %v2806
  %v2905 = vpop.f32.mrf.mxu0
  %v2906 = vadd.f32 0.0, %v2905
  %v2907 = vpop.f32.mrf.mxu0
  %v2908 = vpop.f32.mrf.mxu0
  %v2909 = vpop.f32.mrf.mxu0
  %2910 = vdwg.mxu0
  %s2911 = scalar_lea.vmem [#allocation4], 48
  %v2912 = vld [vmem:[%s2911] sm:$0xff]
  %s2913 = sld [smem:[#allocation7 + $0x6]]
  %p2914 = scmp.gt.s32.totalorder %s2913, 0
  %s2915 = scalar_select %p2914, 1, 0
  %v2916 = vstv %s2915
  %vm2917 = vcmp.eq.s32.totalorder %v2916, 1
  %v2918 = vsel %vm2917, %v2912, %v2906
  %s2919 = scalar_lea.vmem [#allocation5], 56
  %v2920 = vld [vmem:[%s2919] sm:$0xff]
  %v2921 = vadd.f32 %v2918, %v2920
  %v2922 = vld [vmem:[%s9] sm:$0xf]
  %v2923 = vld [vmem:[%s9 + $0x4] sm:$0xf]
  %v2924 = vld [vmem:[%s9 + $0x8] sm:$0xf]
  %v2925 = vld [vmem:[%s9 + $0xc] sm:$0xf]
  %v2930 = vunpack.c.l.b16 %v2922
  %v2931 = vunpack.c.l.b16 %v2923
  %v2932 = vunpack.c.l.b16 %v2924
  %v2933 = vunpack.c.l.b16 %v2925
  %v2934 = vpack.c.b16 %v2931, %v2930
  %v2935 = vpack.c.b16 %v2933, %v2932
  %2938 = vmatprep.subr.bf16.mxu0 0
  %2939 = vmatpush1.bf16.msra.mxu0 0
  %2940 = vmatprep.subr.bf16.mxu0 0
  %2941 = vmatpush1.bf16.msra.mxu0 0
  %2942 = vmatprep.subr.bf16.mxu0 0
  %2943 = vmatpush1.bf16.msra.mxu0 0
  %2944 = vmatprep.subr.bf16.mxu0 0
  %2945 = vmatpush1.bf16.msra.mxu0 0
  %2946 = vmatprep.subr.bf16.mxu0 0
  %2947 = vmatpush1.bf16.msra.mxu0 0
  %2948 = vmatprep.subr.bf16.mxu0 0
  %2949 = vmatpush1.bf16.msra.mxu0 0
  %2950 = vmatprep.subr.bf16.mxu0 0
  %2951 = vmatpush1.bf16.msra.mxu0 %v2935
  %2952 = vmatprep.subr.bf16.mxu0 0
  %2953 = vmatpush1.bf16.msra.mxu0 %v2934
  %2954 = vmatprep.subr.bf16.mxu0 0
  %2955 = vmatpush2.bf16.msra.mxu0 0
  %2956 = vmatprep.subr.bf16.mxu0 0
  %2957 = vmatpush2.bf16.msra.mxu0 0
  %2958 = vmatprep.subr.bf16.mxu0 0
  %2959 = vmatpush2.bf16.msra.mxu0 0
  %2960 = vmatprep.subr.bf16.mxu0 0
  %2961 = vmatpush2.bf16.msra.mxu0 0
  %2962 = vmatprep.subr.bf16.mxu0 0
  %2963 = vmatpush2.bf16.msra.mxu0 0
  %2964 = vmatprep.subr.bf16.mxu0 0
  %2965 = vmatpush2.bf16.msra.mxu0 0
  %2966 = vmatprep.subr.bf16.mxu0 0
  %2967 = vmatpush2.bf16.msra.mxu0 0
  %2968 = vmatprep.subr.bf16.mxu0 0
  %2969 = vmatpush2.bf16.msra.mxu0 0
  %2970 = vmatprep.mubr.bf16.mxu0 0
  %2971 = vmatmul.mubr.bf16.gmra.mxu0 %v2741
  %v2972 = vpop.f32.mrf.mxu0
  %v2973 = vadd.f32 0.0, %v2972
  %v2974 = vpop.f32.mrf.mxu0
  %v2975 = vpop.f32.mrf.mxu0
  %v2976 = vpop.f32.mrf.mxu0
  %2977 = vdwg.mxu0
  %v2978 = vadd.f32 %v2921, %v2973
  %v2979 = vxor.u32 %v2978, 2147483648
  %v2980 = vmul.f32 %v2979, 1.442695
  %v2981 = vpow.pop %v2980
  %v2982 = vadd.f32 %v2981, 1.0
  %v2983 = vrcp.pop %v2982
  %v2984 = vmul.f32 1.0, %v2983
  %v2985 = vadd.f32 %v2973, %v1273
  %2987 = vrot.lane.b32.xlu0 %v2985, 64
  %v2988 = vpop.permute.xlu0 %2987
  %v2990 = vmul.f32 %v2984, %v2988
  %2992 = vrot.lane.b32.xlu0 %v2990, 64
  %v2993 = vpop.permute.xlu0 %2992
  %v2995 = vadd.f32 %v2921, %v2993
  %v2996 = vtanh.pop %v2995
  %v2997 = vsub.f32 1.0, %v2984
  %2999 = vrot.lane.b32.xlu0 %v2996, 96
  %v3000 = vpop.permute.xlu0 %2999
  %v3002 = vmul.f32 %v2997, %v3000
  %v3003 = vmul.f32 %v2984, %v2719
  %v3004 = vadd.f32 %v3002, %v3003
  %v3005 = vpack.c.bf16 %v3004, %v3004
  %v3006 = vld [vmem:[%s13] sm:$0xf]
  %v3007 = vld [vmem:[%s13 + $0x4] sm:$0xf]
  %v3008 = vld [vmem:[%s13 + $0x8] sm:$0xf]
  %v3009 = vld [vmem:[%s13 + $0xc] sm:$0xf]
  %3011 = vrot.lane.b32.xlu0 %v3005, 96
  %v3012 = vpop.permute.xlu0 %3011
  %v3017 = vunpack.c.l.b16 %v3006
  %v3018 = vunpack.c.l.b16 %v3007
  %v3019 = vunpack.c.l.b16 %v3008
  %v3020 = vunpack.c.l.b16 %v3009
  %v3021 = vpack.c.b16 %v3018, %v3017
  %v3022 = vpack.c.b16 %v3020, %v3019
  %v3026 = vsel %vm297, %v3012, 0
  %3028 = vmatprep.subr.bf16.mxu0 0
  %3029 = vmatpush1.bf16.msra.mxu0 0
  %3030 = vmatprep.subr.bf16.mxu0 0
  %3031 = vmatpush1.bf16.msra.mxu0 0
  %3032 = vmatprep.subr.bf16.mxu0 0
  %3033 = vmatpush1.bf16.msra.mxu0 0
  %3034 = vmatprep.subr.bf16.mxu0 0
  %3035 = vmatpush1.bf16.msra.mxu0 0
  %3036 = vmatprep.subr.bf16.mxu0 0
  %3037 = vmatpush1.bf16.msra.mxu0 0
  %3038 = vmatprep.subr.bf16.mxu0 0
  %3039 = vmatpush1.bf16.msra.mxu0 0
  %3040 = vmatprep.subr.bf16.mxu0 0
  %3041 = vmatpush1.bf16.msra.mxu0 %v3022
  %3042 = vmatprep.subr.bf16.mxu0 0
  %3043 = vmatpush1.bf16.msra.mxu0 %v3021
  %3044 = vmatprep.subr.bf16.mxu0 0
  %3045 = vmatpush2.bf16.msra.mxu0 0
  %3046 = vmatprep.subr.bf16.mxu0 0
  %3047 = vmatpush2.bf16.msra.mxu0 0
  %3048 = vmatprep.subr.bf16.mxu0 0
  %3049 = vmatpush2.bf16.msra.mxu0 0
  %3050 = vmatprep.subr.bf16.mxu0 0
  %3051 = vmatpush2.bf16.msra.mxu0 0
  %3052 = vmatprep.subr.bf16.mxu0 0
  %3053 = vmatpush2.bf16.msra.mxu0 0
  %3054 = vmatprep.subr.bf16.mxu0 0
  %3055 = vmatpush2.bf16.msra.mxu0 0
  %3056 = vmatprep.subr.bf16.mxu0 0
  %3057 = vmatpush2.bf16.msra.mxu0 0
  %3058 = vmatprep.subr.bf16.mxu0 0
  %3059 = vmatpush2.bf16.msra.mxu0 0
  %3060 = vmatprep.mubr.bf16.mxu0 0
  %3061 = vmatmul.mubr.bf16.gmra.mxu0 %v3026
  %v3062 = vpop.f32.mrf.mxu0
  %v3063 = vadd.f32 %v1193, %v3062
  %v3064 = vpop.f32.mrf.mxu0
  %v3065 = vpop.f32.mrf.mxu0
  %v3066 = vpop.f32.mrf.mxu0
  %3067 = vdwg.mxu0
  %s3068 = scalar_lea.vmem %s15, 56
  %3069 = vst [vmem:[%s3068] sm:$0xff] %v3063
  // Predicated region
  $region58: #{seq2seq_forward.1} parent=0 // pred_check
    _
  $region59: #{seq2seq_forward.1} parent=0 // pred_check_branch
    %3071 = sbr.rel (0) target = $region61
  $region60: #{seq2seq_forward.1} parent=0 // pred_region
    _
  $region61: #{seq2seq_forward.1} parent=0 // pred_fallthru
    _
  // Predicated region
  $region62: #{seq2seq_forward.1} parent=0 // pred_check
    _
  $region63: #{seq2seq_forward.1} parent=0 // pred_check_branch
    %3073 = sbr.rel (0) target = $region65
  $region64: #{seq2seq_forward.1} parent=0 // pred_region
    _
  $region65: #{seq2seq_forward.1} parent=0 // pred_fallthru
    _

</llo_original>
